<compile_context>
chip_gen: v5e
topology: v5e:2x2
jax: 0.10.0
libtpu: 0.0.40
codegen_flags: <defaults>
</compile_context>

<pallas_src>
import functools

import jax
import jax.numpy as jnp
from jax import lax
from jax.experimental import pallas as pl
from jax.experimental.pallas import tpu as pltpu

_VMEM = pl.BlockSpec(memory_space=pltpu.MemorySpace.VMEM)


# ----------------------------------------------------------------------------
# In-kernel helpers.
# ----------------------------------------------------------------------------
def _cell_update(gates, c, hw):
    """PyTorch LSTM cell combine.

    gates: (B, 4*hw) laid out [i | f | 2*g | o]. The g-gate weight/bias columns
    were pre-scaled by 2 so tanh(g) = 2*sigmoid(2g) - 1, leaving a single
    full-width sigmoid (plus the narrow tanh(c_new)) on the EUP per step.
    """
    sg = jax.nn.sigmoid(gates)
    i_g = sg[:, 0 * hw:1 * hw]
    f_g = sg[:, 1 * hw:2 * hw]
    g_g = 2.0 * sg[:, 2 * hw:3 * hw] - 1.0
    o_g = sg[:, 3 * hw:4 * hw]
    c_new = f_g * c + i_g * g_g
    h_new = o_g * jnp.tanh(c_new)
    return h_new, c_new


def _layer_norm(v, gamma, beta, eps=1e-5):
    mu = jnp.mean(v, axis=-1, keepdims=True)
    d = v - mu
    var = jnp.mean(d * d, axis=-1, keepdims=True)
    return d * lax.rsqrt(var + eps) * gamma + beta


# ----------------------------------------------------------------------------
# Fused kernel: BiLSTM -> LN1 -> (LSTM1 | +res LN2 | LSTM2 interleaved)
#               -> gather(last_idx) -> BN+ReLU
# ----------------------------------------------------------------------------
def _fused_kernel(x_ref, idx_ref,
                  wih_bi_ref, whh_bi_ref, b_bi_ref,
                  g1_ref, be1_ref,
                  wih1_ref, whh1_ref, b1_ref,
                  g2_ref, be2_ref,
                  wih2_ref, whh2_ref, b2_ref,
                  bn_s_ref, bn_b_ref,
                  out_ref,
                  hs_ref, hsr_ref):
    T, B, _ = x_ref.shape               # x is (T, B, 2E): [x[t] | x[T-1-t]]
    H8 = wih_bi_ref.shape[1]            # 8 * lstm_hidden_size (= 4 * 2H)
    H = H8 // 8
    H2 = 2 * H

    # ------------------ Layer 1: bidirectional LSTM (fwd + rev fused) -------
    # One hoisted bf16 matmul gives, for each loop step i, gate inputs already
    # combining the fwd direction's x[i] and the bwd direction's x[T-1-i]
    # (W_ih block-sparsity does the combining) — nothing time-dependent left
    # on the VPU inside the recurrence except the cell update itself.
    x = x_ref[...].reshape(T * B, x_ref.shape[2]).astype(jnp.bfloat16)
    gx_bi = (jnp.dot(x, wih_bi_ref[...], preferred_element_type=jnp.float32)
             + b_bi_ref[...]).reshape(T, B, H8)

    whh_bi = whh_bi_ref[...]                        # bf16 (2H, 8H) block-diag
    h = jnp.zeros((B, H2), jnp.float32)             # [h_fwd | h_bwd]
    c = jnp.zeros((B, H2), jnp.float32)
    for i in range(T):                              # fully unrolled (static T)
        gates = gx_bi[i] + jnp.dot(h.astype(jnp.bfloat16), whh_bi,
                                   preferred_element_type=jnp.float32)
        h, c = _cell_update(gates, c, H2)
        # Two cheap full-width stores per step (vst slot, off the critical
        # chain) replace per-step 32-lane slices + fragment stack/concat.
        hs_ref[i, :, :] = h                         # time order i
        hsr_ref[T - 1 - i, :, :] = h                # time order T-1-i (bwd half)

    # y1[t] = [h_fwd(t) | h_bwd(t)]: fwd half from hs[t], bwd half from hsr[t].
    half = lax.broadcasted_iota(jnp.int32, (1, B, H2), 2) < H
    y1 = jnp.where(half, hs_ref[...], hsr_ref[...])             # (T, B, 2H)

    # Dropout = identity (inference); LayerNorm over the 2H feature dim.
    ln1 = _layer_norm(y1, g1_ref[...], be1_ref[...])

    # --------- Layers 2 & 3: LSTM1 and LSTM2 recurrences interleaved --------
    # LSTM1's input (ln1) is fully known, so its gate projection is hoisted.
    # LSTM2's input at step t depends on LSTM1 step t, so its projection is
    # issued per step; offset by one step the two h-chains are independent and
    # the scheduler overlaps their MXU/EUP latencies.
    gx1 = (jnp.dot(ln1.reshape(T * B, H2).astype(jnp.bfloat16), wih1_ref[...],
                   preferred_element_type=jnp.float32)
           + b1_ref[...]).reshape(T, B, H8)
    whh1 = whh1_ref[...]
    wih2 = wih2_ref[...]
    whh2 = whh2_ref[...]
    b2 = b2_ref[...]
    g2 = g2_ref[...]
    be2 = be2_ref[...]
    idx = idx_ref[...]                              # (B, 1) int32

    h1 = jnp.zeros((B, H2), jnp.float32)
    c1 = jnp.zeros((B, H2), jnp.float32)
    h2 = jnp.zeros((B, H2), jnp.float32)
    c2 = jnp.zeros((B, H2), jnp.float32)
    gathered = jnp.zeros((B, H2), jnp.float32)
    for t in range(T):
        # LSTM1 step t.
        gates1 = gx1[t] + jnp.dot(h1.astype(jnp.bfloat16), whh1,
                                  preferred_element_type=jnp.float32)
        h1, c1 = _cell_update(gates1, c1, H2)
        # Residual + LayerNorm2 at time t (Dropout = identity).
        ln2_t = _layer_norm(h1 + ln1[t], g2, be2)
        # LSTM2 step t; its input projection is off LSTM2's h-chain.
        gates2 = (jnp.dot(ln2_t.astype(jnp.bfloat16), wih2,
                          preferred_element_type=jnp.float32) + b2
                  + jnp.dot(h2.astype(jnp.bfloat16), whh2,
                            preferred_element_type=jnp.float32))
        h2, c2 = _cell_update(gates2, c2, H2)
        # Fused gather at inp_last_idx[b]; note an out-of-range index yields
        # zeros here whereas PyTorch indexing would raise.
        gathered = jnp.where(idx == t, h2, gathered)

    # Eval-mode BatchNorm1d folded to scale/shift, then ReLU; the final
    # mlp_dropout is identity in inference.
    out_ref[...] = jnp.maximum(gathered * bn_s_ref[...] + bn_b_ref[...], 0.0)


# ----------------------------------------------------------------------------
# Weight preparation (host-side, traced under jit).
# ----------------------------------------------------------------------------
def _prep_bilstm_weights(pf, pb, H):
    """Interleave fwd/bwd weights for the fused bidirectional loop.

    Gate-column layout: [i_f i_b | f_f f_b | 2*g_f 2*g_b | o_f o_b], each block
    H wide. W_ih is (2E, 8H) and block-sparse: fwd gate columns read only the
    first E rows of the kernel input [x[t] | x[T-1-t]], bwd gate columns only
    the last E rows. W_hh is (2H, 8H) block-diagonal over the stacked
    [h_fwd | h_bwd] state so both directions share one hidden matmul per step.
    g-gate columns/biases are scaled by 2 (see _cell_update). MXU operands are
    bf16; biases stay f32.
    """
    E = pf['w_ih'].shape[1]

    def rows(w):     # (4H, D) -> 4 x (H, D) in PyTorch gate order i, f, g, o
        return [w[k * H:(k + 1) * H] for k in range(4)]

    gif, ghf = rows(pf['w_ih']), rows(pf['w_hh'])
    gib, ghb = rows(pb['w_ih']), rows(pb['w_hh'])
    bf = pf['b_ih'] + pf['b_hh']
    bb = pb['b_ih'] + pb['b_hh']
    gsc = (1.0, 1.0, 2.0, 1.0)                      # scale g gate by 2

    zero_e = jnp.zeros((E, H), jnp.float32)
    zero_h = jnp.zeros((H, H), jnp.float32)
    wih_cols, whh_cols, bias_blks = [], [], []
    for k in range(4):
        wih_cols.append(jnp.concatenate([gif[k].T, zero_e], axis=0) * gsc[k])
        wih_cols.append(jnp.concatenate([zero_e, gib[k].T], axis=0) * gsc[k])
        whh_cols.append(jnp.concatenate([ghf[k].T, zero_h], axis=0) * gsc[k])
        whh_cols.append(jnp.concatenate([zero_h, ghb[k].T], axis=0) * gsc[k])
        bias_blks.append(jnp.concatenate([bf[k * H:(k + 1) * H],
                                          bb[k * H:(k + 1) * H]]) * gsc[k])
    wih = jnp.concatenate(wih_cols, axis=1)          # (2E, 8H)
    whh = jnp.concatenate(whh_cols, axis=1)          # (2H, 8H)
    bias = jnp.concatenate(bias_blks).reshape(1, 8 * H)
    return (wih.astype(jnp.bfloat16), whh.astype(jnp.bfloat16),
            bias.astype(jnp.float32))


def _prep_uni_weights(p):
    hout = p['w_hh'].shape[1]
    gscale = jnp.concatenate([jnp.ones((2 * hout,), jnp.float32),
                              jnp.full((hout,), 2.0, jnp.float32),
                              jnp.ones((hout,), jnp.float32)])
    wih = (p['w_ih'] * gscale[:, None]).T.astype(jnp.bfloat16)   # (Din, 4*Hout)
    whh = (p['w_hh'] * gscale[:, None]).T.astype(jnp.bfloat16)   # (Hout, 4*Hout)
    bias = ((p['b_ih'] + p['b_hh']) * gscale).reshape(1, -1).astype(jnp.float32)
    return wih, whh, bias


def lstm_extraction_layer(params, inp_embed, inp_last_idx, *, hidden):
    """inp_embed: (B, T, E) batch-first; inp_last_idx: (B,) int. Returns (B, 2H)."""
    B, T, E = inp_embed.shape
    H = hidden
    H2 = 2 * H
    eps = 1e-5

    x_tbe = jnp.transpose(inp_embed, (1, 0, 2)).astype(jnp.float32)  # time-major
    # Pair each timestep with its time-reversed partner so the BiLSTM's fwd and
    # bwd gate inputs come out of one hoisted in-kernel matmul, already
    # time-aligned for the fused fwd+bwd recurrence loop.
    x_cat = jnp.concatenate([x_tbe, x_tbe[::-1]], axis=-1)           # (T, B, 2E)
    idx = inp_last_idx.astype(jnp.int32).reshape(B, 1)

    wih_bi, whh_bi, b_bi = _prep_bilstm_weights(params['bi_f'], params['bi_b'], H)
    wih1, whh1, b1 = _prep_uni_weights(params['lstm1'])
    wih2, whh2, b2 = _prep_uni_weights(params['lstm2'])

    g1 = params['ln1_g'].reshape(1, H2).astype(jnp.float32)
    be1 = params['ln1_b'].reshape(1, H2).astype(jnp.float32)
    g2 = params['ln2_g'].reshape(1, H2).astype(jnp.float32)
    be2 = params['ln2_b'].reshape(1, H2).astype(jnp.float32)
    # Fold eval-mode BatchNorm1d into scale/shift.
    bn_s = params['bn_g'] * lax.rsqrt(params['bn_rv'] + eps)
    bn_b = params['bn_b'] - params['bn_rm'] * bn_s
    bn_s = bn_s.reshape(1, H2).astype(jnp.float32)
    bn_b = bn_b.reshape(1, H2).astype(jnp.float32)

    return pl.pallas_call(
        _fused_kernel,
        out_shape=jax.ShapeDtypeStruct((B, H2), jnp.float32),
        in_specs=[_VMEM] * 17,
        out_specs=_VMEM,
        scratch_shapes=[pltpu.VMEM((T, B, H2), jnp.float32),   # hs (fwd order)
                        pltpu.VMEM((T, B, H2), jnp.float32)],  # hs (rev order)
    )(x_cat, idx, wih_bi, whh_bi, b_bi, g1, be1,
      wih1, whh1, b1, g2, be2, wih2, whh2, b2, bn_s, bn_b)


# ----------------------------------------------------------------------------
# Deterministic parameter init (shapes from the PyTorch module's __init__).
# ----------------------------------------------------------------------------
def init_params(key, E, H):
    H2 = 2 * H
    keys = iter(jax.random.split(key, 16))

    def rnd(shape, scale=0.1):
        return jax.random.normal(next(keys), shape, dtype=jnp.float32) * scale

    def lstm_p(din, hout):
        return {'w_ih': rnd((4 * hout, din)), 'w_hh': rnd((4 * hout, hout)),
                'b_ih': rnd((4 * hout,)), 'b_hh': rnd((4 * hout,))}

    return {
        'bi_f': lstm_p(E, H),            # bi_lstm forward direction
        'bi_b': lstm_p(E, H),            # bi_lstm reverse direction
        'lstm1': lstm_p(H2, H2),
        'lstm2': lstm_p(H2, H2),
        'ln1_g': jnp.ones((H2,), jnp.float32), 'ln1_b': jnp.zeros((H2,), jnp.float32),
        'ln2_g': jnp.ones((H2,), jnp.float32), 'ln2_b': jnp.zeros((H2,), jnp.float32),
        'bn_g': jnp.ones((H2,), jnp.float32), 'bn_b': jnp.zeros((H2,), jnp.float32),
        'bn_rm': jnp.zeros((H2,), jnp.float32), 'bn_rv': jnp.ones((H2,), jnp.float32),
    }


if __name__ == "__main__":
    B, T, E, H = 2, 8, 16, 32            # batch, seq, embed_size, lstm_hidden_size
    key = jax.random.PRNGKey(0)
    pkey, xkey = jax.random.split(key)
    params = init_params(pkey, E, H)
    inp_embed = jax.random.normal(xkey, (B, T, E), dtype=jnp.float32)
    inp_last_idx = jnp.array([T - 1, T - 3], dtype=jnp.int32)

    fwd = jax.jit(functools.partial(lstm_extraction_layer, hidden=H))
    out = jax.block_until_ready(fwd(params, inp_embed, inp_last_idx))
    assert out.shape == (B, 2 * H)
    assert bool(jnp.all(jnp.isfinite(out)))
    print("KERNEL_OK")
</pallas_src>

<mosaic_0001>
module attributes {stable_mosaic.version = 11 : i64} {
  func.func @_fused_kernel(%arg0: memref<8x2x32xf32, #tpu.memory_space<vmem>>, %arg1: memref<2x1xi32, #tpu.memory_space<vmem>>, %arg2: memref<32x256xbf16, #tpu.memory_space<vmem>>, %arg3: memref<64x256xbf16, #tpu.memory_space<vmem>>, %arg4: memref<1x256xf32, #tpu.memory_space<vmem>>, %arg5: memref<1x64xf32, #tpu.memory_space<vmem>>, %arg6: memref<1x64xf32, #tpu.memory_space<vmem>>, %arg7: memref<64x256xbf16, #tpu.memory_space<vmem>>, %arg8: memref<64x256xbf16, #tpu.memory_space<vmem>>, %arg9: memref<1x256xf32, #tpu.memory_space<vmem>>, %arg10: memref<1x64xf32, #tpu.memory_space<vmem>>, %arg11: memref<1x64xf32, #tpu.memory_space<vmem>>, %arg12: memref<64x256xbf16, #tpu.memory_space<vmem>>, %arg13: memref<64x256xbf16, #tpu.memory_space<vmem>>, %arg14: memref<1x256xf32, #tpu.memory_space<vmem>>, %arg15: memref<1x64xf32, #tpu.memory_space<vmem>>, %arg16: memref<1x64xf32, #tpu.memory_space<vmem>>, %arg17: memref<2x64xf32, #tpu.memory_space<vmem>>, %arg18: memref<8x2x64xf32, #tpu.memory_space<vmem>>, %arg19: memref<8x2x64xf32, #tpu.memory_space<vmem>>) attributes {dimension_semantics = [], scalar_prefetch = 0 : i64, scratch_operands = 2 : i64, tpu.core_type = #tpu.core_type<tc>} {
    %c0 = arith.constant 0 : index
    %c0_0 = arith.constant 0 : index
    %c0_1 = arith.constant 0 : index
    %0 = vector.load %arg0[%c0, %c0_0, %c0_1] : memref<8x2x32xf32, #tpu.memory_space<vmem>>, vector<8x2x32xf32>
    %1 = vector.shape_cast %0 : vector<8x2x32xf32> to vector<16x32xf32>
    %2 = arith.truncf %1 : vector<16x32xf32> to vector<16x32xbf16>
    %c0_2 = arith.constant 0 : index
    %c0_3 = arith.constant 0 : index
    %3 = vector.load %arg2[%c0_2, %c0_3] : memref<32x256xbf16, #tpu.memory_space<vmem>>, vector<32x256xbf16>
    %cst = arith.constant dense<0.000000e+00> : vector<16x256xf32>
    %4 = tpu.matmul %2, %3, %cst {dimension_numbers = #tpu.dot_dimension_numbers<[1], [0], [0], [1], [0, 0, 1, 1], [], []>} : vector<16x32xbf16>, vector<32x256xbf16>, vector<16x256xf32> -> vector<16x256xf32>
    %c0_4 = arith.constant 0 : index
    %c0_5 = arith.constant 0 : index
    %5 = vector.load %arg4[%c0_4, %c0_5] : memref<1x256xf32, #tpu.memory_space<vmem>>, vector<1x256xf32>
    %6 = vector.broadcast %5 : vector<1x256xf32> to vector<16x256xf32>
    %7 = arith.addf %4, %6 : vector<16x256xf32>
    %8 = vector.shape_cast %7 : vector<16x256xf32> to vector<8x2x256xf32>
    %c0_6 = arith.constant 0 : index
    %c0_7 = arith.constant 0 : index
    %9 = vector.load %arg3[%c0_6, %c0_7] : memref<64x256xbf16, #tpu.memory_space<vmem>>, vector<64x256xbf16>
    %cst_8 = arith.constant 0.000000e+00 : f32
    %10 = vector.broadcast %cst_8 : f32 to vector<2x64xf32>
    %cst_9 = arith.constant 0.000000e+00 : f32
    %11 = vector.broadcast %cst_9 : f32 to vector<2x64xf32>
    %12 = vector.extract_strided_slice %8 {offsets = [0, 0, 0], sizes = [1, 2, 256], strides = [1, 1, 1]} : vector<8x2x256xf32> to vector<1x2x256xf32>
    %13 = vector.shape_cast %12 : vector<1x2x256xf32> to vector<2x256xf32>
    %14 = arith.truncf %10 : vector<2x64xf32> to vector<2x64xbf16>
    %cst_10 = arith.constant dense<0.000000e+00> : vector<2x256xf32>
    %15 = tpu.matmul %14, %9, %cst_10 {dimension_numbers = #tpu.dot_dimension_numbers<[1], [0], [0], [1], [0, 0, 1, 1], [], []>} : vector<2x64xbf16>, vector<64x256xbf16>, vector<2x256xf32> -> vector<2x256xf32>
    %16 = arith.addf %13, %15 : vector<2x256xf32>
    %17 = arith.negf %16 : vector<2x256xf32>
    %18 = math.exp %17 : vector<2x256xf32>
    %cst_11 = arith.constant 1.000000e+00 : f32
    %19 = vector.broadcast %cst_11 : f32 to vector<2x256xf32>
    %20 = arith.addf %19, %18 : vector<2x256xf32>
    %21 = arith.divf %19, %20 : vector<2x256xf32>
    %22 = vector.extract_strided_slice %21 {offsets = [0, 0], sizes = [2, 64], strides = [1, 1]} : vector<2x256xf32> to vector<2x64xf32>
    %23 = vector.extract_strided_slice %21 {offsets = [0, 64], sizes = [2, 64], strides = [1, 1]} : vector<2x256xf32> to vector<2x64xf32>
    %24 = vector.extract_strided_slice %21 {offsets = [0, 128], sizes = [2, 64], strides = [1, 1]} : vector<2x256xf32> to vector<2x64xf32>
    %cst_12 = arith.constant 2.000000e+00 : f32
    %25 = vector.broadcast %cst_12 : f32 to vector<2x64xf32>
    %26 = arith.mulf %25, %24 : vector<2x64xf32>
    %cst_13 = arith.constant 1.000000e+00 : f32
    %27 = vector.broadcast %cst_13 : f32 to vector<2x64xf32>
    %28 = arith.subf %26, %27 : vector<2x64xf32>
    %29 = vector.extract_strided_slice %21 {offsets = [0, 192], sizes = [2, 64], strides = [1, 1]} : vector<2x256xf32> to vector<2x64xf32>
    %30 = arith.mulf %23, %11 : vector<2x64xf32>
    %31 = arith.mulf %22, %28 : vector<2x64xf32>
    %32 = arith.addf %30, %31 : vector<2x64xf32>
    %33 = math.tanh %32 : vector<2x64xf32>
    %34 = arith.mulf %29, %33 : vector<2x64xf32>
    %c0_14 = arith.constant 0 : index
    %c0_15 = arith.constant 0 : index
    %c0_16 = arith.constant 0 : index
    %35 = vector.load %arg18[%c0_14, %c0_15, %c0_16] : memref<8x2x64xf32, #tpu.memory_space<vmem>>, vector<1x2x64xf32>
    %36 = vector.shape_cast %35 : vector<1x2x64xf32> to vector<2x64xf32>
    %37 = vector.shape_cast %34 : vector<2x64xf32> to vector<1x2x64xf32>
    tpu.vector_store %arg18[%c0_14, %c0_15, %c0_16], %37 {strides = array<i32>} : memref<8x2x64xf32, #tpu.memory_space<vmem>>, vector<1x2x64xf32>,
    %c7 = arith.constant 7 : index
    %c0_17 = arith.constant 0 : index
    %c0_18 = arith.constant 0 : index
    %38 = vector.load %arg19[%c7, %c0_17, %c0_18] : memref<8x2x64xf32, #tpu.memory_space<vmem>>, vector<1x2x64xf32>
    %39 = vector.shape_cast %38 : vector<1x2x64xf32> to vector<2x64xf32>
    %40 = vector.shape_cast %34 : vector<2x64xf32> to vector<1x2x64xf32>
    tpu.vector_store %arg19[%c7, %c0_17, %c0_18], %40 {strides = array<i32>} : memref<8x2x64xf32, #tpu.memory_space<vmem>>, vector<1x2x64xf32>,
    %41 = vector.extract_strided_slice %8 {offsets = [1, 0, 0], sizes = [1, 2, 256], strides = [1, 1, 1]} : vector<8x2x256xf32> to vector<1x2x256xf32>
    %42 = vector.shape_cast %41 : vector<1x2x256xf32> to vector<2x256xf32>
    %43 = arith.truncf %34 : vector<2x64xf32> to vector<2x64xbf16>
    %cst_19 = arith.constant dense<0.000000e+00> : vector<2x256xf32>
    %44 = tpu.matmul %43, %9, %cst_19 {dimension_numbers = #tpu.dot_dimension_numbers<[1], [0], [0], [1], [0, 0, 1, 1], [], []>} : vector<2x64xbf16>, vector<64x256xbf16>, vector<2x256xf32> -> vector<2x256xf32>
    %45 = arith.addf %42, %44 : vector<2x256xf32>
    %46 = arith.negf %45 : vector<2x256xf32>
    %47 = math.exp %46 : vector<2x256xf32>
    %cst_20 = arith.constant 1.000000e+00 : f32
    %48 = vector.broadcast %cst_20 : f32 to vector<2x256xf32>
    %49 = arith.addf %48, %47 : vector<2x256xf32>
    %50 = arith.divf %48, %49 : vector<2x256xf32>
    %51 = vector.extract_strided_slice %50 {offsets = [0, 0], sizes = [2, 64], strides = [1, 1]} : vector<2x256xf32> to vector<2x64xf32>
    %52 = vector.extract_strided_slice %50 {offsets = [0, 64], sizes = [2, 64], strides = [1, 1]} : vector<2x256xf32> to vector<2x64xf32>
    %53 = vector.extract_strided_slice %50 {offsets = [0, 128], sizes = [2, 64], strides = [1, 1]} : vector<2x256xf32> to vector<2x64xf32>
    %cst_21 = arith.constant 2.000000e+00 : f32
    %54 = vector.broadcast %cst_21 : f32 to vector<2x64xf32>
    %55 = arith.mulf %54, %53 : vector<2x64xf32>
    %cst_22 = arith.constant 1.000000e+00 : f32
    %56 = vector.broadcast %cst_22 : f32 to vector<2x64xf32>
    %57 = arith.subf %55, %56 : vector<2x64xf32>
    %58 = vector.extract_strided_slice %50 {offsets = [0, 192], sizes = [2, 64], strides = [1, 1]} : vector<2x256xf32> to vector<2x64xf32>
    %59 = arith.mulf %52, %32 : vector<2x64xf32>
    %60 = arith.mulf %51, %57 : vector<2x64xf32>
    %61 = arith.addf %59, %60 : vector<2x64xf32>
    %62 = math.tanh %61 : vector<2x64xf32>
    %63 = arith.mulf %58, %62 : vector<2x64xf32>
    %c1 = arith.constant 1 : index
    %c0_23 = arith.constant 0 : index
    %c0_24 = arith.constant 0 : index
    %64 = vector.load %arg18[%c1, %c0_23, %c0_24] : memref<8x2x64xf32, #tpu.memory_space<vmem>>, vector<1x2x64xf32>
    %65 = vector.shape_cast %64 : vector<1x2x64xf32> to vector<2x64xf32>
    %66 = vector.shape_cast %63 : vector<2x64xf32> to vector<1x2x64xf32>
    tpu.vector_store %arg18[%c1, %c0_23, %c0_24], %66 {strides = array<i32>} : memref<8x2x64xf32, #tpu.memory_space<vmem>>, vector<1x2x64xf32>,
    %c6 = arith.constant 6 : index
    %c0_25 = arith.constant 0 : index
    %c0_26 = arith.constant 0 : index
    %67 = vector.load %arg19[%c6, %c0_25, %c0_26] : memref<8x2x64xf32, #tpu.memory_space<vmem>>, vector<1x2x64xf32>
    %68 = vector.shape_cast %67 : vector<1x2x64xf32> to vector<2x64xf32>
    %69 = vector.shape_cast %63 : vector<2x64xf32> to vector<1x2x64xf32>
    tpu.vector_store %arg19[%c6, %c0_25, %c0_26], %69 {strides = array<i32>} : memref<8x2x64xf32, #tpu.memory_space<vmem>>, vector<1x2x64xf32>,
    %70 = vector.extract_strided_slice %8 {offsets = [2, 0, 0], sizes = [1, 2, 256], strides = [1, 1, 1]} : vector<8x2x256xf32> to vector<1x2x256xf32>
    %71 = vector.shape_cast %70 : vector<1x2x256xf32> to vector<2x256xf32>
    %72 = arith.truncf %63 : vector<2x64xf32> to vector<2x64xbf16>
    %cst_27 = arith.constant dense<0.000000e+00> : vector<2x256xf32>
    %73 = tpu.matmul %72, %9, %cst_27 {dimension_numbers = #tpu.dot_dimension_numbers<[1], [0], [0], [1], [0, 0, 1, 1], [], []>} : vector<2x64xbf16>, vector<64x256xbf16>, vector<2x256xf32> -> vector<2x256xf32>
    %74 = arith.addf %71, %73 : vector<2x256xf32>
    %75 = arith.negf %74 : vector<2x256xf32>
    %76 = math.exp %75 : vector<2x256xf32>
    %cst_28 = arith.constant 1.000000e+00 : f32
    %77 = vector.broadcast %cst_28 : f32 to vector<2x256xf32>
    %78 = arith.addf %77, %76 : vector<2x256xf32>
    %79 = arith.divf %77, %78 : vector<2x256xf32>
    %80 = vector.extract_strided_slice %79 {offsets = [0, 0], sizes = [2, 64], strides = [1, 1]} : vector<2x256xf32> to vector<2x64xf32>
    %81 = vector.extract_strided_slice %79 {offsets = [0, 64], sizes = [2, 64], strides = [1, 1]} : vector<2x256xf32> to vector<2x64xf32>
    %82 = vector.extract_strided_slice %79 {offsets = [0, 128], sizes = [2, 64], strides = [1, 1]} : vector<2x256xf32> to vector<2x64xf32>
    %cst_29 = arith.constant 2.000000e+00 : f32
    %83 = vector.broadcast %cst_29 : f32 to vector<2x64xf32>
    %84 = arith.mulf %83, %82 : vector<2x64xf32>
    %cst_30 = arith.constant 1.000000e+00 : f32
    %85 = vector.broadcast %cst_30 : f32 to vector<2x64xf32>
    %86 = arith.subf %84, %85 : vector<2x64xf32>
    %87 = vector.extract_strided_slice %79 {offsets = [0, 192], sizes = [2, 64], strides = [1, 1]} : vector<2x256xf32> to vector<2x64xf32>
    %88 = arith.mulf %81, %61 : vector<2x64xf32>
    %89 = arith.mulf %80, %86 : vector<2x64xf32>
    %90 = arith.addf %88, %89 : vector<2x64xf32>
    %91 = math.tanh %90 : vector<2x64xf32>
    %92 = arith.mulf %87, %91 : vector<2x64xf32>
    %c2 = arith.constant 2 : index
    %c0_31 = arith.constant 0 : index
    %c0_32 = arith.constant 0 : index
    %93 = vector.load %arg18[%c2, %c0_31, %c0_32] : memref<8x2x64xf32, #tpu.memory_space<vmem>>, vector<1x2x64xf32>
    %94 = vector.shape_cast %93 : vector<1x2x64xf32> to vector<2x64xf32>
    %95 = vector.shape_cast %92 : vector<2x64xf32> to vector<1x2x64xf32>
    tpu.vector_store %arg18[%c2, %c0_31, %c0_32], %95 {strides = array<i32>} : memref<8x2x64xf32, #tpu.memory_space<vmem>>, vector<1x2x64xf32>,
    %c5 = arith.constant 5 : index
    %c0_33 = arith.constant 0 : index
    %c0_34 = arith.constant 0 : index
    %96 = vector.load %arg19[%c5, %c0_33, %c0_34] : memref<8x2x64xf32, #tpu.memory_space<vmem>>, vector<1x2x64xf32>
    %97 = vector.shape_cast %96 : vector<1x2x64xf32> to vector<2x64xf32>
    %98 = vector.shape_cast %92 : vector<2x64xf32> to vector<1x2x64xf32>
    tpu.vector_store %arg19[%c5, %c0_33, %c0_34], %98 {strides = array<i32>} : memref<8x2x64xf32, #tpu.memory_space<vmem>>, vector<1x2x64xf32>,
    %99 = vector.extract_strided_slice %8 {offsets = [3, 0, 0], sizes = [1, 2, 256], strides = [1, 1, 1]} : vector<8x2x256xf32> to vector<1x2x256xf32>
    %100 = vector.shape_cast %99 : vector<1x2x256xf32> to vector<2x256xf32>
    %101 = arith.truncf %92 : vector<2x64xf32> to vector<2x64xbf16>
    %cst_35 = arith.constant dense<0.000000e+00> : vector<2x256xf32>
    %102 = tpu.matmul %101, %9, %cst_35 {dimension_numbers = #tpu.dot_dimension_numbers<[1], [0], [0], [1], [0, 0, 1, 1], [], []>} : vector<2x64xbf16>, vector<64x256xbf16>, vector<2x256xf32> -> vector<2x256xf32>
    %103 = arith.addf %100, %102 : vector<2x256xf32>
    %104 = arith.negf %103 : vector<2x256xf32>
    %105 = math.exp %104 : vector<2x256xf32>
    %cst_36 = arith.constant 1.000000e+00 : f32
    %106 = vector.broadcast %cst_36 : f32 to vector<2x256xf32>
    %107 = arith.addf %106, %105 : vector<2x256xf32>
    %108 = arith.divf %106, %107 : vector<2x256xf32>
    %109 = vector.extract_strided_slice %108 {offsets = [0, 0], sizes = [2, 64], strides = [1, 1]} : vector<2x256xf32> to vector<2x64xf32>
    %110 = vector.extract_strided_slice %108 {offsets = [0, 64], sizes = [2, 64], strides = [1, 1]} : vector<2x256xf32> to vector<2x64xf32>
    %111 = vector.extract_strided_slice %108 {offsets = [0, 128], sizes = [2, 64], strides = [1, 1]} : vector<2x256xf32> to vector<2x64xf32>
    %cst_37 = arith.constant 2.000000e+00 : f32
    %112 = vector.broadcast %cst_37 : f32 to vector<2x64xf32>
    %113 = arith.mulf %112, %111 : vector<2x64xf32>
    %cst_38 = arith.constant 1.000000e+00 : f32
    %114 = vector.broadcast %cst_38 : f32 to vector<2x64xf32>
    %115 = arith.subf %113, %114 : vector<2x64xf32>
    %116 = vector.extract_strided_slice %108 {offsets = [0, 192], sizes = [2, 64], strides = [1, 1]} : vector<2x256xf32> to vector<2x64xf32>
    %117 = arith.mulf %110, %90 : vector<2x64xf32>
    %118 = arith.mulf %109, %115 : vector<2x64xf32>
    %119 = arith.addf %117, %118 : vector<2x64xf32>
    %120 = math.tanh %119 : vector<2x64xf32>
    %121 = arith.mulf %116, %120 : vector<2x64xf32>
    %c3 = arith.constant 3 : index
    %c0_39 = arith.constant 0 : index
    %c0_40 = arith.constant 0 : index
    %122 = vector.load %arg18[%c3, %c0_39, %c0_40] : memref<8x2x64xf32, #tpu.memory_space<vmem>>, vector<1x2x64xf32>
    %123 = vector.shape_cast %122 : vector<1x2x64xf32> to vector<2x64xf32>
    %124 = vector.shape_cast %121 : vector<2x64xf32> to vector<1x2x64xf32>
    tpu.vector_store %arg18[%c3, %c0_39, %c0_40], %124 {strides = array<i32>} : memref<8x2x64xf32, #tpu.memory_space<vmem>>, vector<1x2x64xf32>,
    %c4 = arith.constant 4 : index
    %c0_41 = arith.constant 0 : index
    %c0_42 = arith.constant 0 : index
    %125 = vector.load %arg19[%c4, %c0_41, %c0_42] : memref<8x2x64xf32, #tpu.memory_space<vmem>>, vector<1x2x64xf32>
    %126 = vector.shape_cast %125 : vector<1x2x64xf32> to vector<2x64xf32>
    %127 = vector.shape_cast %121 : vector<2x64xf32> to vector<1x2x64xf32>
    tpu.vector_store %arg19[%c4, %c0_41, %c0_42], %127 {strides = array<i32>} : memref<8x2x64xf32, #tpu.memory_space<vmem>>, vector<1x2x64xf32>,
    %128 = vector.extract_strided_slice %8 {offsets = [4, 0, 0], sizes = [1, 2, 256], strides = [1, 1, 1]} : vector<8x2x256xf32> to vector<1x2x256xf32>
    %129 = vector.shape_cast %128 : vector<1x2x256xf32> to vector<2x256xf32>
    %130 = arith.truncf %121 : vector<2x64xf32> to vector<2x64xbf16>
    %cst_43 = arith.constant dense<0.000000e+00> : vector<2x256xf32>
    %131 = tpu.matmul %130, %9, %cst_43 {dimension_numbers = #tpu.dot_dimension_numbers<[1], [0], [0], [1], [0, 0, 1, 1], [], []>} : vector<2x64xbf16>, vector<64x256xbf16>, vector<2x256xf32> -> vector<2x256xf32>
    %132 = arith.addf %129, %131 : vector<2x256xf32>
    %133 = arith.negf %132 : vector<2x256xf32>
    %134 = math.exp %133 : vector<2x256xf32>
    %cst_44 = arith.constant 1.000000e+00 : f32
    %135 = vector.broadcast %cst_44 : f32 to vector<2x256xf32>
    %136 = arith.addf %135, %134 : vector<2x256xf32>
    %137 = arith.divf %135, %136 : vector<2x256xf32>
    %138 = vector.extract_strided_slice %137 {offsets = [0, 0], sizes = [2, 64], strides = [1, 1]} : vector<2x256xf32> to vector<2x64xf32>
    %139 = vector.extract_strided_slice %137 {offsets = [0, 64], sizes = [2, 64], strides = [1, 1]} : vector<2x256xf32> to vector<2x64xf32>
    %140 = vector.extract_strided_slice %137 {offsets = [0, 128], sizes = [2, 64], strides = [1, 1]} : vector<2x256xf32> to vector<2x64xf32>
    %cst_45 = arith.constant 2.000000e+00 : f32
    %141 = vector.broadcast %cst_45 : f32 to vector<2x64xf32>
    %142 = arith.mulf %141, %140 : vector<2x64xf32>
    %cst_46 = arith.constant 1.000000e+00 : f32
    %143 = vector.broadcast %cst_46 : f32 to vector<2x64xf32>
    %144 = arith.subf %142, %143 : vector<2x64xf32>
    %145 = vector.extract_strided_slice %137 {offsets = [0, 192], sizes = [2, 64], strides = [1, 1]} : vector<2x256xf32> to vector<2x64xf32>
    %146 = arith.mulf %139, %119 : vector<2x64xf32>
    %147 = arith.mulf %138, %144 : vector<2x64xf32>
    %148 = arith.addf %146, %147 : vector<2x64xf32>
    %149 = math.tanh %148 : vector<2x64xf32>
    %150 = arith.mulf %145, %149 : vector<2x64xf32>
    %c4_47 = arith.constant 4 : index
    %c0_48 = arith.constant 0 : index
    %c0_49 = arith.constant 0 : index
    %151 = vector.load %arg18[%c4_47, %c0_48, %c0_49] : memref<8x2x64xf32, #tpu.memory_space<vmem>>, vector<1x2x64xf32>
    %152 = vector.shape_cast %151 : vector<1x2x64xf32> to vector<2x64xf32>
    %153 = vector.shape_cast %150 : vector<2x64xf32> to vector<1x2x64xf32>
    tpu.vector_store %arg18[%c4_47, %c0_48, %c0_49], %153 {strides = array<i32>} : memref<8x2x64xf32, #tpu.memory_space<vmem>>, vector<1x2x64xf32>,
    %c3_50 = arith.constant 3 : index
    %c0_51 = arith.constant 0 : index
    %c0_52 = arith.constant 0 : index
    %154 = vector.load %arg19[%c3_50, %c0_51, %c0_52] : memref<8x2x64xf32, #tpu.memory_space<vmem>>, vector<1x2x64xf32>
    %155 = vector.shape_cast %154 : vector<1x2x64xf32> to vector<2x64xf32>
    %156 = vector.shape_cast %150 : vector<2x64xf32> to vector<1x2x64xf32>
    tpu.vector_store %arg19[%c3_50, %c0_51, %c0_52], %156 {strides = array<i32>} : memref<8x2x64xf32, #tpu.memory_space<vmem>>, vector<1x2x64xf32>,
    %157 = vector.extract_strided_slice %8 {offsets = [5, 0, 0], sizes = [1, 2, 256], strides = [1, 1, 1]} : vector<8x2x256xf32> to vector<1x2x256xf32>
    %158 = vector.shape_cast %157 : vector<1x2x256xf32> to vector<2x256xf32>
    %159 = arith.truncf %150 : vector<2x64xf32> to vector<2x64xbf16>
    %cst_53 = arith.constant dense<0.000000e+00> : vector<2x256xf32>
    %160 = tpu.matmul %159, %9, %cst_53 {dimension_numbers = #tpu.dot_dimension_numbers<[1], [0], [0], [1], [0, 0, 1, 1], [], []>} : vector<2x64xbf16>, vector<64x256xbf16>, vector<2x256xf32> -> vector<2x256xf32>
    %161 = arith.addf %158, %160 : vector<2x256xf32>
    %162 = arith.negf %161 : vector<2x256xf32>
    %163 = math.exp %162 : vector<2x256xf32>
    %cst_54 = arith.constant 1.000000e+00 : f32
    %164 = vector.broadcast %cst_54 : f32 to vector<2x256xf32>
    %165 = arith.addf %164, %163 : vector<2x256xf32>
    %166 = arith.divf %164, %165 : vector<2x256xf32>
    %167 = vector.extract_strided_slice %166 {offsets = [0, 0], sizes = [2, 64], strides = [1, 1]} : vector<2x256xf32> to vector<2x64xf32>
    %168 = vector.extract_strided_slice %166 {offsets = [0, 64], sizes = [2, 64], strides = [1, 1]} : vector<2x256xf32> to vector<2x64xf32>
    %169 = vector.extract_strided_slice %166 {offsets = [0, 128], sizes = [2, 64], strides = [1, 1]} : vector<2x256xf32> to vector<2x64xf32>
    %cst_55 = arith.constant 2.000000e+00 : f32
    %170 = vector.broadcast %cst_55 : f32 to vector<2x64xf32>
    %171 = arith.mulf %170, %169 : vector<2x64xf32>
    %cst_56 = arith.constant 1.000000e+00 : f32
    %172 = vector.broadcast %cst_56 : f32 to vector<2x64xf32>
    %173 = arith.subf %171, %172 : vector<2x64xf32>
    %174 = vector.extract_strided_slice %166 {offsets = [0, 192], sizes = [2, 64], strides = [1, 1]} : vector<2x256xf32> to vector<2x64xf32>
    %175 = arith.mulf %168, %148 : vector<2x64xf32>
    %176 = arith.mulf %167, %173 : vector<2x64xf32>
    %177 = arith.addf %175, %176 : vector<2x64xf32>
    %178 = math.tanh %177 : vector<2x64xf32>
    %179 = arith.mulf %174, %178 : vector<2x64xf32>
    %c5_57 = arith.constant 5 : index
    %c0_58 = arith.constant 0 : index
    %c0_59 = arith.constant 0 : index
    %180 = vector.load %arg18[%c5_57, %c0_58, %c0_59] : memref<8x2x64xf32, #tpu.memory_space<vmem>>, vector<1x2x64xf32>
    %181 = vector.shape_cast %180 : vector<1x2x64xf32> to vector<2x64xf32>
    %182 = vector.shape_cast %179 : vector<2x64xf32> to vector<1x2x64xf32>
    tpu.vector_store %arg18[%c5_57, %c0_58, %c0_59], %182 {strides = array<i32>} : memref<8x2x64xf32, #tpu.memory_space<vmem>>, vector<1x2x64xf32>,
    %c2_60 = arith.constant 2 : index
    %c0_61 = arith.constant 0 : index
    %c0_62 = arith.constant 0 : index
    %183 = vector.load %arg19[%c2_60, %c0_61, %c0_62] : memref<8x2x64xf32, #tpu.memory_space<vmem>>, vector<1x2x64xf32>
    %184 = vector.shape_cast %183 : vector<1x2x64xf32> to vector<2x64xf32>
    %185 = vector.shape_cast %179 : vector<2x64xf32> to vector<1x2x64xf32>
    tpu.vector_store %arg19[%c2_60, %c0_61, %c0_62], %185 {strides = array<i32>} : memref<8x2x64xf32, #tpu.memory_space<vmem>>, vector<1x2x64xf32>,
    %186 = vector.extract_strided_slice %8 {offsets = [6, 0, 0], sizes = [1, 2, 256], strides = [1, 1, 1]} : vector<8x2x256xf32> to vector<1x2x256xf32>
    %187 = vector.shape_cast %186 : vector<1x2x256xf32> to vector<2x256xf32>
    %188 = arith.truncf %179 : vector<2x64xf32> to vector<2x64xbf16>
    %cst_63 = arith.constant dense<0.000000e+00> : vector<2x256xf32>
    %189 = tpu.matmul %188, %9, %cst_63 {dimension_numbers = #tpu.dot_dimension_numbers<[1], [0], [0], [1], [0, 0, 1, 1], [], []>} : vector<2x64xbf16>, vector<64x256xbf16>, vector<2x256xf32> -> vector<2x256xf32>
    %190 = arith.addf %187, %189 : vector<2x256xf32>
    %191 = arith.negf %190 : vector<2x256xf32>
    %192 = math.exp %191 : vector<2x256xf32>
    %cst_64 = arith.constant 1.000000e+00 : f32
    %193 = vector.broadcast %cst_64 : f32 to vector<2x256xf32>
    %194 = arith.addf %193, %192 : vector<2x256xf32>
    %195 = arith.divf %193, %194 : vector<2x256xf32>
    %196 = vector.extract_strided_slice %195 {offsets = [0, 0], sizes = [2, 64], strides = [1, 1]} : vector<2x256xf32> to vector<2x64xf32>
    %197 = vector.extract_strided_slice %195 {offsets = [0, 64], sizes = [2, 64], strides = [1, 1]} : vector<2x256xf32> to vector<2x64xf32>
    %198 = vector.extract_strided_slice %195 {offsets = [0, 128], sizes = [2, 64], strides = [1, 1]} : vector<2x256xf32> to vector<2x64xf32>
    %cst_65 = arith.constant 2.000000e+00 : f32
    %199 = vector.broadcast %cst_65 : f32 to vector<2x64xf32>
    %200 = arith.mulf %199, %198 : vector<2x64xf32>
    %cst_66 = arith.constant 1.000000e+00 : f32
    %201 = vector.broadcast %cst_66 : f32 to vector<2x64xf32>
    %202 = arith.subf %200, %201 : vector<2x64xf32>
    %203 = vector.extract_strided_slice %195 {offsets = [0, 192], sizes = [2, 64], strides = [1, 1]} : vector<2x256xf32> to vector<2x64xf32>
    %204 = arith.mulf %197, %177 : vector<2x64xf32>
    %205 = arith.mulf %196, %202 : vector<2x64xf32>
    %206 = arith.addf %204, %205 : vector<2x64xf32>
    %207 = math.tanh %206 : vector<2x64xf32>
    %208 = arith.mulf %203, %207 : vector<2x64xf32>
    %c6_67 = arith.constant 6 : index
    %c0_68 = arith.constant 0 : index
    %c0_69 = arith.constant 0 : index
    %209 = vector.load %arg18[%c6_67, %c0_68, %c0_69] : memref<8x2x64xf32, #tpu.memory_space<vmem>>, vector<1x2x64xf32>
    %210 = vector.shape_cast %209 : vector<1x2x64xf32> to vector<2x64xf32>
    %211 = vector.shape_cast %208 : vector<2x64xf32> to vector<1x2x64xf32>
    tpu.vector_store %arg18[%c6_67, %c0_68, %c0_69], %211 {strides = array<i32>} : memref<8x2x64xf32, #tpu.memory_space<vmem>>, vector<1x2x64xf32>,
    %c1_70 = arith.constant 1 : index
    %c0_71 = arith.constant 0 : index
    %c0_72 = arith.constant 0 : index
    %212 = vector.load %arg19[%c1_70, %c0_71, %c0_72] : memref<8x2x64xf32, #tpu.memory_space<vmem>>, vector<1x2x64xf32>
    %213 = vector.shape_cast %212 : vector<1x2x64xf32> to vector<2x64xf32>
    %214 = vector.shape_cast %208 : vector<2x64xf32> to vector<1x2x64xf32>
    tpu.vector_store %arg19[%c1_70, %c0_71, %c0_72], %214 {strides = array<i32>} : memref<8x2x64xf32, #tpu.memory_space<vmem>>, vector<1x2x64xf32>,
    %215 = vector.extract_strided_slice %8 {offsets = [7, 0, 0], sizes = [1, 2, 256], strides = [1, 1, 1]} : vector<8x2x256xf32> to vector<1x2x256xf32>
    %216 = vector.shape_cast %215 : vector<1x2x256xf32> to vector<2x256xf32>
    %217 = arith.truncf %208 : vector<2x64xf32> to vector<2x64xbf16>
    %cst_73 = arith.constant dense<0.000000e+00> : vector<2x256xf32>
    %218 = tpu.matmul %217, %9, %cst_73 {dimension_numbers = #tpu.dot_dimension_numbers<[1], [0], [0], [1], [0, 0, 1, 1], [], []>} : vector<2x64xbf16>, vector<64x256xbf16>, vector<2x256xf32> -> vector<2x256xf32>
    %219 = arith.addf %216, %218 : vector<2x256xf32>
    %220 = arith.negf %219 : vector<2x256xf32>
    %221 = math.exp %220 : vector<2x256xf32>
    %cst_74 = arith.constant 1.000000e+00 : f32
    %222 = vector.broadcast %cst_74 : f32 to vector<2x256xf32>
    %223 = arith.addf %222, %221 : vector<2x256xf32>
    %224 = arith.divf %222, %223 : vector<2x256xf32>
    %225 = vector.extract_strided_slice %224 {offsets = [0, 0], sizes = [2, 64], strides = [1, 1]} : vector<2x256xf32> to vector<2x64xf32>
    %226 = vector.extract_strided_slice %224 {offsets = [0, 64], sizes = [2, 64], strides = [1, 1]} : vector<2x256xf32> to vector<2x64xf32>
    %227 = vector.extract_strided_slice %224 {offsets = [0, 128], sizes = [2, 64], strides = [1, 1]} : vector<2x256xf32> to vector<2x64xf32>
    %cst_75 = arith.constant 2.000000e+00 : f32
    %228 = vector.broadcast %cst_75 : f32 to vector<2x64xf32>
    %229 = arith.mulf %228, %227 : vector<2x64xf32>
    %cst_76 = arith.constant 1.000000e+00 : f32
    %230 = vector.broadcast %cst_76 : f32 to vector<2x64xf32>
    %231 = arith.subf %229, %230 : vector<2x64xf32>
    %232 = vector.extract_strided_slice %224 {offsets = [0, 192], sizes = [2, 64], strides = [1, 1]} : vector<2x256xf32> to vector<2x64xf32>
    %233 = arith.mulf %226, %206 : vector<2x64xf32>
    %234 = arith.mulf %225, %231 : vector<2x64xf32>
    %235 = arith.addf %233, %234 : vector<2x64xf32>
    %236 = math.tanh %235 : vector<2x64xf32>
    %237 = arith.mulf %232, %236 : vector<2x64xf32>
    %c7_77 = arith.constant 7 : index
    %c0_78 = arith.constant 0 : index
    %c0_79 = arith.constant 0 : index
    %238 = vector.load %arg18[%c7_77, %c0_78, %c0_79] : memref<8x2x64xf32, #tpu.memory_space<vmem>>, vector<1x2x64xf32>
    %239 = vector.shape_cast %238 : vector<1x2x64xf32> to vector<2x64xf32>
    %240 = vector.shape_cast %237 : vector<2x64xf32> to vector<1x2x64xf32>
    tpu.vector_store %arg18[%c7_77, %c0_78, %c0_79], %240 {strides = array<i32>} : memref<8x2x64xf32, #tpu.memory_space<vmem>>, vector<1x2x64xf32>,
    %c0_80 = arith.constant 0 : index
    %c0_81 = arith.constant 0 : index
    %c0_82 = arith.constant 0 : index
    %241 = vector.load %arg19[%c0_80, %c0_81, %c0_82] : memref<8x2x64xf32, #tpu.memory_space<vmem>>, vector<1x2x64xf32>
    %242 = vector.shape_cast %241 : vector<1x2x64xf32> to vector<2x64xf32>
    %243 = vector.shape_cast %237 : vector<2x64xf32> to vector<1x2x64xf32>
    tpu.vector_store %arg19[%c0_80, %c0_81, %c0_82], %243 {strides = array<i32>} : memref<8x2x64xf32, #tpu.memory_space<vmem>>, vector<1x2x64xf32>,
    %244 = tpu.iota {dimensions = array<i32: 2>} : vector<1x2x64xi32>
    %c32_i32 = arith.constant 32 : i32
    %245 = vector.broadcast %c32_i32 : i32 to vector<1x2x64xi32>
    %246 = arith.cmpi slt, %244, %245 : vector<1x2x64xi32>
    %c0_83 = arith.constant 0 : index
    %c0_84 = arith.constant 0 : index
    %c0_85 = arith.constant 0 : index
    %247 = vector.load %arg18[%c0_83, %c0_84, %c0_85] : memref<8x2x64xf32, #tpu.memory_space<vmem>>, vector<8x2x64xf32>
    %c0_86 = arith.constant 0 : index
    %c0_87 = arith.constant 0 : index
    %c0_88 = arith.constant 0 : index
    %248 = vector.load %arg19[%c0_86, %c0_87, %c0_88] : memref<8x2x64xf32, #tpu.memory_space<vmem>>, vector<8x2x64xf32>
    %249 = vector.shape_cast %246 : vector<1x2x64xi1> to vector<1x2x64xi1>
    %250 = vector.broadcast %249 : vector<1x2x64xi1> to vector<8x2x64xi1>
    %251 = arith.select %250, %247, %248 : vector<8x2x64xi1>, vector<8x2x64xf32>
    %c0_89 = arith.constant 0 : index
    %c0_90 = arith.constant 0 : index
    %252 = vector.load %arg5[%c0_89, %c0_90] : memref<1x64xf32, #tpu.memory_space<vmem>>, vector<1x64xf32>
    %c0_91 = arith.constant 0 : index
    %c0_92 = arith.constant 0 : index
    %253 = vector.load %arg6[%c0_91, %c0_92] : memref<1x64xf32, #tpu.memory_space<vmem>>, vector<1x64xf32>
    %cst_93 = arith.constant dense<0.000000e+00> : vector<8x2xf32>
    %254 = vector.multi_reduction <add>, %251, %cst_93 [2] : vector<8x2x64xf32> to vector<8x2xf32>
    %255 = vector.shape_cast %254 : vector<8x2xf32> to vector<8x2x1xf32>
    %cst_94 = arith.constant 6.400000e+01 : f32
    %256 = vector.broadcast %cst_94 : f32 to vector<8x2x1xf32>
    %257 = arith.divf %255, %256 : vector<8x2x1xf32>
    %258 = vector.broadcast %257 : vector<8x2x1xf32> to vector<8x2x64xf32>
    %259 = arith.subf %251, %258 : vector<8x2x64xf32>
    %260 = arith.mulf %259, %259 : vector<8x2x64xf32>
    %cst_95 = arith.constant dense<0.000000e+00> : vector<8x2xf32>
    %261 = vector.multi_reduction <add>, %260, %cst_95 [2] : vector<8x2x64xf32> to vector<8x2xf32>
    %262 = vector.shape_cast %261 : vector<8x2xf32> to vector<8x2x1xf32>
    %cst_96 = arith.constant 6.400000e+01 : f32
    %263 = vector.broadcast %cst_96 : f32 to vector<8x2x1xf32>
    %264 = arith.divf %262, %263 : vector<8x2x1xf32>
    %cst_97 = arith.constant 9.99999974E-6 : f32
    %265 = vector.broadcast %cst_97 : f32 to vector<8x2x1xf32>
    %266 = arith.addf %264, %265 : vector<8x2x1xf32>
    %267 = math.rsqrt %266 : vector<8x2x1xf32>
    %268 = vector.broadcast %267 : vector<8x2x1xf32> to vector<8x2x64xf32>
    %269 = arith.mulf %259, %268 : vector<8x2x64xf32>
    %270 = vector.shape_cast %252 : vector<1x64xf32> to vector<1x1x64xf32>
    %271 = vector.broadcast %270 : vector<1x1x64xf32> to vector<8x2x64xf32>
    %272 = arith.mulf %269, %271 : vector<8x2x64xf32>
    %273 = vector.shape_cast %253 : vector<1x64xf32> to vector<1x1x64xf32>
    %274 = vector.broadcast %273 : vector<1x1x64xf32> to vector<8x2x64xf32>
    %275 = arith.addf %272, %274 : vector<8x2x64xf32>
    %276 = vector.shape_cast %275 : vector<8x2x64xf32> to vector<16x64xf32>
    %277 = arith.truncf %276 : vector<16x64xf32> to vector<16x64xbf16>
    %c0_98 = arith.constant 0 : index
    %c0_99 = arith.constant 0 : index
    %278 = vector.load %arg7[%c0_98, %c0_99] : memref<64x256xbf16, #tpu.memory_space<vmem>>, vector<64x256xbf16>
    %cst_100 = arith.constant dense<0.000000e+00> : vector<16x256xf32>
    %279 = tpu.matmul %277, %278, %cst_100 {dimension_numbers = #tpu.dot_dimension_numbers<[1], [0], [0], [1], [0, 0, 1, 1], [], []>} : vector<16x64xbf16>, vector<64x256xbf16>, vector<16x256xf32> -> vector<16x256xf32>
    %c0_101 = arith.constant 0 : index
    %c0_102 = arith.constant 0 : index
    %280 = vector.load %arg9[%c0_101, %c0_102] : memref<1x256xf32, #tpu.memory_space<vmem>>, vector<1x256xf32>
    %281 = vector.broadcast %280 : vector<1x256xf32> to vector<16x256xf32>
    %282 = arith.addf %279, %281 : vector<16x256xf32>
    %283 = vector.shape_cast %282 : vector<16x256xf32> to vector<8x2x256xf32>
    %c0_103 = arith.constant 0 : index
    %c0_104 = arith.constant 0 : index
    %284 = vector.load %arg8[%c0_103, %c0_104] : memref<64x256xbf16, #tpu.memory_space<vmem>>, vector<64x256xbf16>
    %c0_105 = arith.constant 0 : index
    %c0_106 = arith.constant 0 : index
    %285 = vector.load %arg12[%c0_105, %c0_106] : memref<64x256xbf16, #tpu.memory_space<vmem>>, vector<64x256xbf16>
    %c0_107 = arith.constant 0 : index
    %c0_108 = arith.constant 0 : index
    %286 = vector.load %arg13[%c0_107, %c0_108] : memref<64x256xbf16, #tpu.memory_space<vmem>>, vector<64x256xbf16>
    %c0_109 = arith.constant 0 : index
    %c0_110 = arith.constant 0 : index
    %287 = vector.load %arg14[%c0_109, %c0_110] : memref<1x256xf32, #tpu.memory_space<vmem>>, vector<1x256xf32>
    %c0_111 = arith.constant 0 : index
    %c0_112 = arith.constant 0 : index
    %288 = vector.load %arg10[%c0_111, %c0_112] : memref<1x64xf32, #tpu.memory_space<vmem>>, vector<1x64xf32>
    %c0_113 = arith.constant 0 : index
    %c0_114 = arith.constant 0 : index
    %289 = vector.load %arg11[%c0_113, %c0_114] : memref<1x64xf32, #tpu.memory_space<vmem>>, vector<1x64xf32>
    %c0_115 = arith.constant 0 : index
    %c0_116 = arith.constant 0 : index
    %290 = vector.load %arg1[%c0_115, %c0_116] : memref<2x1xi32, #tpu.memory_space<vmem>>, vector<2x1xi32>
    %cst_117 = arith.constant 0.000000e+00 : f32
    %291 = vector.broadcast %cst_117 : f32 to vector<2x64xf32>
    %cst_118 = arith.constant 0.000000e+00 : f32
    %292 = vector.broadcast %cst_118 : f32 to vector<2x64xf32>
    %cst_119 = arith.constant 0.000000e+00 : f32
    %293 = vector.broadcast %cst_119 : f32 to vector<2x64xf32>
    %cst_120 = arith.constant 0.000000e+00 : f32
    %294 = vector.broadcast %cst_120 : f32 to vector<2x64xf32>
    %cst_121 = arith.constant 0.000000e+00 : f32
    %295 = vector.broadcast %cst_121 : f32 to vector<2x64xf32>
    %296 = vector.extract_strided_slice %283 {offsets = [0, 0, 0], sizes = [1, 2, 256], strides = [1, 1, 1]} : vector<8x2x256xf32> to vector<1x2x256xf32>
    %297 = vector.shape_cast %296 : vector<1x2x256xf32> to vector<2x256xf32>
    %298 = arith.truncf %291 : vector<2x64xf32> to vector<2x64xbf16>
    %cst_122 = arith.constant dense<0.000000e+00> : vector<2x256xf32>
    %299 = tpu.matmul %298, %284, %cst_122 {dimension_numbers = #tpu.dot_dimension_numbers<[1], [0], [0], [1], [0, 0, 1, 1], [], []>} : vector<2x64xbf16>, vector<64x256xbf16>, vector<2x256xf32> -> vector<2x256xf32>
    %300 = arith.addf %297, %299 : vector<2x256xf32>
    %301 = arith.negf %300 : vector<2x256xf32>
    %302 = math.exp %301 : vector<2x256xf32>
    %cst_123 = arith.constant 1.000000e+00 : f32
    %303 = vector.broadcast %cst_123 : f32 to vector<2x256xf32>
    %304 = arith.addf %303, %302 : vector<2x256xf32>
    %305 = arith.divf %303, %304 : vector<2x256xf32>
    %306 = vector.extract_strided_slice %305 {offsets = [0, 0], sizes = [2, 64], strides = [1, 1]} : vector<2x256xf32> to vector<2x64xf32>
    %307 = vector.extract_strided_slice %305 {offsets = [0, 64], sizes = [2, 64], strides = [1, 1]} : vector<2x256xf32> to vector<2x64xf32>
    %308 = vector.extract_strided_slice %305 {offsets = [0, 128], sizes = [2, 64], strides = [1, 1]} : vector<2x256xf32> to vector<2x64xf32>
    %cst_124 = arith.constant 2.000000e+00 : f32
    %309 = vector.broadcast %cst_124 : f32 to vector<2x64xf32>
    %310 = arith.mulf %309, %308 : vector<2x64xf32>
    %cst_125 = arith.constant 1.000000e+00 : f32
    %311 = vector.broadcast %cst_125 : f32 to vector<2x64xf32>
    %312 = arith.subf %310, %311 : vector<2x64xf32>
    %313 = vector.extract_strided_slice %305 {offsets = [0, 192], sizes = [2, 64], strides = [1, 1]} : vector<2x256xf32> to vector<2x64xf32>
    %314 = arith.mulf %307, %292 : vector<2x64xf32>
    %315 = arith.mulf %306, %312 : vector<2x64xf32>
    %316 = arith.addf %314, %315 : vector<2x64xf32>
    %317 = math.tanh %316 : vector<2x64xf32>
    %318 = arith.mulf %313, %317 : vector<2x64xf32>
    %319 = vector.extract_strided_slice %275 {offsets = [0, 0, 0], sizes = [1, 2, 64], strides = [1, 1, 1]} : vector<8x2x64xf32> to vector<1x2x64xf32>
    %320 = vector.shape_cast %319 : vector<1x2x64xf32> to vector<2x64xf32>
    %321 = arith.addf %318, %320 : vector<2x64xf32>
    %cst_126 = arith.constant dense<0.000000e+00> : vector<2xf32>
    %322 = vector.multi_reduction <add>, %321, %cst_126 [1] : vector<2x64xf32> to vector<2xf32>
    %323 = vector.shape_cast %322 : vector<2xf32> to vector<2x1xf32>
    %cst_127 = arith.constant 6.400000e+01 : f32
    %324 = vector.broadcast %cst_127 : f32 to vector<2x1xf32>
    %325 = arith.divf %323, %324 : vector<2x1xf32>
    %326 = vector.broadcast %325 : vector<2x1xf32> to vector<2x64xf32>
    %327 = arith.subf %321, %326 : vector<2x64xf32>
    %328 = arith.mulf %327, %327 : vector<2x64xf32>
    %cst_128 = arith.constant dense<0.000000e+00> : vector<2xf32>
    %329 = vector.multi_reduction <add>, %328, %cst_128 [1] : vector<2x64xf32> to vector<2xf32>
    %330 = vector.shape_cast %329 : vector<2xf32> to vector<2x1xf32>
    %cst_129 = arith.constant 6.400000e+01 : f32
    %331 = vector.broadcast %cst_129 : f32 to vector<2x1xf32>
    %332 = arith.divf %330, %331 : vector<2x1xf32>
    %cst_130 = arith.constant 9.99999974E-6 : f32
    %333 = vector.broadcast %cst_130 : f32 to vector<2x1xf32>
    %334 = arith.addf %332, %333 : vector<2x1xf32>
    %335 = math.rsqrt %334 : vector<2x1xf32>
    %336 = vector.broadcast %335 : vector<2x1xf32> to vector<2x64xf32>
    %337 = arith.mulf %327, %336 : vector<2x64xf32>
    %338 = vector.broadcast %288 : vector<1x64xf32> to vector<2x64xf32>
    %339 = arith.mulf %337, %338 : vector<2x64xf32>
    %340 = vector.broadcast %289 : vector<1x64xf32> to vector<2x64xf32>
    %341 = arith.addf %339, %340 : vector<2x64xf32>
    %342 = arith.truncf %341 : vector<2x64xf32> to vector<2x64xbf16>
    %cst_131 = arith.constant dense<0.000000e+00> : vector<2x256xf32>
    %343 = tpu.matmul %342, %285, %cst_131 {dimension_numbers = #tpu.dot_dimension_numbers<[1], [0], [0], [1], [0, 0, 1, 1], [], []>} : vector<2x64xbf16>, vector<64x256xbf16>, vector<2x256xf32> -> vector<2x256xf32>
    %344 = vector.broadcast %287 : vector<1x256xf32> to vector<2x256xf32>
    %345 = arith.addf %343, %344 : vector<2x256xf32>
    %346 = arith.truncf %293 : vector<2x64xf32> to vector<2x64xbf16>
    %cst_132 = arith.constant dense<0.000000e+00> : vector<2x256xf32>
    %347 = tpu.matmul %346, %286, %cst_132 {dimension_numbers = #tpu.dot_dimension_numbers<[1], [0], [0], [1], [0, 0, 1, 1], [], []>} : vector<2x64xbf16>, vector<64x256xbf16>, vector<2x256xf32> -> vector<2x256xf32>
    %348 = arith.addf %345, %347 : vector<2x256xf32>
    %349 = arith.negf %348 : vector<2x256xf32>
    %350 = math.exp %349 : vector<2x256xf32>
    %cst_133 = arith.constant 1.000000e+00 : f32
    %351 = vector.broadcast %cst_133 : f32 to vector<2x256xf32>
    %352 = arith.addf %351, %350 : vector<2x256xf32>
    %353 = arith.divf %351, %352 : vector<2x256xf32>
    %354 = vector.extract_strided_slice %353 {offsets = [0, 0], sizes = [2, 64], strides = [1, 1]} : vector<2x256xf32> to vector<2x64xf32>
    %355 = vector.extract_strided_slice %353 {offsets = [0, 64], sizes = [2, 64], strides = [1, 1]} : vector<2x256xf32> to vector<2x64xf32>
    %356 = vector.extract_strided_slice %353 {offsets = [0, 128], sizes = [2, 64], strides = [1, 1]} : vector<2x256xf32> to vector<2x64xf32>
    %cst_134 = arith.constant 2.000000e+00 : f32
    %357 = vector.broadcast %cst_134 : f32 to vector<2x64xf32>
    %358 = arith.mulf %357, %356 : vector<2x64xf32>
    %cst_135 = arith.constant 1.000000e+00 : f32
    %359 = vector.broadcast %cst_135 : f32 to vector<2x64xf32>
    %360 = arith.subf %358, %359 : vector<2x64xf32>
    %361 = vector.extract_strided_slice %353 {offsets = [0, 192], sizes = [2, 64], strides = [1, 1]} : vector<2x256xf32> to vector<2x64xf32>
    %362 = arith.mulf %355, %294 : vector<2x64xf32>
    %363 = arith.mulf %354, %360 : vector<2x64xf32>
    %364 = arith.addf %362, %363 : vector<2x64xf32>
    %365 = math.tanh %364 : vector<2x64xf32>
    %366 = arith.mulf %361, %365 : vector<2x64xf32>
    %c0_i32 = arith.constant 0 : i32
    %367 = vector.broadcast %c0_i32 : i32 to vector<2x1xi32>
    %368 = arith.cmpi eq, %290, %367 : vector<2x1xi32>
    %369 = vector.shape_cast %368 : vector<2x1xi1> to vector<2x1xi1>
    %370 = vector.broadcast %369 : vector<2x1xi1> to vector<2x64xi1>
    %371 = arith.select %370, %366, %295 : vector<2x64xi1>, vector<2x64xf32>
    %372 = vector.extract_strided_slice %283 {offsets = [1, 0, 0], sizes = [1, 2, 256], strides = [1, 1, 1]} : vector<8x2x256xf32> to vector<1x2x256xf32>
    %373 = vector.shape_cast %372 : vector<1x2x256xf32> to vector<2x256xf32>
    %374 = arith.truncf %318 : vector<2x64xf32> to vector<2x64xbf16>
    %cst_136 = arith.constant dense<0.000000e+00> : vector<2x256xf32>
    %375 = tpu.matmul %374, %284, %cst_136 {dimension_numbers = #tpu.dot_dimension_numbers<[1], [0], [0], [1], [0, 0, 1, 1], [], []>} : vector<2x64xbf16>, vector<64x256xbf16>, vector<2x256xf32> -> vector<2x256xf32>
    %376 = arith.addf %373, %375 : vector<2x256xf32>
    %377 = arith.negf %376 : vector<2x256xf32>
    %378 = math.exp %377 : vector<2x256xf32>
    %cst_137 = arith.constant 1.000000e+00 : f32
    %379 = vector.broadcast %cst_137 : f32 to vector<2x256xf32>
    %380 = arith.addf %379, %378 : vector<2x256xf32>
    %381 = arith.divf %379, %380 : vector<2x256xf32>
    %382 = vector.extract_strided_slice %381 {offsets = [0, 0], sizes = [2, 64], strides = [1, 1]} : vector<2x256xf32> to vector<2x64xf32>
    %383 = vector.extract_strided_slice %381 {offsets = [0, 64], sizes = [2, 64], strides = [1, 1]} : vector<2x256xf32> to vector<2x64xf32>
    %384 = vector.extract_strided_slice %381 {offsets = [0, 128], sizes = [2, 64], strides = [1, 1]} : vector<2x256xf32> to vector<2x64xf32>
    %cst_138 = arith.constant 2.000000e+00 : f32
    %385 = vector.broadcast %cst_138 : f32 to vector<2x64xf32>
    %386 = arith.mulf %385, %384 : vector<2x64xf32>
    %cst_139 = arith.constant 1.000000e+00 : f32
    %387 = vector.broadcast %cst_139 : f32 to vector<2x64xf32>
    %388 = arith.subf %386, %387 : vector<2x64xf32>
    %389 = vector.extract_strided_slice %381 {offsets = [0, 192], sizes = [2, 64], strides = [1, 1]} : vector<2x256xf32> to vector<2x64xf32>
    %390 = arith.mulf %383, %316 : vector<2x64xf32>
    %391 = arith.mulf %382, %388 : vector<2x64xf32>
    %392 = arith.addf %390, %391 : vector<2x64xf32>
    %393 = math.tanh %392 : vector<2x64xf32>
    %394 = arith.mulf %389, %393 : vector<2x64xf32>
    %395 = vector.extract_strided_slice %275 {offsets = [1, 0, 0], sizes = [1, 2, 64], strides = [1, 1, 1]} : vector<8x2x64xf32> to vector<1x2x64xf32>
    %396 = vector.shape_cast %395 : vector<1x2x64xf32> to vector<2x64xf32>
    %397 = arith.addf %394, %396 : vector<2x64xf32>
    %cst_140 = arith.constant dense<0.000000e+00> : vector<2xf32>
    %398 = vector.multi_reduction <add>, %397, %cst_140 [1] : vector<2x64xf32> to vector<2xf32>
    %399 = vector.shape_cast %398 : vector<2xf32> to vector<2x1xf32>
    %cst_141 = arith.constant 6.400000e+01 : f32
    %400 = vector.broadcast %cst_141 : f32 to vector<2x1xf32>
    %401 = arith.divf %399, %400 : vector<2x1xf32>
    %402 = vector.broadcast %401 : vector<2x1xf32> to vector<2x64xf32>
    %403 = arith.subf %397, %402 : vector<2x64xf32>
    %404 = arith.mulf %403, %403 : vector<2x64xf32>
    %cst_142 = arith.constant dense<0.000000e+00> : vector<2xf32>
    %405 = vector.multi_reduction <add>, %404, %cst_142 [1] : vector<2x64xf32> to vector<2xf32>
    %406 = vector.shape_cast %405 : vector<2xf32> to vector<2x1xf32>
    %cst_143 = arith.constant 6.400000e+01 : f32
    %407 = vector.broadcast %cst_143 : f32 to vector<2x1xf32>
    %408 = arith.divf %406, %407 : vector<2x1xf32>
    %cst_144 = arith.constant 9.99999974E-6 : f32
    %409 = vector.broadcast %cst_144 : f32 to vector<2x1xf32>
    %410 = arith.addf %408, %409 : vector<2x1xf32>
    %411 = math.rsqrt %410 : vector<2x1xf32>
    %412 = vector.broadcast %411 : vector<2x1xf32> to vector<2x64xf32>
    %413 = arith.mulf %403, %412 : vector<2x64xf32>
    %414 = vector.broadcast %288 : vector<1x64xf32> to vector<2x64xf32>
    %415 = arith.mulf %413, %414 : vector<2x64xf32>
    %416 = vector.broadcast %289 : vector<1x64xf32> to vector<2x64xf32>
    %417 = arith.addf %415, %416 : vector<2x64xf32>
    %418 = arith.truncf %417 : vector<2x64xf32> to vector<2x64xbf16>
    %cst_145 = arith.constant dense<0.000000e+00> : vector<2x256xf32>
    %419 = tpu.matmul %418, %285, %cst_145 {dimension_numbers = #tpu.dot_dimension_numbers<[1], [0], [0], [1], [0, 0, 1, 1], [], []>} : vector<2x64xbf16>, vector<64x256xbf16>, vector<2x256xf32> -> vector<2x256xf32>
    %420 = vector.broadcast %287 : vector<1x256xf32> to vector<2x256xf32>
    %421 = arith.addf %419, %420 : vector<2x256xf32>
    %422 = arith.truncf %366 : vector<2x64xf32> to vector<2x64xbf16>
    %cst_146 = arith.constant dense<0.000000e+00> : vector<2x256xf32>
    %423 = tpu.matmul %422, %286, %cst_146 {dimension_numbers = #tpu.dot_dimension_numbers<[1], [0], [0], [1], [0, 0, 1, 1], [], []>} : vector<2x64xbf16>, vector<64x256xbf16>, vector<2x256xf32> -> vector<2x256xf32>
    %424 = arith.addf %421, %423 : vector<2x256xf32>
    %425 = arith.negf %424 : vector<2x256xf32>
    %426 = math.exp %425 : vector<2x256xf32>
    %cst_147 = arith.constant 1.000000e+00 : f32
    %427 = vector.broadcast %cst_147 : f32 to vector<2x256xf32>
    %428 = arith.addf %427, %426 : vector<2x256xf32>
    %429 = arith.divf %427, %428 : vector<2x256xf32>
    %430 = vector.extract_strided_slice %429 {offsets = [0, 0], sizes = [2, 64], strides = [1, 1]} : vector<2x256xf32> to vector<2x64xf32>
    %431 = vector.extract_strided_slice %429 {offsets = [0, 64], sizes = [2, 64], strides = [1, 1]} : vector<2x256xf32> to vector<2x64xf32>
    %432 = vector.extract_strided_slice %429 {offsets = [0, 128], sizes = [2, 64], strides = [1, 1]} : vector<2x256xf32> to vector<2x64xf32>
    %cst_148 = arith.constant 2.000000e+00 : f32
    %433 = vector.broadcast %cst_148 : f32 to vector<2x64xf32>
    %434 = arith.mulf %433, %432 : vector<2x64xf32>
    %cst_149 = arith.constant 1.000000e+00 : f32
    %435 = vector.broadcast %cst_149 : f32 to vector<2x64xf32>
    %436 = arith.subf %434, %435 : vector<2x64xf32>
    %437 = vector.extract_strided_slice %429 {offsets = [0, 192], sizes = [2, 64], strides = [1, 1]} : vector<2x256xf32> to vector<2x64xf32>
    %438 = arith.mulf %431, %364 : vector<2x64xf32>
    %439 = arith.mulf %430, %436 : vector<2x64xf32>
    %440 = arith.addf %438, %439 : vector<2x64xf32>
    %441 = math.tanh %440 : vector<2x64xf32>
    %442 = arith.mulf %437, %441 : vector<2x64xf32>
    %c1_i32 = arith.constant 1 : i32
    %443 = vector.broadcast %c1_i32 : i32 to vector<2x1xi32>
    %444 = arith.cmpi eq, %290, %443 : vector<2x1xi32>
    %445 = vector.shape_cast %444 : vector<2x1xi1> to vector<2x1xi1>
    %446 = vector.broadcast %445 : vector<2x1xi1> to vector<2x64xi1>
    %447 = arith.select %446, %442, %371 : vector<2x64xi1>, vector<2x64xf32>
    %448 = vector.extract_strided_slice %283 {offsets = [2, 0, 0], sizes = [1, 2, 256], strides = [1, 1, 1]} : vector<8x2x256xf32> to vector<1x2x256xf32>
    %449 = vector.shape_cast %448 : vector<1x2x256xf32> to vector<2x256xf32>
    %450 = arith.truncf %394 : vector<2x64xf32> to vector<2x64xbf16>
    %cst_150 = arith.constant dense<0.000000e+00> : vector<2x256xf32>
    %451 = tpu.matmul %450, %284, %cst_150 {dimension_numbers = #tpu.dot_dimension_numbers<[1], [0], [0], [1], [0, 0, 1, 1], [], []>} : vector<2x64xbf16>, vector<64x256xbf16>, vector<2x256xf32> -> vector<2x256xf32>
    %452 = arith.addf %449, %451 : vector<2x256xf32>
    %453 = arith.negf %452 : vector<2x256xf32>
    %454 = math.exp %453 : vector<2x256xf32>
    %cst_151 = arith.constant 1.000000e+00 : f32
    %455 = vector.broadcast %cst_151 : f32 to vector<2x256xf32>
    %456 = arith.addf %455, %454 : vector<2x256xf32>
    %457 = arith.divf %455, %456 : vector<2x256xf32>
    %458 = vector.extract_strided_slice %457 {offsets = [0, 0], sizes = [2, 64], strides = [1, 1]} : vector<2x256xf32> to vector<2x64xf32>
    %459 = vector.extract_strided_slice %457 {offsets = [0, 64], sizes = [2, 64], strides = [1, 1]} : vector<2x256xf32> to vector<2x64xf32>
    %460 = vector.extract_strided_slice %457 {offsets = [0, 128], sizes = [2, 64], strides = [1, 1]} : vector<2x256xf32> to vector<2x64xf32>
    %cst_152 = arith.constant 2.000000e+00 : f32
    %461 = vector.broadcast %cst_152 : f32 to vector<2x64xf32>
    %462 = arith.mulf %461, %460 : vector<2x64xf32>
    %cst_153 = arith.constant 1.000000e+00 : f32
    %463 = vector.broadcast %cst_153 : f32 to vector<2x64xf32>
    %464 = arith.subf %462, %463 : vector<2x64xf32>
    %465 = vector.extract_strided_slice %457 {offsets = [0, 192], sizes = [2, 64], strides = [1, 1]} : vector<2x256xf32> to vector<2x64xf32>
    %466 = arith.mulf %459, %392 : vector<2x64xf32>
    %467 = arith.mulf %458, %464 : vector<2x64xf32>
    %468 = arith.addf %466, %467 : vector<2x64xf32>
    %469 = math.tanh %468 : vector<2x64xf32>
    %470 = arith.mulf %465, %469 : vector<2x64xf32>
    %471 = vector.extract_strided_slice %275 {offsets = [2, 0, 0], sizes = [1, 2, 64], strides = [1, 1, 1]} : vector<8x2x64xf32> to vector<1x2x64xf32>
    %472 = vector.shape_cast %471 : vector<1x2x64xf32> to vector<2x64xf32>
    %473 = arith.addf %470, %472 : vector<2x64xf32>
    %cst_154 = arith.constant dense<0.000000e+00> : vector<2xf32>
    %474 = vector.multi_reduction <add>, %473, %cst_154 [1] : vector<2x64xf32> to vector<2xf32>
    %475 = vector.shape_cast %474 : vector<2xf32> to vector<2x1xf32>
    %cst_155 = arith.constant 6.400000e+01 : f32
    %476 = vector.broadcast %cst_155 : f32 to vector<2x1xf32>
    %477 = arith.divf %475, %476 : vector<2x1xf32>
    %478 = vector.broadcast %477 : vector<2x1xf32> to vector<2x64xf32>
    %479 = arith.subf %473, %478 : vector<2x64xf32>
    %480 = arith.mulf %479, %479 : vector<2x64xf32>
    %cst_156 = arith.constant dense<0.000000e+00> : vector<2xf32>
    %481 = vector.multi_reduction <add>, %480, %cst_156 [1] : vector<2x64xf32> to vector<2xf32>
    %482 = vector.shape_cast %481 : vector<2xf32> to vector<2x1xf32>
    %cst_157 = arith.constant 6.400000e+01 : f32
    %483 = vector.broadcast %cst_157 : f32 to vector<2x1xf32>
    %484 = arith.divf %482, %483 : vector<2x1xf32>
    %cst_158 = arith.constant 9.99999974E-6 : f32
    %485 = vector.broadcast %cst_158 : f32 to vector<2x1xf32>
    %486 = arith.addf %484, %485 : vector<2x1xf32>
    %487 = math.rsqrt %486 : vector<2x1xf32>
    %488 = vector.broadcast %487 : vector<2x1xf32> to vector<2x64xf32>
    %489 = arith.mulf %479, %488 : vector<2x64xf32>
    %490 = vector.broadcast %288 : vector<1x64xf32> to vector<2x64xf32>
    %491 = arith.mulf %489, %490 : vector<2x64xf32>
    %492 = vector.broadcast %289 : vector<1x64xf32> to vector<2x64xf32>
    %493 = arith.addf %491, %492 : vector<2x64xf32>
    %494 = arith.truncf %493 : vector<2x64xf32> to vector<2x64xbf16>
    %cst_159 = arith.constant dense<0.000000e+00> : vector<2x256xf32>
    %495 = tpu.matmul %494, %285, %cst_159 {dimension_numbers = #tpu.dot_dimension_numbers<[1], [0], [0], [1], [0, 0, 1, 1], [], []>} : vector<2x64xbf16>, vector<64x256xbf16>, vector<2x256xf32> -> vector<2x256xf32>
    %496 = vector.broadcast %287 : vector<1x256xf32> to vector<2x256xf32>
    %497 = arith.addf %495, %496 : vector<2x256xf32>
    %498 = arith.truncf %442 : vector<2x64xf32> to vector<2x64xbf16>
    %cst_160 = arith.constant dense<0.000000e+00> : vector<2x256xf32>
    %499 = tpu.matmul %498, %286, %cst_160 {dimension_numbers = #tpu.dot_dimension_numbers<[1], [0], [0], [1], [0, 0, 1, 1], [], []>} : vector<2x64xbf16>, vector<64x256xbf16>, vector<2x256xf32> -> vector<2x256xf32>
    %500 = arith.addf %497, %499 : vector<2x256xf32>
    %501 = arith.negf %500 : vector<2x256xf32>
    %502 = math.exp %501 : vector<2x256xf32>
    %cst_161 = arith.constant 1.000000e+00 : f32
    %503 = vector.broadcast %cst_161 : f32 to vector<2x256xf32>
    %504 = arith.addf %503, %502 : vector<2x256xf32>
    %505 = arith.divf %503, %504 : vector<2x256xf32>
    %506 = vector.extract_strided_slice %505 {offsets = [0, 0], sizes = [2, 64], strides = [1, 1]} : vector<2x256xf32> to vector<2x64xf32>
    %507 = vector.extract_strided_slice %505 {offsets = [0, 64], sizes = [2, 64], strides = [1, 1]} : vector<2x256xf32> to vector<2x64xf32>
    %508 = vector.extract_strided_slice %505 {offsets = [0, 128], sizes = [2, 64], strides = [1, 1]} : vector<2x256xf32> to vector<2x64xf32>
    %cst_162 = arith.constant 2.000000e+00 : f32
    %509 = vector.broadcast %cst_162 : f32 to vector<2x64xf32>
    %510 = arith.mulf %509, %508 : vector<2x64xf32>
    %cst_163 = arith.constant 1.000000e+00 : f32
    %511 = vector.broadcast %cst_163 : f32 to vector<2x64xf32>
    %512 = arith.subf %510, %511 : vector<2x64xf32>
    %513 = vector.extract_strided_slice %505 {offsets = [0, 192], sizes = [2, 64], strides = [1, 1]} : vector<2x256xf32> to vector<2x64xf32>
    %514 = arith.mulf %507, %440 : vector<2x64xf32>
    %515 = arith.mulf %506, %512 : vector<2x64xf32>
    %516 = arith.addf %514, %515 : vector<2x64xf32>
    %517 = math.tanh %516 : vector<2x64xf32>
    %518 = arith.mulf %513, %517 : vector<2x64xf32>
    %c2_i32 = arith.constant 2 : i32
    %519 = vector.broadcast %c2_i32 : i32 to vector<2x1xi32>
    %520 = arith.cmpi eq, %290, %519 : vector<2x1xi32>
    %521 = vector.shape_cast %520 : vector<2x1xi1> to vector<2x1xi1>
    %522 = vector.broadcast %521 : vector<2x1xi1> to vector<2x64xi1>
    %523 = arith.select %522, %518, %447 : vector<2x64xi1>, vector<2x64xf32>
    %524 = vector.extract_strided_slice %283 {offsets = [3, 0, 0], sizes = [1, 2, 256], strides = [1, 1, 1]} : vector<8x2x256xf32> to vector<1x2x256xf32>
    %525 = vector.shape_cast %524 : vector<1x2x256xf32> to vector<2x256xf32>
    %526 = arith.truncf %470 : vector<2x64xf32> to vector<2x64xbf16>
    %cst_164 = arith.constant dense<0.000000e+00> : vector<2x256xf32>
    %527 = tpu.matmul %526, %284, %cst_164 {dimension_numbers = #tpu.dot_dimension_numbers<[1], [0], [0], [1], [0, 0, 1, 1], [], []>} : vector<2x64xbf16>, vector<64x256xbf16>, vector<2x256xf32> -> vector<2x256xf32>
    %528 = arith.addf %525, %527 : vector<2x256xf32>
    %529 = arith.negf %528 : vector<2x256xf32>
    %530 = math.exp %529 : vector<2x256xf32>
    %cst_165 = arith.constant 1.000000e+00 : f32
    %531 = vector.broadcast %cst_165 : f32 to vector<2x256xf32>
    %532 = arith.addf %531, %530 : vector<2x256xf32>
    %533 = arith.divf %531, %532 : vector<2x256xf32>
    %534 = vector.extract_strided_slice %533 {offsets = [0, 0], sizes = [2, 64], strides = [1, 1]} : vector<2x256xf32> to vector<2x64xf32>
    %535 = vector.extract_strided_slice %533 {offsets = [0, 64], sizes = [2, 64], strides = [1, 1]} : vector<2x256xf32> to vector<2x64xf32>
    %536 = vector.extract_strided_slice %533 {offsets = [0, 128], sizes = [2, 64], strides = [1, 1]} : vector<2x256xf32> to vector<2x64xf32>
    %cst_166 = arith.constant 2.000000e+00 : f32
    %537 = vector.broadcast %cst_166 : f32 to vector<2x64xf32>
    %538 = arith.mulf %537, %536 : vector<2x64xf32>
    %cst_167 = arith.constant 1.000000e+00 : f32
    %539 = vector.broadcast %cst_167 : f32 to vector<2x64xf32>
    %540 = arith.subf %538, %539 : vector<2x64xf32>
    %541 = vector.extract_strided_slice %533 {offsets = [0, 192], sizes = [2, 64], strides = [1, 1]} : vector<2x256xf32> to vector<2x64xf32>
    %542 = arith.mulf %535, %468 : vector<2x64xf32>
    %543 = arith.mulf %534, %540 : vector<2x64xf32>
    %544 = arith.addf %542, %543 : vector<2x64xf32>
    %545 = math.tanh %544 : vector<2x64xf32>
    %546 = arith.mulf %541, %545 : vector<2x64xf32>
    %547 = vector.extract_strided_slice %275 {offsets = [3, 0, 0], sizes = [1, 2, 64], strides = [1, 1, 1]} : vector<8x2x64xf32> to vector<1x2x64xf32>
    %548 = vector.shape_cast %547 : vector<1x2x64xf32> to vector<2x64xf32>
    %549 = arith.addf %546, %548 : vector<2x64xf32>
    %cst_168 = arith.constant dense<0.000000e+00> : vector<2xf32>
    %550 = vector.multi_reduction <add>, %549, %cst_168 [1] : vector<2x64xf32> to vector<2xf32>
    %551 = vector.shape_cast %550 : vector<2xf32> to vector<2x1xf32>
    %cst_169 = arith.constant 6.400000e+01 : f32
    %552 = vector.broadcast %cst_169 : f32 to vector<2x1xf32>
    %553 = arith.divf %551, %552 : vector<2x1xf32>
    %554 = vector.broadcast %553 : vector<2x1xf32> to vector<2x64xf32>
    %555 = arith.subf %549, %554 : vector<2x64xf32>
    %556 = arith.mulf %555, %555 : vector<2x64xf32>
    %cst_170 = arith.constant dense<0.000000e+00> : vector<2xf32>
    %557 = vector.multi_reduction <add>, %556, %cst_170 [1] : vector<2x64xf32> to vector<2xf32>
    %558 = vector.shape_cast %557 : vector<2xf32> to vector<2x1xf32>
    %cst_171 = arith.constant 6.400000e+01 : f32
    %559 = vector.broadcast %cst_171 : f32 to vector<2x1xf32>
    %560 = arith.divf %558, %559 : vector<2x1xf32>
    %cst_172 = arith.constant 9.99999974E-6 : f32
    %561 = vector.broadcast %cst_172 : f32 to vector<2x1xf32>
    %562 = arith.addf %560, %561 : vector<2x1xf32>
    %563 = math.rsqrt %562 : vector<2x1xf32>
    %564 = vector.broadcast %563 : vector<2x1xf32> to vector<2x64xf32>
    %565 = arith.mulf %555, %564 : vector<2x64xf32>
    %566 = vector.broadcast %288 : vector<1x64xf32> to vector<2x64xf32>
    %567 = arith.mulf %565, %566 : vector<2x64xf32>
    %568 = vector.broadcast %289 : vector<1x64xf32> to vector<2x64xf32>
    %569 = arith.addf %567, %568 : vector<2x64xf32>
    %570 = arith.truncf %569 : vector<2x64xf32> to vector<2x64xbf16>
    %cst_173 = arith.constant dense<0.000000e+00> : vector<2x256xf32>
    %571 = tpu.matmul %570, %285, %cst_173 {dimension_numbers = #tpu.dot_dimension_numbers<[1], [0], [0], [1], [0, 0, 1, 1], [], []>} : vector<2x64xbf16>, vector<64x256xbf16>, vector<2x256xf32> -> vector<2x256xf32>
    %572 = vector.broadcast %287 : vector<1x256xf32> to vector<2x256xf32>
    %573 = arith.addf %571, %572 : vector<2x256xf32>
    %574 = arith.truncf %518 : vector<2x64xf32> to vector<2x64xbf16>
    %cst_174 = arith.constant dense<0.000000e+00> : vector<2x256xf32>
    %575 = tpu.matmul %574, %286, %cst_174 {dimension_numbers = #tpu.dot_dimension_numbers<[1], [0], [0], [1], [0, 0, 1, 1], [], []>} : vector<2x64xbf16>, vector<64x256xbf16>, vector<2x256xf32> -> vector<2x256xf32>
    %576 = arith.addf %573, %575 : vector<2x256xf32>
    %577 = arith.negf %576 : vector<2x256xf32>
    %578 = math.exp %577 : vector<2x256xf32>
    %cst_175 = arith.constant 1.000000e+00 : f32
    %579 = vector.broadcast %cst_175 : f32 to vector<2x256xf32>
    %580 = arith.addf %579, %578 : vector<2x256xf32>
    %581 = arith.divf %579, %580 : vector<2x256xf32>
    %582 = vector.extract_strided_slice %581 {offsets = [0, 0], sizes = [2, 64], strides = [1, 1]} : vector<2x256xf32> to vector<2x64xf32>
    %583 = vector.extract_strided_slice %581 {offsets = [0, 64], sizes = [2, 64], strides = [1, 1]} : vector<2x256xf32> to vector<2x64xf32>
    %584 = vector.extract_strided_slice %581 {offsets = [0, 128], sizes = [2, 64], strides = [1, 1]} : vector<2x256xf32> to vector<2x64xf32>
    %cst_176 = arith.constant 2.000000e+00 : f32
    %585 = vector.broadcast %cst_176 : f32 to vector<2x64xf32>
    %586 = arith.mulf %585, %584 : vector<2x64xf32>
    %cst_177 = arith.constant 1.000000e+00 : f32
    %587 = vector.broadcast %cst_177 : f32 to vector<2x64xf32>
    %588 = arith.subf %586, %587 : vector<2x64xf32>
    %589 = vector.extract_strided_slice %581 {offsets = [0, 192], sizes = [2, 64], strides = [1, 1]} : vector<2x256xf32> to vector<2x64xf32>
    %590 = arith.mulf %583, %516 : vector<2x64xf32>
    %591 = arith.mulf %582, %588 : vector<2x64xf32>
    %592 = arith.addf %590, %591 : vector<2x64xf32>
    %593 = math.tanh %592 : vector<2x64xf32>
    %594 = arith.mulf %589, %593 : vector<2x64xf32>
    %c3_i32 = arith.constant 3 : i32
    %595 = vector.broadcast %c3_i32 : i32 to vector<2x1xi32>
    %596 = arith.cmpi eq, %290, %595 : vector<2x1xi32>
    %597 = vector.shape_cast %596 : vector<2x1xi1> to vector<2x1xi1>
    %598 = vector.broadcast %597 : vector<2x1xi1> to vector<2x64xi1>
    %599 = arith.select %598, %594, %523 : vector<2x64xi1>, vector<2x64xf32>
    %600 = vector.extract_strided_slice %283 {offsets = [4, 0, 0], sizes = [1, 2, 256], strides = [1, 1, 1]} : vector<8x2x256xf32> to vector<1x2x256xf32>
    %601 = vector.shape_cast %600 : vector<1x2x256xf32> to vector<2x256xf32>
    %602 = arith.truncf %546 : vector<2x64xf32> to vector<2x64xbf16>
    %cst_178 = arith.constant dense<0.000000e+00> : vector<2x256xf32>
    %603 = tpu.matmul %602, %284, %cst_178 {dimension_numbers = #tpu.dot_dimension_numbers<[1], [0], [0], [1], [0, 0, 1, 1], [], []>} : vector<2x64xbf16>, vector<64x256xbf16>, vector<2x256xf32> -> vector<2x256xf32>
    %604 = arith.addf %601, %603 : vector<2x256xf32>
    %605 = arith.negf %604 : vector<2x256xf32>
    %606 = math.exp %605 : vector<2x256xf32>
    %cst_179 = arith.constant 1.000000e+00 : f32
    %607 = vector.broadcast %cst_179 : f32 to vector<2x256xf32>
    %608 = arith.addf %607, %606 : vector<2x256xf32>
    %609 = arith.divf %607, %608 : vector<2x256xf32>
    %610 = vector.extract_strided_slice %609 {offsets = [0, 0], sizes = [2, 64], strides = [1, 1]} : vector<2x256xf32> to vector<2x64xf32>
    %611 = vector.extract_strided_slice %609 {offsets = [0, 64], sizes = [2, 64], strides = [1, 1]} : vector<2x256xf32> to vector<2x64xf32>
    %612 = vector.extract_strided_slice %609 {offsets = [0, 128], sizes = [2, 64], strides = [1, 1]} : vector<2x256xf32> to vector<2x64xf32>
    %cst_180 = arith.constant 2.000000e+00 : f32
    %613 = vector.broadcast %cst_180 : f32 to vector<2x64xf32>
    %614 = arith.mulf %613, %612 : vector<2x64xf32>
    %cst_181 = arith.constant 1.000000e+00 : f32
    %615 = vector.broadcast %cst_181 : f32 to vector<2x64xf32>
    %616 = arith.subf %614, %615 : vector<2x64xf32>
    %617 = vector.extract_strided_slice %609 {offsets = [0, 192], sizes = [2, 64], strides = [1, 1]} : vector<2x256xf32> to vector<2x64xf32>
    %618 = arith.mulf %611, %544 : vector<2x64xf32>
    %619 = arith.mulf %610, %616 : vector<2x64xf32>
    %620 = arith.addf %618, %619 : vector<2x64xf32>
    %621 = math.tanh %620 : vector<2x64xf32>
    %622 = arith.mulf %617, %621 : vector<2x64xf32>
    %623 = vector.extract_strided_slice %275 {offsets = [4, 0, 0], sizes = [1, 2, 64], strides = [1, 1, 1]} : vector<8x2x64xf32> to vector<1x2x64xf32>
    %624 = vector.shape_cast %623 : vector<1x2x64xf32> to vector<2x64xf32>
    %625 = arith.addf %622, %624 : vector<2x64xf32>
    %cst_182 = arith.constant dense<0.000000e+00> : vector<2xf32>
    %626 = vector.multi_reduction <add>, %625, %cst_182 [1] : vector<2x64xf32> to vector<2xf32>
    %627 = vector.shape_cast %626 : vector<2xf32> to vector<2x1xf32>
    %cst_183 = arith.constant 6.400000e+01 : f32
    %628 = vector.broadcast %cst_183 : f32 to vector<2x1xf32>
    %629 = arith.divf %627, %628 : vector<2x1xf32>
    %630 = vector.broadcast %629 : vector<2x1xf32> to vector<2x64xf32>
    %631 = arith.subf %625, %630 : vector<2x64xf32>
    %632 = arith.mulf %631, %631 : vector<2x64xf32>
    %cst_184 = arith.constant dense<0.000000e+00> : vector<2xf32>
    %633 = vector.multi_reduction <add>, %632, %cst_184 [1] : vector<2x64xf32> to vector<2xf32>
    %634 = vector.shape_cast %633 : vector<2xf32> to vector<2x1xf32>
    %cst_185 = arith.constant 6.400000e+01 : f32
    %635 = vector.broadcast %cst_185 : f32 to vector<2x1xf32>
    %636 = arith.divf %634, %635 : vector<2x1xf32>
    %cst_186 = arith.constant 9.99999974E-6 : f32
    %637 = vector.broadcast %cst_186 : f32 to vector<2x1xf32>
    %638 = arith.addf %636, %637 : vector<2x1xf32>
    %639 = math.rsqrt %638 : vector<2x1xf32>
    %640 = vector.broadcast %639 : vector<2x1xf32> to vector<2x64xf32>
    %641 = arith.mulf %631, %640 : vector<2x64xf32>
    %642 = vector.broadcast %288 : vector<1x64xf32> to vector<2x64xf32>
    %643 = arith.mulf %641, %642 : vector<2x64xf32>
    %644 = vector.broadcast %289 : vector<1x64xf32> to vector<2x64xf32>
    %645 = arith.addf %643, %644 : vector<2x64xf32>
    %646 = arith.truncf %645 : vector<2x64xf32> to vector<2x64xbf16>
    %cst_187 = arith.constant dense<0.000000e+00> : vector<2x256xf32>
    %647 = tpu.matmul %646, %285, %cst_187 {dimension_numbers = #tpu.dot_dimension_numbers<[1], [0], [0], [1], [0, 0, 1, 1], [], []>} : vector<2x64xbf16>, vector<64x256xbf16>, vector<2x256xf32> -> vector<2x256xf32>
    %648 = vector.broadcast %287 : vector<1x256xf32> to vector<2x256xf32>
    %649 = arith.addf %647, %648 : vector<2x256xf32>
    %650 = arith.truncf %594 : vector<2x64xf32> to vector<2x64xbf16>
    %cst_188 = arith.constant dense<0.000000e+00> : vector<2x256xf32>
    %651 = tpu.matmul %650, %286, %cst_188 {dimension_numbers = #tpu.dot_dimension_numbers<[1], [0], [0], [1], [0, 0, 1, 1], [], []>} : vector<2x64xbf16>, vector<64x256xbf16>, vector<2x256xf32> -> vector<2x256xf32>
    %652 = arith.addf %649, %651 : vector<2x256xf32>
    %653 = arith.negf %652 : vector<2x256xf32>
    %654 = math.exp %653 : vector<2x256xf32>
    %cst_189 = arith.constant 1.000000e+00 : f32
    %655 = vector.broadcast %cst_189 : f32 to vector<2x256xf32>
    %656 = arith.addf %655, %654 : vector<2x256xf32>
    %657 = arith.divf %655, %656 : vector<2x256xf32>
    %658 = vector.extract_strided_slice %657 {offsets = [0, 0], sizes = [2, 64], strides = [1, 1]} : vector<2x256xf32> to vector<2x64xf32>
    %659 = vector.extract_strided_slice %657 {offsets = [0, 64], sizes = [2, 64], strides = [1, 1]} : vector<2x256xf32> to vector<2x64xf32>
    %660 = vector.extract_strided_slice %657 {offsets = [0, 128], sizes = [2, 64], strides = [1, 1]} : vector<2x256xf32> to vector<2x64xf32>
    %cst_190 = arith.constant 2.000000e+00 : f32
    %661 = vector.broadcast %cst_190 : f32 to vector<2x64xf32>
    %662 = arith.mulf %661, %660 : vector<2x64xf32>
    %cst_191 = arith.constant 1.000000e+00 : f32
    %663 = vector.broadcast %cst_191 : f32 to vector<2x64xf32>
    %664 = arith.subf %662, %663 : vector<2x64xf32>
    %665 = vector.extract_strided_slice %657 {offsets = [0, 192], sizes = [2, 64], strides = [1, 1]} : vector<2x256xf32> to vector<2x64xf32>
    %666 = arith.mulf %659, %592 : vector<2x64xf32>
    %667 = arith.mulf %658, %664 : vector<2x64xf32>
    %668 = arith.addf %666, %667 : vector<2x64xf32>
    %669 = math.tanh %668 : vector<2x64xf32>
    %670 = arith.mulf %665, %669 : vector<2x64xf32>
    %c4_i32 = arith.constant 4 : i32
    %671 = vector.broadcast %c4_i32 : i32 to vector<2x1xi32>
    %672 = arith.cmpi eq, %290, %671 : vector<2x1xi32>
    %673 = vector.shape_cast %672 : vector<2x1xi1> to vector<2x1xi1>
    %674 = vector.broadcast %673 : vector<2x1xi1> to vector<2x64xi1>
    %675 = arith.select %674, %670, %599 : vector<2x64xi1>, vector<2x64xf32>
    %676 = vector.extract_strided_slice %283 {offsets = [5, 0, 0], sizes = [1, 2, 256], strides = [1, 1, 1]} : vector<8x2x256xf32> to vector<1x2x256xf32>
    %677 = vector.shape_cast %676 : vector<1x2x256xf32> to vector<2x256xf32>
    %678 = arith.truncf %622 : vector<2x64xf32> to vector<2x64xbf16>
    %cst_192 = arith.constant dense<0.000000e+00> : vector<2x256xf32>
    %679 = tpu.matmul %678, %284, %cst_192 {dimension_numbers = #tpu.dot_dimension_numbers<[1], [0], [0], [1], [0, 0, 1, 1], [], []>} : vector<2x64xbf16>, vector<64x256xbf16>, vector<2x256xf32> -> vector<2x256xf32>
    %680 = arith.addf %677, %679 : vector<2x256xf32>
    %681 = arith.negf %680 : vector<2x256xf32>
    %682 = math.exp %681 : vector<2x256xf32>
    %cst_193 = arith.constant 1.000000e+00 : f32
    %683 = vector.broadcast %cst_193 : f32 to vector<2x256xf32>
    %684 = arith.addf %683, %682 : vector<2x256xf32>
    %685 = arith.divf %683, %684 : vector<2x256xf32>
    %686 = vector.extract_strided_slice %685 {offsets = [0, 0], sizes = [2, 64], strides = [1, 1]} : vector<2x256xf32> to vector<2x64xf32>
    %687 = vector.extract_strided_slice %685 {offsets = [0, 64], sizes = [2, 64], strides = [1, 1]} : vector<2x256xf32> to vector<2x64xf32>
    %688 = vector.extract_strided_slice %685 {offsets = [0, 128], sizes = [2, 64], strides = [1, 1]} : vector<2x256xf32> to vector<2x64xf32>
    %cst_194 = arith.constant 2.000000e+00 : f32
    %689 = vector.broadcast %cst_194 : f32 to vector<2x64xf32>
    %690 = arith.mulf %689, %688 : vector<2x64xf32>
    %cst_195 = arith.constant 1.000000e+00 : f32
    %691 = vector.broadcast %cst_195 : f32 to vector<2x64xf32>
    %692 = arith.subf %690, %691 : vector<2x64xf32>
    %693 = vector.extract_strided_slice %685 {offsets = [0, 192], sizes = [2, 64], strides = [1, 1]} : vector<2x256xf32> to vector<2x64xf32>
    %694 = arith.mulf %687, %620 : vector<2x64xf32>
    %695 = arith.mulf %686, %692 : vector<2x64xf32>
    %696 = arith.addf %694, %695 : vector<2x64xf32>
    %697 = math.tanh %696 : vector<2x64xf32>
    %698 = arith.mulf %693, %697 : vector<2x64xf32>
    %699 = vector.extract_strided_slice %275 {offsets = [5, 0, 0], sizes = [1, 2, 64], strides = [1, 1, 1]} : vector<8x2x64xf32> to vector<1x2x64xf32>
    %700 = vector.shape_cast %699 : vector<1x2x64xf32> to vector<2x64xf32>
    %701 = arith.addf %698, %700 : vector<2x64xf32>
    %cst_196 = arith.constant dense<0.000000e+00> : vector<2xf32>
    %702 = vector.multi_reduction <add>, %701, %cst_196 [1] : vector<2x64xf32> to vector<2xf32>
    %703 = vector.shape_cast %702 : vector<2xf32> to vector<2x1xf32>
    %cst_197 = arith.constant 6.400000e+01 : f32
    %704 = vector.broadcast %cst_197 : f32 to vector<2x1xf32>
    %705 = arith.divf %703, %704 : vector<2x1xf32>
    %706 = vector.broadcast %705 : vector<2x1xf32> to vector<2x64xf32>
    %707 = arith.subf %701, %706 : vector<2x64xf32>
    %708 = arith.mulf %707, %707 : vector<2x64xf32>
    %cst_198 = arith.constant dense<0.000000e+00> : vector<2xf32>
    %709 = vector.multi_reduction <add>, %708, %cst_198 [1] : vector<2x64xf32> to vector<2xf32>
    %710 = vector.shape_cast %709 : vector<2xf32> to vector<2x1xf32>
    %cst_199 = arith.constant 6.400000e+01 : f32
    %711 = vector.broadcast %cst_199 : f32 to vector<2x1xf32>
    %712 = arith.divf %710, %711 : vector<2x1xf32>
    %cst_200 = arith.constant 9.99999974E-6 : f32
    %713 = vector.broadcast %cst_200 : f32 to vector<2x1xf32>
    %714 = arith.addf %712, %713 : vector<2x1xf32>
    %715 = math.rsqrt %714 : vector<2x1xf32>
    %716 = vector.broadcast %715 : vector<2x1xf32> to vector<2x64xf32>
    %717 = arith.mulf %707, %716 : vector<2x64xf32>
    %718 = vector.broadcast %288 : vector<1x64xf32> to vector<2x64xf32>
    %719 = arith.mulf %717, %718 : vector<2x64xf32>
    %720 = vector.broadcast %289 : vector<1x64xf32> to vector<2x64xf32>
    %721 = arith.addf %719, %720 : vector<2x64xf32>
    %722 = arith.truncf %721 : vector<2x64xf32> to vector<2x64xbf16>
    %cst_201 = arith.constant dense<0.000000e+00> : vector<2x256xf32>
    %723 = tpu.matmul %722, %285, %cst_201 {dimension_numbers = #tpu.dot_dimension_numbers<[1], [0], [0], [1], [0, 0, 1, 1], [], []>} : vector<2x64xbf16>, vector<64x256xbf16>, vector<2x256xf32> -> vector<2x256xf32>
    %724 = vector.broadcast %287 : vector<1x256xf32> to vector<2x256xf32>
    %725 = arith.addf %723, %724 : vector<2x256xf32>
    %726 = arith.truncf %670 : vector<2x64xf32> to vector<2x64xbf16>
    %cst_202 = arith.constant dense<0.000000e+00> : vector<2x256xf32>
    %727 = tpu.matmul %726, %286, %cst_202 {dimension_numbers = #tpu.dot_dimension_numbers<[1], [0], [0], [1], [0, 0, 1, 1], [], []>} : vector<2x64xbf16>, vector<64x256xbf16>, vector<2x256xf32> -> vector<2x256xf32>
    %728 = arith.addf %725, %727 : vector<2x256xf32>
    %729 = arith.negf %728 : vector<2x256xf32>
    %730 = math.exp %729 : vector<2x256xf32>
    %cst_203 = arith.constant 1.000000e+00 : f32
    %731 = vector.broadcast %cst_203 : f32 to vector<2x256xf32>
    %732 = arith.addf %731, %730 : vector<2x256xf32>
    %733 = arith.divf %731, %732 : vector<2x256xf32>
    %734 = vector.extract_strided_slice %733 {offsets = [0, 0], sizes = [2, 64], strides = [1, 1]} : vector<2x256xf32> to vector<2x64xf32>
    %735 = vector.extract_strided_slice %733 {offsets = [0, 64], sizes = [2, 64], strides = [1, 1]} : vector<2x256xf32> to vector<2x64xf32>
    %736 = vector.extract_strided_slice %733 {offsets = [0, 128], sizes = [2, 64], strides = [1, 1]} : vector<2x256xf32> to vector<2x64xf32>
    %cst_204 = arith.constant 2.000000e+00 : f32
    %737 = vector.broadcast %cst_204 : f32 to vector<2x64xf32>
    %738 = arith.mulf %737, %736 : vector<2x64xf32>
    %cst_205 = arith.constant 1.000000e+00 : f32
    %739 = vector.broadcast %cst_205 : f32 to vector<2x64xf32>
    %740 = arith.subf %738, %739 : vector<2x64xf32>
    %741 = vector.extract_strided_slice %733 {offsets = [0, 192], sizes = [2, 64], strides = [1, 1]} : vector<2x256xf32> to vector<2x64xf32>
    %742 = arith.mulf %735, %668 : vector<2x64xf32>
    %743 = arith.mulf %734, %740 : vector<2x64xf32>
    %744 = arith.addf %742, %743 : vector<2x64xf32>
    %745 = math.tanh %744 : vector<2x64xf32>
    %746 = arith.mulf %741, %745 : vector<2x64xf32>
    %c5_i32 = arith.constant 5 : i32
    %747 = vector.broadcast %c5_i32 : i32 to vector<2x1xi32>
    %748 = arith.cmpi eq, %290, %747 : vector<2x1xi32>
    %749 = vector.shape_cast %748 : vector<2x1xi1> to vector<2x1xi1>
    %750 = vector.broadcast %749 : vector<2x1xi1> to vector<2x64xi1>
    %751 = arith.select %750, %746, %675 : vector<2x64xi1>, vector<2x64xf32>
    %752 = vector.extract_strided_slice %283 {offsets = [6, 0, 0], sizes = [1, 2, 256], strides = [1, 1, 1]} : vector<8x2x256xf32> to vector<1x2x256xf32>
    %753 = vector.shape_cast %752 : vector<1x2x256xf32> to vector<2x256xf32>
    %754 = arith.truncf %698 : vector<2x64xf32> to vector<2x64xbf16>
    %cst_206 = arith.constant dense<0.000000e+00> : vector<2x256xf32>
    %755 = tpu.matmul %754, %284, %cst_206 {dimension_numbers = #tpu.dot_dimension_numbers<[1], [0], [0], [1], [0, 0, 1, 1], [], []>} : vector<2x64xbf16>, vector<64x256xbf16>, vector<2x256xf32> -> vector<2x256xf32>
    %756 = arith.addf %753, %755 : vector<2x256xf32>
    %757 = arith.negf %756 : vector<2x256xf32>
    %758 = math.exp %757 : vector<2x256xf32>
    %cst_207 = arith.constant 1.000000e+00 : f32
    %759 = vector.broadcast %cst_207 : f32 to vector<2x256xf32>
    %760 = arith.addf %759, %758 : vector<2x256xf32>
    %761 = arith.divf %759, %760 : vector<2x256xf32>
    %762 = vector.extract_strided_slice %761 {offsets = [0, 0], sizes = [2, 64], strides = [1, 1]} : vector<2x256xf32> to vector<2x64xf32>
    %763 = vector.extract_strided_slice %761 {offsets = [0, 64], sizes = [2, 64], strides = [1, 1]} : vector<2x256xf32> to vector<2x64xf32>
    %764 = vector.extract_strided_slice %761 {offsets = [0, 128], sizes = [2, 64], strides = [1, 1]} : vector<2x256xf32> to vector<2x64xf32>
    %cst_208 = arith.constant 2.000000e+00 : f32
    %765 = vector.broadcast %cst_208 : f32 to vector<2x64xf32>
    %766 = arith.mulf %765, %764 : vector<2x64xf32>
    %cst_209 = arith.constant 1.000000e+00 : f32
    %767 = vector.broadcast %cst_209 : f32 to vector<2x64xf32>
    %768 = arith.subf %766, %767 : vector<2x64xf32>
    %769 = vector.extract_strided_slice %761 {offsets = [0, 192], sizes = [2, 64], strides = [1, 1]} : vector<2x256xf32> to vector<2x64xf32>
    %770 = arith.mulf %763, %696 : vector<2x64xf32>
    %771 = arith.mulf %762, %768 : vector<2x64xf32>
    %772 = arith.addf %770, %771 : vector<2x64xf32>
    %773 = math.tanh %772 : vector<2x64xf32>
    %774 = arith.mulf %769, %773 : vector<2x64xf32>
    %775 = vector.extract_strided_slice %275 {offsets = [6, 0, 0], sizes = [1, 2, 64], strides = [1, 1, 1]} : vector<8x2x64xf32> to vector<1x2x64xf32>
    %776 = vector.shape_cast %775 : vector<1x2x64xf32> to vector<2x64xf32>
    %777 = arith.addf %774, %776 : vector<2x64xf32>
    %cst_210 = arith.constant dense<0.000000e+00> : vector<2xf32>
    %778 = vector.multi_reduction <add>, %777, %cst_210 [1] : vector<2x64xf32> to vector<2xf32>
    %779 = vector.shape_cast %778 : vector<2xf32> to vector<2x1xf32>
    %cst_211 = arith.constant 6.400000e+01 : f32
    %780 = vector.broadcast %cst_211 : f32 to vector<2x1xf32>
    %781 = arith.divf %779, %780 : vector<2x1xf32>
    %782 = vector.broadcast %781 : vector<2x1xf32> to vector<2x64xf32>
    %783 = arith.subf %777, %782 : vector<2x64xf32>
    %784 = arith.mulf %783, %783 : vector<2x64xf32>
    %cst_212 = arith.constant dense<0.000000e+00> : vector<2xf32>
    %785 = vector.multi_reduction <add>, %784, %cst_212 [1] : vector<2x64xf32> to vector<2xf32>
    %786 = vector.shape_cast %785 : vector<2xf32> to vector<2x1xf32>
    %cst_213 = arith.constant 6.400000e+01 : f32
    %787 = vector.broadcast %cst_213 : f32 to vector<2x1xf32>
    %788 = arith.divf %786, %787 : vector<2x1xf32>
    %cst_214 = arith.constant 9.99999974E-6 : f32
    %789 = vector.broadcast %cst_214 : f32 to vector<2x1xf32>
    %790 = arith.addf %788, %789 : vector<2x1xf32>
    %791 = math.rsqrt %790 : vector<2x1xf32>
    %792 = vector.broadcast %791 : vector<2x1xf32> to vector<2x64xf32>
    %793 = arith.mulf %783, %792 : vector<2x64xf32>
    %794 = vector.broadcast %288 : vector<1x64xf32> to vector<2x64xf32>
    %795 = arith.mulf %793, %794 : vector<2x64xf32>
    %796 = vector.broadcast %289 : vector<1x64xf32> to vector<2x64xf32>
    %797 = arith.addf %795, %796 : vector<2x64xf32>
    %798 = arith.truncf %797 : vector<2x64xf32> to vector<2x64xbf16>
    %cst_215 = arith.constant dense<0.000000e+00> : vector<2x256xf32>
    %799 = tpu.matmul %798, %285, %cst_215 {dimension_numbers = #tpu.dot_dimension_numbers<[1], [0], [0], [1], [0, 0, 1, 1], [], []>} : vector<2x64xbf16>, vector<64x256xbf16>, vector<2x256xf32> -> vector<2x256xf32>
    %800 = vector.broadcast %287 : vector<1x256xf32> to vector<2x256xf32>
    %801 = arith.addf %799, %800 : vector<2x256xf32>
    %802 = arith.truncf %746 : vector<2x64xf32> to vector<2x64xbf16>
    %cst_216 = arith.constant dense<0.000000e+00> : vector<2x256xf32>
    %803 = tpu.matmul %802, %286, %cst_216 {dimension_numbers = #tpu.dot_dimension_numbers<[1], [0], [0], [1], [0, 0, 1, 1], [], []>} : vector<2x64xbf16>, vector<64x256xbf16>, vector<2x256xf32> -> vector<2x256xf32>
    %804 = arith.addf %801, %803 : vector<2x256xf32>
    %805 = arith.negf %804 : vector<2x256xf32>
    %806 = math.exp %805 : vector<2x256xf32>
    %cst_217 = arith.constant 1.000000e+00 : f32
    %807 = vector.broadcast %cst_217 : f32 to vector<2x256xf32>
    %808 = arith.addf %807, %806 : vector<2x256xf32>
    %809 = arith.divf %807, %808 : vector<2x256xf32>
    %810 = vector.extract_strided_slice %809 {offsets = [0, 0], sizes = [2, 64], strides = [1, 1]} : vector<2x256xf32> to vector<2x64xf32>
    %811 = vector.extract_strided_slice %809 {offsets = [0, 64], sizes = [2, 64], strides = [1, 1]} : vector<2x256xf32> to vector<2x64xf32>
    %812 = vector.extract_strided_slice %809 {offsets = [0, 128], sizes = [2, 64], strides = [1, 1]} : vector<2x256xf32> to vector<2x64xf32>
    %cst_218 = arith.constant 2.000000e+00 : f32
    %813 = vector.broadcast %cst_218 : f32 to vector<2x64xf32>
    %814 = arith.mulf %813, %812 : vector<2x64xf32>
    %cst_219 = arith.constant 1.000000e+00 : f32
    %815 = vector.broadcast %cst_219 : f32 to vector<2x64xf32>
    %816 = arith.subf %814, %815 : vector<2x64xf32>
    %817 = vector.extract_strided_slice %809 {offsets = [0, 192], sizes = [2, 64], strides = [1, 1]} : vector<2x256xf32> to vector<2x64xf32>
    %818 = arith.mulf %811, %744 : vector<2x64xf32>
    %819 = arith.mulf %810, %816 : vector<2x64xf32>
    %820 = arith.addf %818, %819 : vector<2x64xf32>
    %821 = math.tanh %820 : vector<2x64xf32>
    %822 = arith.mulf %817, %821 : vector<2x64xf32>
    %c6_i32 = arith.constant 6 : i32
    %823 = vector.broadcast %c6_i32 : i32 to vector<2x1xi32>
    %824 = arith.cmpi eq, %290, %823 : vector<2x1xi32>
    %825 = vector.shape_cast %824 : vector<2x1xi1> to vector<2x1xi1>
    %826 = vector.broadcast %825 : vector<2x1xi1> to vector<2x64xi1>
    %827 = arith.select %826, %822, %751 : vector<2x64xi1>, vector<2x64xf32>
    %828 = vector.extract_strided_slice %283 {offsets = [7, 0, 0], sizes = [1, 2, 256], strides = [1, 1, 1]} : vector<8x2x256xf32> to vector<1x2x256xf32>
    %829 = vector.shape_cast %828 : vector<1x2x256xf32> to vector<2x256xf32>
    %830 = arith.truncf %774 : vector<2x64xf32> to vector<2x64xbf16>
    %cst_220 = arith.constant dense<0.000000e+00> : vector<2x256xf32>
    %831 = tpu.matmul %830, %284, %cst_220 {dimension_numbers = #tpu.dot_dimension_numbers<[1], [0], [0], [1], [0, 0, 1, 1], [], []>} : vector<2x64xbf16>, vector<64x256xbf16>, vector<2x256xf32> -> vector<2x256xf32>
    %832 = arith.addf %829, %831 : vector<2x256xf32>
    %833 = arith.negf %832 : vector<2x256xf32>
    %834 = math.exp %833 : vector<2x256xf32>
    %cst_221 = arith.constant 1.000000e+00 : f32
    %835 = vector.broadcast %cst_221 : f32 to vector<2x256xf32>
    %836 = arith.addf %835, %834 : vector<2x256xf32>
    %837 = arith.divf %835, %836 : vector<2x256xf32>
    %838 = vector.extract_strided_slice %837 {offsets = [0, 0], sizes = [2, 64], strides = [1, 1]} : vector<2x256xf32> to vector<2x64xf32>
    %839 = vector.extract_strided_slice %837 {offsets = [0, 64], sizes = [2, 64], strides = [1, 1]} : vector<2x256xf32> to vector<2x64xf32>
    %840 = vector.extract_strided_slice %837 {offsets = [0, 128], sizes = [2, 64], strides = [1, 1]} : vector<2x256xf32> to vector<2x64xf32>
    %cst_222 = arith.constant 2.000000e+00 : f32
    %841 = vector.broadcast %cst_222 : f32 to vector<2x64xf32>
    %842 = arith.mulf %841, %840 : vector<2x64xf32>
    %cst_223 = arith.constant 1.000000e+00 : f32
    %843 = vector.broadcast %cst_223 : f32 to vector<2x64xf32>
    %844 = arith.subf %842, %843 : vector<2x64xf32>
    %845 = vector.extract_strided_slice %837 {offsets = [0, 192], sizes = [2, 64], strides = [1, 1]} : vector<2x256xf32> to vector<2x64xf32>
    %846 = arith.mulf %839, %772 : vector<2x64xf32>
    %847 = arith.mulf %838, %844 : vector<2x64xf32>
    %848 = arith.addf %846, %847 : vector<2x64xf32>
    %849 = math.tanh %848 : vector<2x64xf32>
    %850 = arith.mulf %845, %849 : vector<2x64xf32>
    %851 = vector.extract_strided_slice %275 {offsets = [7, 0, 0], sizes = [1, 2, 64], strides = [1, 1, 1]} : vector<8x2x64xf32> to vector<1x2x64xf32>
    %852 = vector.shape_cast %851 : vector<1x2x64xf32> to vector<2x64xf32>
    %853 = arith.addf %850, %852 : vector<2x64xf32>
    %cst_224 = arith.constant dense<0.000000e+00> : vector<2xf32>
    %854 = vector.multi_reduction <add>, %853, %cst_224 [1] : vector<2x64xf32> to vector<2xf32>
    %855 = vector.shape_cast %854 : vector<2xf32> to vector<2x1xf32>
    %cst_225 = arith.constant 6.400000e+01 : f32
    %856 = vector.broadcast %cst_225 : f32 to vector<2x1xf32>
    %857 = arith.divf %855, %856 : vector<2x1xf32>
    %858 = vector.broadcast %857 : vector<2x1xf32> to vector<2x64xf32>
    %859 = arith.subf %853, %858 : vector<2x64xf32>
    %860 = arith.mulf %859, %859 : vector<2x64xf32>
    %cst_226 = arith.constant dense<0.000000e+00> : vector<2xf32>
    %861 = vector.multi_reduction <add>, %860, %cst_226 [1] : vector<2x64xf32> to vector<2xf32>
    %862 = vector.shape_cast %861 : vector<2xf32> to vector<2x1xf32>
    %cst_227 = arith.constant 6.400000e+01 : f32
    %863 = vector.broadcast %cst_227 : f32 to vector<2x1xf32>
    %864 = arith.divf %862, %863 : vector<2x1xf32>
    %cst_228 = arith.constant 9.99999974E-6 : f32
    %865 = vector.broadcast %cst_228 : f32 to vector<2x1xf32>
    %866 = arith.addf %864, %865 : vector<2x1xf32>
    %867 = math.rsqrt %866 : vector<2x1xf32>
    %868 = vector.broadcast %867 : vector<2x1xf32> to vector<2x64xf32>
    %869 = arith.mulf %859, %868 : vector<2x64xf32>
    %870 = vector.broadcast %288 : vector<1x64xf32> to vector<2x64xf32>
    %871 = arith.mulf %869, %870 : vector<2x64xf32>
    %872 = vector.broadcast %289 : vector<1x64xf32> to vector<2x64xf32>
    %873 = arith.addf %871, %872 : vector<2x64xf32>
    %874 = arith.truncf %873 : vector<2x64xf32> to vector<2x64xbf16>
    %cst_229 = arith.constant dense<0.000000e+00> : vector<2x256xf32>
    %875 = tpu.matmul %874, %285, %cst_229 {dimension_numbers = #tpu.dot_dimension_numbers<[1], [0], [0], [1], [0, 0, 1, 1], [], []>} : vector<2x64xbf16>, vector<64x256xbf16>, vector<2x256xf32> -> vector<2x256xf32>
    %876 = vector.broadcast %287 : vector<1x256xf32> to vector<2x256xf32>
    %877 = arith.addf %875, %876 : vector<2x256xf32>
    %878 = arith.truncf %822 : vector<2x64xf32> to vector<2x64xbf16>
    %cst_230 = arith.constant dense<0.000000e+00> : vector<2x256xf32>
    %879 = tpu.matmul %878, %286, %cst_230 {dimension_numbers = #tpu.dot_dimension_numbers<[1], [0], [0], [1], [0, 0, 1, 1], [], []>} : vector<2x64xbf16>, vector<64x256xbf16>, vector<2x256xf32> -> vector<2x256xf32>
    %880 = arith.addf %877, %879 : vector<2x256xf32>
    %881 = arith.negf %880 : vector<2x256xf32>
    %882 = math.exp %881 : vector<2x256xf32>
    %cst_231 = arith.constant 1.000000e+00 : f32
    %883 = vector.broadcast %cst_231 : f32 to vector<2x256xf32>
    %884 = arith.addf %883, %882 : vector<2x256xf32>
    %885 = arith.divf %883, %884 : vector<2x256xf32>
    %886 = vector.extract_strided_slice %885 {offsets = [0, 0], sizes = [2, 64], strides = [1, 1]} : vector<2x256xf32> to vector<2x64xf32>
    %887 = vector.extract_strided_slice %885 {offsets = [0, 64], sizes = [2, 64], strides = [1, 1]} : vector<2x256xf32> to vector<2x64xf32>
    %888 = vector.extract_strided_slice %885 {offsets = [0, 128], sizes = [2, 64], strides = [1, 1]} : vector<2x256xf32> to vector<2x64xf32>
    %cst_232 = arith.constant 2.000000e+00 : f32
    %889 = vector.broadcast %cst_232 : f32 to vector<2x64xf32>
    %890 = arith.mulf %889, %888 : vector<2x64xf32>
    %cst_233 = arith.constant 1.000000e+00 : f32
    %891 = vector.broadcast %cst_233 : f32 to vector<2x64xf32>
    %892 = arith.subf %890, %891 : vector<2x64xf32>
    %893 = vector.extract_strided_slice %885 {offsets = [0, 192], sizes = [2, 64], strides = [1, 1]} : vector<2x256xf32> to vector<2x64xf32>
    %894 = arith.mulf %887, %820 : vector<2x64xf32>
    %895 = arith.mulf %886, %892 : vector<2x64xf32>
    %896 = arith.addf %894, %895 : vector<2x64xf32>
    %897 = math.tanh %896 : vector<2x64xf32>
    %898 = arith.mulf %893, %897 : vector<2x64xf32>
    %c7_i32 = arith.constant 7 : i32
    %899 = vector.broadcast %c7_i32 : i32 to vector<2x1xi32>
    %900 = arith.cmpi eq, %290, %899 : vector<2x1xi32>
    %901 = vector.shape_cast %900 : vector<2x1xi1> to vector<2x1xi1>
    %902 = vector.broadcast %901 : vector<2x1xi1> to vector<2x64xi1>
    %903 = arith.select %902, %898, %827 : vector<2x64xi1>, vector<2x64xf32>
    %c0_234 = arith.constant 0 : index
    %c0_235 = arith.constant 0 : index
    %904 = vector.load %arg15[%c0_234, %c0_235] : memref<1x64xf32, #tpu.memory_space<vmem>>, vector<1x64xf32>
    %905 = vector.broadcast %904 : vector<1x64xf32> to vector<2x64xf32>
    %906 = arith.mulf %903, %905 : vector<2x64xf32>
    %c0_236 = arith.constant 0 : index
    %c0_237 = arith.constant 0 : index
    %907 = vector.load %arg16[%c0_236, %c0_237] : memref<1x64xf32, #tpu.memory_space<vmem>>, vector<1x64xf32>
    %908 = vector.broadcast %907 : vector<1x64xf32> to vector<2x64xf32>
    %909 = arith.addf %906, %908 : vector<2x64xf32>
    %cst_238 = arith.constant 0.000000e+00 : f32
    %910 = vector.broadcast %cst_238 : f32 to vector<2x64xf32>
    %911 = arith.maximumf %909, %910 : vector<2x64xf32>
    %c0_239 = arith.constant 0 : index
    %c0_240 = arith.constant 0 : index
    %912 = vector.load %arg17[%c0_239, %c0_240] : memref<2x64xf32, #tpu.memory_space<vmem>>, vector<2x64xf32>
    tpu.vector_store %arg17[%c0_239, %c0_240], %911 {strides = array<i32>} : memref<2x64xf32, #tpu.memory_space<vmem>>, vector<2x64xf32>,
    return
  }
}

</mosaic_0001>

<llo_original>
// kernel: lstm_extraction_layer.1
$region0: #{lstm_extraction_layer.1}
  #allocation0 [shape = 'u32[]', space=smem, size = 0x4, offset = 0x4, fixed_abs, tag = 'smem constant byte address 0x4 - core index']
  #allocation1 [shape = 'u32[72,128]{1,0:T(1,128)}', space=vmem, size = 0x9000, scoped, tag = 'internal scratch']
  #allocation2 [shape = 'f32[8,2,64]{2,1,0:T(2,128)}', space=vmem, size = 0x2000, scoped, tag = 'scratch operand']
  #allocation3 [shape = 'f32[8,2,64]{2,1,0:T(2,128)}', space=vmem, size = 0x2000, scoped, tag = 'scratch operand']
  %s0 = inlined_call_operand.vmem [shape: f32[8,2,32], index: 0, kind: input, shape index: {}]
  %s1 = inlined_call_operand.vmem [shape: s32[2,1], index: 1, kind: input, shape index: {}]
  %s2 = inlined_call_operand.vmem [shape: bf16[32,256], index: 2, kind: input, shape index: {}]
  %s3 = inlined_call_operand.vmem [shape: bf16[64,256], index: 3, kind: input, shape index: {}]
  %s4 = inlined_call_operand.vmem [shape: f32[1,256], index: 4, kind: input, shape index: {}]
  %s5 = inlined_call_operand.vmem [shape: f32[1,64], index: 5, kind: input, shape index: {}]
  %s6 = inlined_call_operand.vmem [shape: f32[1,64], index: 6, kind: input, shape index: {}]
  %s7 = inlined_call_operand.vmem [shape: bf16[64,256], index: 7, kind: input, shape index: {}]
  %s8 = inlined_call_operand.vmem [shape: bf16[64,256], index: 8, kind: input, shape index: {}]
  %s9 = inlined_call_operand.vmem [shape: f32[1,256], index: 9, kind: input, shape index: {}]
  %s10 = inlined_call_operand.vmem [shape: f32[1,64], index: 10, kind: input, shape index: {}]
  %s11 = inlined_call_operand.vmem [shape: f32[1,64], index: 11, kind: input, shape index: {}]
  %s12 = inlined_call_operand.vmem [shape: bf16[64,256], index: 12, kind: input, shape index: {}]
  %s13 = inlined_call_operand.vmem [shape: bf16[64,256], index: 13, kind: input, shape index: {}]
  %s14 = inlined_call_operand.vmem [shape: f32[1,256], index: 14, kind: input, shape index: {}]
  %s15 = inlined_call_operand.vmem [shape: f32[1,64], index: 15, kind: input, shape index: {}]
  %s16 = inlined_call_operand.vmem [shape: f32[1,64], index: 16, kind: input, shape index: {}]
  %s17 = inlined_call_operand.hbm [shape: f32[2,64], index: 17, kind: output, shape index: {}]
  %s18 = sld [smem:[#allocation0]]
  $region78: #{lstm_extraction_layer.1} parent=0
    _
  %s20 = ssub.s32 1, %s18
  %s21 = scalar_select 0, %s20, %s18
  $region1: #{lstm_extraction_layer.1} parent=0
    #allocation4 [shape = 'u8[1024]{0}', space=vmem, size = 0x400, scoped, tag = 'output window, operand 0, single buffered']
    #allocation5 [shape = 's32[1]{0}', space=sflag, size = 0x4, scoped, tag = 'scoped memory for lstm_extraction_layer.1']
    %22 = vsyncpa [#allocation5], 0
    // Predicated region
    $region2: #{lstm_extraction_layer.1} parent=1 // pred_check
      _
    $region3: #{lstm_extraction_layer.1} parent=1 // pred_check_branch
      %24 = sbr.rel (0) target = $region5
    $region4: #{lstm_extraction_layer.1} parent=1 // pred_region
      _
    $region5: #{lstm_extraction_layer.1} parent=1 // pred_fallthru
      _
    // Predicated region
    $region6: #{lstm_extraction_layer.1} parent=1 // pred_check
      _
    $region7: #{lstm_extraction_layer.1} parent=1 // pred_check_branch
      %26 = sbr.rel (0) target = $region9
    $region8: #{lstm_extraction_layer.1} parent=1 // pred_region
      _
    $region9: #{lstm_extraction_layer.1} parent=1 // pred_fallthru
      _
    // Predicated region
    $region10: #{lstm_extraction_layer.1} parent=1 // pred_check
      _
    $region11: #{lstm_extraction_layer.1} parent=1 // pred_check_branch
      %28 = sbr.rel (0) target = $region13
    $region12: #{lstm_extraction_layer.1} parent=1 // pred_region
      _
    $region13: #{lstm_extraction_layer.1} parent=1 // pred_fallthru
      _
    // Predicated region
    $region14: #{lstm_extraction_layer.1} parent=1 // pred_check
      _
    $region15: #{lstm_extraction_layer.1} parent=1 // pred_check_branch
      %30 = sbr.rel (0) target = $region17
    $region16: #{lstm_extraction_layer.1} parent=1 // pred_region
      _
    $region17: #{lstm_extraction_layer.1} parent=1 // pred_fallthru
      _
    // Predicated region
    $region18: #{lstm_extraction_layer.1} parent=1 // pred_check
      _
    $region19: #{lstm_extraction_layer.1} parent=1 // pred_check_branch
      %32 = sbr.rel (0) target = $region21
    $region20: #{lstm_extraction_layer.1} parent=1 // pred_region
      _
    $region21: #{lstm_extraction_layer.1} parent=1 // pred_fallthru
      _
    // Predicated region
    $region22: #{lstm_extraction_layer.1} parent=1 // pred_check
      _
    $region23: #{lstm_extraction_layer.1} parent=1 // pred_check_branch
      %34 = sbr.rel (0) target = $region25
    $region24: #{lstm_extraction_layer.1} parent=1 // pred_region
      _
    $region25: #{lstm_extraction_layer.1} parent=1 // pred_fallthru
      _
    // Predicated region
    $region26: #{lstm_extraction_layer.1} parent=1 // pred_check
      _
    $region27: #{lstm_extraction_layer.1} parent=1 // pred_check_branch
      %36 = sbr.rel (0) target = $region29
    $region28: #{lstm_extraction_layer.1} parent=1 // pred_region
      _
    $region29: #{lstm_extraction_layer.1} parent=1 // pred_fallthru
      _
    // Predicated region
    $region30: #{lstm_extraction_layer.1} parent=1 // pred_check
      _
    $region31: #{lstm_extraction_layer.1} parent=1 // pred_check_branch
      %38 = sbr.rel (0) target = $region33
    $region32: #{lstm_extraction_layer.1} parent=1 // pred_region
      _
    $region33: #{lstm_extraction_layer.1} parent=1 // pred_fallthru
      _
    // Predicated region
    $region34: #{lstm_extraction_layer.1} parent=1 // pred_check
      _
    $region35: #{lstm_extraction_layer.1} parent=1 // pred_check_branch
      %40 = sbr.rel (0) target = $region37
    $region36: #{lstm_extraction_layer.1} parent=1 // pred_region
      _
    $region37: #{lstm_extraction_layer.1} parent=1 // pred_fallthru
      _
    // Predicated region
    $region38: #{lstm_extraction_layer.1} parent=1 // pred_check
      _
    $region39: #{lstm_extraction_layer.1} parent=1 // pred_check_branch
      %42 = sbr.rel (0) target = $region41
    $region40: #{lstm_extraction_layer.1} parent=1 // pred_region
      _
    $region41: #{lstm_extraction_layer.1} parent=1 // pred_fallthru
      _
    // Predicated region
    $region42: #{lstm_extraction_layer.1} parent=1 // pred_check
      _
    $region43: #{lstm_extraction_layer.1} parent=1 // pred_check_branch
      %44 = sbr.rel (0) target = $region45
    $region44: #{lstm_extraction_layer.1} parent=1 // pred_region
      _
    $region45: #{lstm_extraction_layer.1} parent=1 // pred_fallthru
      _
    // Predicated region
    $region46: #{lstm_extraction_layer.1} parent=1 // pred_check
      _
    $region47: #{lstm_extraction_layer.1} parent=1 // pred_check_branch
      %46 = sbr.rel (0) target = $region49
    $region48: #{lstm_extraction_layer.1} parent=1 // pred_region
      _
    $region49: #{lstm_extraction_layer.1} parent=1 // pred_fallthru
      _
    // Predicated region
    $region50: #{lstm_extraction_layer.1} parent=1 // pred_check
      _
    $region51: #{lstm_extraction_layer.1} parent=1 // pred_check_branch
      %48 = sbr.rel (0) target = $region53
    $region52: #{lstm_extraction_layer.1} parent=1 // pred_region
      _
    $region53: #{lstm_extraction_layer.1} parent=1 // pred_fallthru
      _
    // Predicated region
    $region54: #{lstm_extraction_layer.1} parent=1 // pred_check
      _
    $region55: #{lstm_extraction_layer.1} parent=1 // pred_check_branch
      %50 = sbr.rel (0) target = $region57
    $region56: #{lstm_extraction_layer.1} parent=1 // pred_region
      _
    $region57: #{lstm_extraction_layer.1} parent=1 // pred_fallthru
      _
    // Predicated region
    $region58: #{lstm_extraction_layer.1} parent=1 // pred_check
      _
    $region59: #{lstm_extraction_layer.1} parent=1 // pred_check_branch
      %52 = sbr.rel (0) target = $region61
    $region60: #{lstm_extraction_layer.1} parent=1 // pred_region
      _
    $region61: #{lstm_extraction_layer.1} parent=1 // pred_fallthru
      _
    // Predicated region
    $region62: #{lstm_extraction_layer.1} parent=1 // pred_check
      _
    $region63: #{lstm_extraction_layer.1} parent=1 // pred_check_branch
      %54 = sbr.rel (0) target = $region65
    $region64: #{lstm_extraction_layer.1} parent=1 // pred_region
      _
    $region65: #{lstm_extraction_layer.1} parent=1 // pred_fallthru
      _
    // Predicated region
    $region66: #{lstm_extraction_layer.1} parent=1 // pred_check
      _
    $region67: #{lstm_extraction_layer.1} parent=1 // pred_check_branch
      %56 = sbr.rel (0) target = $region69
    $region68: #{lstm_extraction_layer.1} parent=1 // pred_region
      _
    $region69: #{lstm_extraction_layer.1} parent=1 // pred_fallthru
      _
    %v58 = vld [vmem:[%s0] sm:$0x3]
    %v59 = vld [vmem:[%s0 + $0x2] sm:$0x3]
    %v60 = vld [vmem:[%s0 + $0x4] sm:$0x3]
    %v61 = vld [vmem:[%s0 + $0x6] sm:$0x3]
    %v62 = vld [vmem:[%s0 + $0x8] sm:$0x3]
    %v63 = vld [vmem:[%s0 + $0xa] sm:$0x3]
    %v64 = vld [vmem:[%s0 + $0xc] sm:$0x3]
    %v65 = vld [vmem:[%s0 + $0xe] sm:$0x3]
    %74 = vst [vmem:[#allocation1] ss:$4 sm:$0xff] %v58
    %s75 = scalar_lea.vmem [#allocation1], 1
    %76 = vst [vmem:[%s75] ss:$4 sm:$0xff] %v59
    %s77 = scalar_lea.vmem [#allocation1], 2
    %78 = vst [vmem:[%s77] ss:$4 sm:$0xff] %v60
    %s79 = scalar_lea.vmem [#allocation1], 3
    %80 = vst [vmem:[%s79] ss:$4 sm:$0xff] %v61
    %s81 = scalar_lea.vmem [#allocation1], 32
    %82 = vst [vmem:[%s81] ss:$4 sm:$0xff] %v62
    %s83 = scalar_lea.vmem [#allocation1], 33
    %84 = vst [vmem:[%s83] ss:$4 sm:$0xff] %v63
    %s85 = scalar_lea.vmem [#allocation1], 34
    %86 = vst [vmem:[%s85] ss:$4 sm:$0xff] %v64
    %s87 = scalar_lea.vmem [#allocation1], 35
    %88 = vst [vmem:[%s87] ss:$4 sm:$0xff] %v65
    %v89 = vld.sshfl [vmem:[#allocation1] sm:$0xff pattern:$0x73625140]
    %v90 = vld.sshfl [vmem:[#allocation1 + $0x20] sm:$0xff pattern:$0x73625140]
    %v93 = vpack.c.bf16 %v90, %v89
    %v94 = vld [vmem:[%s2] sm:$0xff]
    %v95 = vld [vmem:[%s2 + $0x8] sm:$0xff]
    %v96 = vld [vmem:[%s2 + $0x10] sm:$0xff]
    %v97 = vld [vmem:[%s2 + $0x18] sm:$0xff]
    %v98 = vld [vmem:[%s4] sm:$0x3]
    %v100 = vperm.slane %v98, 0
    %v101 = vperm.slane %v98, 1
    %v108 = vunpack.c.l.b16 %v94
    %v109 = vunpack.c.h.b16 %v94
    %v110 = vunpack.c.l.b16 %v95
    %v111 = vunpack.c.h.b16 %v95
    %v112 = vunpack.c.l.b16 %v96
    %v113 = vunpack.c.h.b16 %v96
    %v114 = vunpack.c.l.b16 %v97
    %v115 = vunpack.c.h.b16 %v97
    %v116 = vpack.c.b16 %v110, %v108
    %v117 = vpack.c.b16 %v111, %v109
    %v118 = vpack.c.b16 %v114, %v112
    %v119 = vpack.c.b16 %v115, %v113
    %vm124 = vcmask 261120
    %v126 = vsel %vm124, %v93, 0
    %128 = vmatpush.bf16.msra.mxu0 0
    %129 = vmatpush.bf16.msra.mxu0 0
    %130 = vmatpush.bf16.msra.mxu0 0
    %131 = vmatpush.bf16.msra.mxu0 0
    %132 = vmatpush.bf16.msra.mxu0 0
    %133 = vmatpush.bf16.msra.mxu0 0
    %134 = vmatpush.bf16.msra.mxu0 %v118
    %135 = vmatpush.bf16.msra.mxu0 %v116
    %136 = vmatmul.bf16.gmra.mxu0 %v126
    %v137 = vpop.f32.mrf.mxu0
    %v138 = vadd.f32 %v100, %v137
    %v139 = vpop.f32.mrf.mxu0
    %v140 = vadd.f32 %v100, %v139
    %141 = vdwg.mxu0
    %142 = vmatpush.bf16.msra.mxu0 0
    %143 = vmatpush.bf16.msra.mxu0 0
    %144 = vmatpush.bf16.msra.mxu0 0
    %145 = vmatpush.bf16.msra.mxu0 0
    %146 = vmatpush.bf16.msra.mxu0 0
    %147 = vmatpush.bf16.msra.mxu0 0
    %148 = vmatpush.bf16.msra.mxu0 %v119
    %149 = vmatpush.bf16.msra.mxu0 %v117
    %150 = vmatmul.bf16.gmra.mxu0 %v126
    %v151 = vpop.f32.mrf.mxu0
    %v152 = vadd.f32 %v101, %v151
    %v153 = vpop.f32.mrf.mxu0
    %v154 = vadd.f32 %v101, %v153
    %155 = vdwg.mxu0
    %v160 = vrot.slane %v152, 6
    %v161 = vrot.slane %v154, 6
    %vm162 = vcmask 1041408
    %v163 = vsel %vm162, %v138, %v160
    %vm164 = vcmask 1043458
    %v165 = vsel %vm164, %v138, %v160
    %v166 = vrot.slane %v165, 2
    %vm167 = vcmask 1045508
    %v168 = vsel %vm167, %v138, %v160
    %v169 = vrot.slane %v168, 4
    %vm170 = vcmask 1045504
    %v171 = vsel %vm170, %v160, %v138
    %v172 = vrot.slane %v171, 6
    %v173 = vsel %vm162, %v140, %v161
    %v174 = vsel %vm164, %v140, %v161
    %v175 = vrot.slane %v174, 2
    %v176 = vsel %vm167, %v140, %v161
    %v177 = vrot.slane %v176, 4
    %v178 = vsel %vm170, %v161, %v140
    %v179 = vrot.slane %v178, 6
    %v188 = vld [vmem:[%s3] sm:$0xff]
    %v189 = vld [vmem:[%s3 + $0x8] sm:$0xff]
    %v190 = vld [vmem:[%s3 + $0x10] sm:$0xff]
    %v191 = vld [vmem:[%s3 + $0x18] sm:$0xff]
    %v192 = vld [vmem:[%s3 + $0x20] sm:$0xff]
    %v193 = vld [vmem:[%s3 + $0x28] sm:$0xff]
    %v194 = vld [vmem:[%s3 + $0x30] sm:$0xff]
    %v195 = vld [vmem:[%s3 + $0x38] sm:$0xff]
    %v204 = vunpack.c.l.b16 %v188
    %v205 = vunpack.c.h.b16 %v188
    %v206 = vunpack.c.l.b16 %v189
    %v207 = vunpack.c.h.b16 %v189
    %v208 = vunpack.c.l.b16 %v190
    %v209 = vunpack.c.h.b16 %v190
    %v210 = vunpack.c.l.b16 %v191
    %v211 = vunpack.c.h.b16 %v191
    %v212 = vunpack.c.l.b16 %v192
    %v213 = vunpack.c.h.b16 %v192
    %v214 = vunpack.c.l.b16 %v193
    %v215 = vunpack.c.h.b16 %v193
    %v216 = vunpack.c.l.b16 %v194
    %v217 = vunpack.c.h.b16 %v194
    %v218 = vunpack.c.l.b16 %v195
    %v219 = vunpack.c.h.b16 %v195
    %v220 = vpack.c.b16 %v206, %v204
    %v221 = vpack.c.b16 %v207, %v205
    %v222 = vpack.c.b16 %v210, %v208
    %v223 = vpack.c.b16 %v211, %v209
    %v224 = vpack.c.b16 %v214, %v212
    %v225 = vpack.c.b16 %v215, %v213
    %v226 = vpack.c.b16 %v218, %v216
    %v227 = vpack.c.b16 %v219, %v217
    %vm236 = vcmask 523264
    %v238 = vsel %vm236, 0, 0
    %240 = vmatpush.bf16.msra.mxu0 0
    %241 = vmatpush.bf16.msra.mxu0 0
    %242 = vmatpush.bf16.msra.mxu0 0
    %243 = vmatpush.bf16.msra.mxu0 0
    %244 = vmatpush.bf16.msra.mxu0 %v226
    %245 = vmatpush.bf16.msra.mxu0 %v224
    %246 = vmatpush.bf16.msra.mxu0 %v222
    %247 = vmatpush.bf16.msra.mxu0 %v220
    %248 = vmatmul.bf16.gmra.mxu0 %v238
    %v249 = vpop.f32.mrf.mxu0
    %v250 = vadd.f32 0.0, %v249
    %v251 = vpop.f32.mrf.mxu0
    %252 = vdwg.mxu0
    %253 = vmatpush.bf16.msra.mxu0 0
    %254 = vmatpush.bf16.msra.mxu0 0
    %255 = vmatpush.bf16.msra.mxu0 0
    %256 = vmatpush.bf16.msra.mxu0 0
    %257 = vmatpush.bf16.msra.mxu0 %v227
    %258 = vmatpush.bf16.msra.mxu0 %v225
    %259 = vmatpush.bf16.msra.mxu0 %v223
    %260 = vmatpush.bf16.msra.mxu0 %v221
    %261 = vmatmul.bf16.gmra.mxu0 %v238
    %v262 = vpop.f32.mrf.mxu0
    %v263 = vadd.f32 0.0, %v262
    %v264 = vpop.f32.mrf.mxu0
    %265 = vdwg.mxu0
    %v268 = vrot.slane %v263, 6
    %v269 = vsel %vm162, %v250, %v268
    %v271 = vadd.f32 %v163, %v269
    %v272 = vxor.u32 %v271, 2147483648
    %v273 = vmul.f32 %v272, 1.442695
    %v274 = vpow.pop %v273
    %v275 = vadd.f32 %v274, 1.0
    %v276 = vrcp.pop %v275
    %v277 = vmul.f32 %v275, %v276
    %v278 = vsub.f32 1.0, %v277
    %v279 = vmul.f32 %v276, %v278
    %v280 = vadd.f32 %v276, %v279
    %vm281 = vweird.f32 %v275
    %vm282 = vweird.f32 %v276
    %vm283 = vmor %vm281, %vm282
    %v284 = vsel %vm283, %v276, %v280
    %v285 = vand.u32 2147483647, %v275
    %vm286 = vcmp.eq.f32.partialorder %v285, 8.507059e+37
    %v287 = vand.u32 %v275, 2147483648
    %v288 = vor.u32 1.1754944e-38, %v287
    %v289 = vsel %vm286, %v288, %v284
    %v290 = vmul.f32 1.0, %v289
    %v292 = vrot.slane %v290, 2
    %v294 = vmul.f32 %v292, 2.0
    %v295 = vsub.f32 %v294, 1.0
    %v296 = vmul.f32 %v290, 0.0
    %v297 = vmul.f32 %v290, %v295
    %299 = vrot.lane.b32.xlu0 %v297, 64
    %v300 = vpop.permute.xlu0 %299
    %v302 = vadd.f32 %v296, %v300
    %v303 = vtanh.pop %v302
    %304 = vrot.lane.b32.xlu0 %v290, 64
    %v305 = vpop.permute.xlu0 %304
    %v306 = vrot.slane %v305, 2
    %309 = vrot.lane.b32.xlu0 %v303, 64
    %v310 = vpop.permute.xlu0 %309
    %v312 = vmul.f32 %v306, %v310
    %vm313 = vcmask 517120
    %314 = vst.msk [vmem:[#allocation2] sm:$0x3] %vm313, %v312
    %s315 = scalar_lea.vmem [#allocation3], 14
    %316 = vst.msk [vmem:[%s315] sm:$0x3] %vm313, %v312
    %v317 = vpack.c.bf16 %v312, %v312
    %v319 = vsel %vm236, %v317, 0
    %321 = vmatpush.bf16.msra.mxu0 0
    %322 = vmatpush.bf16.msra.mxu0 0
    %323 = vmatpush.bf16.msra.mxu0 0
    %324 = vmatpush.bf16.msra.mxu0 0
    %325 = vmatpush.bf16.msra.mxu0 %v226
    %326 = vmatpush.bf16.msra.mxu0 %v224
    %327 = vmatpush.bf16.msra.mxu0 %v222
    %328 = vmatpush.bf16.msra.mxu0 %v220
    %329 = vmatmul.bf16.gmra.mxu0 %v319
    %v330 = vpop.f32.mrf.mxu0
    %v331 = vadd.f32 0.0, %v330
    %v332 = vpop.f32.mrf.mxu0
    %333 = vdwg.mxu0
    %334 = vmatpush.bf16.msra.mxu0 0
    %335 = vmatpush.bf16.msra.mxu0 0
    %336 = vmatpush.bf16.msra.mxu0 0
    %337 = vmatpush.bf16.msra.mxu0 0
    %338 = vmatpush.bf16.msra.mxu0 %v227
    %339 = vmatpush.bf16.msra.mxu0 %v225
    %340 = vmatpush.bf16.msra.mxu0 %v223
    %341 = vmatpush.bf16.msra.mxu0 %v221
    %342 = vmatmul.bf16.gmra.mxu0 %v319
    %v343 = vpop.f32.mrf.mxu0
    %v344 = vadd.f32 0.0, %v343
    %v345 = vpop.f32.mrf.mxu0
    %346 = vdwg.mxu0
    %v349 = vrot.slane %v344, 6
    %v350 = vsel %vm162, %v331, %v349
    %v352 = vadd.f32 %v166, %v350
    %v353 = vxor.u32 %v352, 2147483648
    %v354 = vmul.f32 %v353, 1.442695
    %v355 = vpow.pop %v354
    %v356 = vadd.f32 %v355, 1.0
    %v357 = vrcp.pop %v356
    %v358 = vmul.f32 %v356, %v357
    %v359 = vsub.f32 1.0, %v358
    %v360 = vmul.f32 %v357, %v359
    %v361 = vadd.f32 %v357, %v360
    %vm362 = vweird.f32 %v356
    %vm363 = vweird.f32 %v357
    %vm364 = vmor %vm362, %vm363
    %v365 = vsel %vm364, %v357, %v361
    %v366 = vand.u32 2147483647, %v356
    %vm367 = vcmp.eq.f32.partialorder %v366, 8.507059e+37
    %v368 = vand.u32 %v356, 2147483648
    %v369 = vor.u32 1.1754944e-38, %v368
    %v370 = vsel %vm367, %v369, %v365
    %v371 = vmul.f32 1.0, %v370
    %v373 = vrot.slane %v371, 2
    %v375 = vmul.f32 %v373, 2.0
    %v376 = vsub.f32 %v375, 1.0
    %v377 = vmul.f32 %v371, %v302
    %v378 = vmul.f32 %v371, %v376
    %380 = vrot.lane.b32.xlu0 %v378, 64
    %v381 = vpop.permute.xlu0 %380
    %v383 = vadd.f32 %v377, %v381
    %v384 = vtanh.pop %v383
    %385 = vrot.lane.b32.xlu0 %v371, 64
    %v386 = vpop.permute.xlu0 %385
    %v387 = vrot.slane %v386, 2
    %390 = vrot.lane.b32.xlu0 %v384, 64
    %v391 = vpop.permute.xlu0 %390
    %v393 = vmul.f32 %v387, %v391
    %s394 = scalar_lea.vmem [#allocation2], 2
    %395 = vst.msk [vmem:[%s394] sm:$0x3] %vm313, %v393
    %s396 = scalar_lea.vmem [#allocation3], 12
    %397 = vst.msk [vmem:[%s396] sm:$0x3] %vm313, %v393
    %v398 = vpack.c.bf16 %v393, %v393
    %v400 = vsel %vm236, %v398, 0
    %402 = vmatpush.bf16.msra.mxu0 0
    %403 = vmatpush.bf16.msra.mxu0 0
    %404 = vmatpush.bf16.msra.mxu0 0
    %405 = vmatpush.bf16.msra.mxu0 0
    %406 = vmatpush.bf16.msra.mxu0 %v226
    %407 = vmatpush.bf16.msra.mxu0 %v224
    %408 = vmatpush.bf16.msra.mxu0 %v222
    %409 = vmatpush.bf16.msra.mxu0 %v220
    %410 = vmatmul.bf16.gmra.mxu0 %v400
    %v411 = vpop.f32.mrf.mxu0
    %v412 = vadd.f32 0.0, %v411
    %v413 = vpop.f32.mrf.mxu0
    %414 = vdwg.mxu0
    %415 = vmatpush.bf16.msra.mxu0 0
    %416 = vmatpush.bf16.msra.mxu0 0
    %417 = vmatpush.bf16.msra.mxu0 0
    %418 = vmatpush.bf16.msra.mxu0 0
    %419 = vmatpush.bf16.msra.mxu0 %v227
    %420 = vmatpush.bf16.msra.mxu0 %v225
    %421 = vmatpush.bf16.msra.mxu0 %v223
    %422 = vmatpush.bf16.msra.mxu0 %v221
    %423 = vmatmul.bf16.gmra.mxu0 %v400
    %v424 = vpop.f32.mrf.mxu0
    %v425 = vadd.f32 0.0, %v424
    %v426 = vpop.f32.mrf.mxu0
    %427 = vdwg.mxu0
    %v430 = vrot.slane %v425, 6
    %v431 = vsel %vm162, %v412, %v430
    %v433 = vadd.f32 %v169, %v431
    %v434 = vxor.u32 %v433, 2147483648
    %v435 = vmul.f32 %v434, 1.442695
    %v436 = vpow.pop %v435
    %v437 = vadd.f32 %v436, 1.0
    %v438 = vrcp.pop %v437
    %v439 = vmul.f32 %v437, %v438
    %v440 = vsub.f32 1.0, %v439
    %v441 = vmul.f32 %v438, %v440
    %v442 = vadd.f32 %v438, %v441
    %vm443 = vweird.f32 %v437
    %vm444 = vweird.f32 %v438
    %vm445 = vmor %vm443, %vm444
    %v446 = vsel %vm445, %v438, %v442
    %v447 = vand.u32 2147483647, %v437
    %vm448 = vcmp.eq.f32.partialorder %v447, 8.507059e+37
    %v449 = vand.u32 %v437, 2147483648
    %v450 = vor.u32 1.1754944e-38, %v449
    %v451 = vsel %vm448, %v450, %v446
    %v452 = vmul.f32 1.0, %v451
    %v454 = vrot.slane %v452, 2
    %v456 = vmul.f32 %v454, 2.0
    %v457 = vsub.f32 %v456, 1.0
    %v458 = vmul.f32 %v452, %v383
    %v459 = vmul.f32 %v452, %v457
    %461 = vrot.lane.b32.xlu0 %v459, 64
    %v462 = vpop.permute.xlu0 %461
    %v464 = vadd.f32 %v458, %v462
    %v465 = vtanh.pop %v464
    %466 = vrot.lane.b32.xlu0 %v452, 64
    %v467 = vpop.permute.xlu0 %466
    %v468 = vrot.slane %v467, 2
    %471 = vrot.lane.b32.xlu0 %v465, 64
    %v472 = vpop.permute.xlu0 %471
    %v474 = vmul.f32 %v468, %v472
    %s475 = scalar_lea.vmem [#allocation2], 4
    %476 = vst.msk [vmem:[%s475] sm:$0x3] %vm313, %v474
    %s477 = scalar_lea.vmem [#allocation3], 10
    %478 = vst.msk [vmem:[%s477] sm:$0x3] %vm313, %v474
    %v479 = vpack.c.bf16 %v474, %v474
    %v481 = vsel %vm236, %v479, 0
    %483 = vmatpush.bf16.msra.mxu0 0
    %484 = vmatpush.bf16.msra.mxu0 0
    %485 = vmatpush.bf16.msra.mxu0 0
    %486 = vmatpush.bf16.msra.mxu0 0
    %487 = vmatpush.bf16.msra.mxu0 %v226
    %488 = vmatpush.bf16.msra.mxu0 %v224
    %489 = vmatpush.bf16.msra.mxu0 %v222
    %490 = vmatpush.bf16.msra.mxu0 %v220
    %491 = vmatmul.bf16.gmra.mxu0 %v481
    %v492 = vpop.f32.mrf.mxu0
    %v493 = vadd.f32 0.0, %v492
    %v494 = vpop.f32.mrf.mxu0
    %495 = vdwg.mxu0
    %496 = vmatpush.bf16.msra.mxu0 0
    %497 = vmatpush.bf16.msra.mxu0 0
    %498 = vmatpush.bf16.msra.mxu0 0
    %499 = vmatpush.bf16.msra.mxu0 0
    %500 = vmatpush.bf16.msra.mxu0 %v227
    %501 = vmatpush.bf16.msra.mxu0 %v225
    %502 = vmatpush.bf16.msra.mxu0 %v223
    %503 = vmatpush.bf16.msra.mxu0 %v221
    %504 = vmatmul.bf16.gmra.mxu0 %v481
    %v505 = vpop.f32.mrf.mxu0
    %v506 = vadd.f32 0.0, %v505
    %v507 = vpop.f32.mrf.mxu0
    %508 = vdwg.mxu0
    %v511 = vrot.slane %v506, 6
    %v512 = vsel %vm162, %v493, %v511
    %v514 = vadd.f32 %v172, %v512
    %v515 = vxor.u32 %v514, 2147483648
    %v516 = vmul.f32 %v515, 1.442695
    %v517 = vpow.pop %v516
    %v518 = vadd.f32 %v517, 1.0
    %v519 = vrcp.pop %v518
    %v520 = vmul.f32 %v518, %v519
    %v521 = vsub.f32 1.0, %v520
    %v522 = vmul.f32 %v519, %v521
    %v523 = vadd.f32 %v519, %v522
    %vm524 = vweird.f32 %v518
    %vm525 = vweird.f32 %v519
    %vm526 = vmor %vm524, %vm525
    %v527 = vsel %vm526, %v519, %v523
    %v528 = vand.u32 2147483647, %v518
    %vm529 = vcmp.eq.f32.partialorder %v528, 8.507059e+37
    %v530 = vand.u32 %v518, 2147483648
    %v531 = vor.u32 1.1754944e-38, %v530
    %v532 = vsel %vm529, %v531, %v527
    %v533 = vmul.f32 1.0, %v532
    %v535 = vrot.slane %v533, 2
    %v537 = vmul.f32 %v535, 2.0
    %v538 = vsub.f32 %v537, 1.0
    %v539 = vmul.f32 %v533, %v464
    %v540 = vmul.f32 %v533, %v538
    %542 = vrot.lane.b32.xlu0 %v540, 64
    %v543 = vpop.permute.xlu0 %542
    %v545 = vadd.f32 %v539, %v543
    %v546 = vtanh.pop %v545
    %547 = vrot.lane.b32.xlu0 %v533, 64
    %v548 = vpop.permute.xlu0 %547
    %v549 = vrot.slane %v548, 2
    %552 = vrot.lane.b32.xlu0 %v546, 64
    %v553 = vpop.permute.xlu0 %552
    %v555 = vmul.f32 %v549, %v553
    %s556 = scalar_lea.vmem [#allocation2], 6
    %557 = vst.msk [vmem:[%s556] sm:$0x3] %vm313, %v555
    %s558 = scalar_lea.vmem [#allocation3], 8
    %559 = vst.msk [vmem:[%s558] sm:$0x3] %vm313, %v555
    %v560 = vpack.c.bf16 %v555, %v555
    %v562 = vsel %vm236, %v560, 0
    %564 = vmatpush.bf16.msra.mxu0 0
    %565 = vmatpush.bf16.msra.mxu0 0
    %566 = vmatpush.bf16.msra.mxu0 0
    %567 = vmatpush.bf16.msra.mxu0 0
    %568 = vmatpush.bf16.msra.mxu0 %v226
    %569 = vmatpush.bf16.msra.mxu0 %v224
    %570 = vmatpush.bf16.msra.mxu0 %v222
    %571 = vmatpush.bf16.msra.mxu0 %v220
    %572 = vmatmul.bf16.gmra.mxu0 %v562
    %v573 = vpop.f32.mrf.mxu0
    %v574 = vadd.f32 0.0, %v573
    %v575 = vpop.f32.mrf.mxu0
    %576 = vdwg.mxu0
    %577 = vmatpush.bf16.msra.mxu0 0
    %578 = vmatpush.bf16.msra.mxu0 0
    %579 = vmatpush.bf16.msra.mxu0 0
    %580 = vmatpush.bf16.msra.mxu0 0
    %581 = vmatpush.bf16.msra.mxu0 %v227
    %582 = vmatpush.bf16.msra.mxu0 %v225
    %583 = vmatpush.bf16.msra.mxu0 %v223
    %584 = vmatpush.bf16.msra.mxu0 %v221
    %585 = vmatmul.bf16.gmra.mxu0 %v562
    %v586 = vpop.f32.mrf.mxu0
    %v587 = vadd.f32 0.0, %v586
    %v588 = vpop.f32.mrf.mxu0
    %589 = vdwg.mxu0
    %v592 = vrot.slane %v587, 6
    %v593 = vsel %vm162, %v574, %v592
    %v595 = vadd.f32 %v173, %v593
    %v596 = vxor.u32 %v595, 2147483648
    %v597 = vmul.f32 %v596, 1.442695
    %v598 = vpow.pop %v597
    %v599 = vadd.f32 %v598, 1.0
    %v600 = vrcp.pop %v599
    %v601 = vmul.f32 %v599, %v600
    %v602 = vsub.f32 1.0, %v601
    %v603 = vmul.f32 %v600, %v602
    %v604 = vadd.f32 %v600, %v603
    %vm605 = vweird.f32 %v599
    %vm606 = vweird.f32 %v600
    %vm607 = vmor %vm605, %vm606
    %v608 = vsel %vm607, %v600, %v604
    %v609 = vand.u32 2147483647, %v599
    %vm610 = vcmp.eq.f32.partialorder %v609, 8.507059e+37
    %v611 = vand.u32 %v599, 2147483648
    %v612 = vor.u32 1.1754944e-38, %v611
    %v613 = vsel %vm610, %v612, %v608
    %v614 = vmul.f32 1.0, %v613
    %v616 = vrot.slane %v614, 2
    %v618 = vmul.f32 %v616, 2.0
    %v619 = vsub.f32 %v618, 1.0
    %v620 = vmul.f32 %v614, %v545
    %v621 = vmul.f32 %v614, %v619
    %623 = vrot.lane.b32.xlu0 %v621, 64
    %v624 = vpop.permute.xlu0 %623
    %v626 = vadd.f32 %v620, %v624
    %v627 = vtanh.pop %v626
    %628 = vrot.lane.b32.xlu0 %v614, 64
    %v629 = vpop.permute.xlu0 %628
    %v630 = vrot.slane %v629, 2
    %633 = vrot.lane.b32.xlu0 %v627, 64
    %v634 = vpop.permute.xlu0 %633
    %v636 = vmul.f32 %v630, %v634
    %s637 = scalar_lea.vmem [#allocation2], 8
    %638 = vst.msk [vmem:[%s637] sm:$0x3] %vm313, %v636
    %s639 = scalar_lea.vmem [#allocation3], 6
    %640 = vst.msk [vmem:[%s639] sm:$0x3] %vm313, %v636
    %v641 = vpack.c.bf16 %v636, %v636
    %v643 = vsel %vm236, %v641, 0
    %645 = vmatpush.bf16.msra.mxu0 0
    %646 = vmatpush.bf16.msra.mxu0 0
    %647 = vmatpush.bf16.msra.mxu0 0
    %648 = vmatpush.bf16.msra.mxu0 0
    %649 = vmatpush.bf16.msra.mxu0 %v226
    %650 = vmatpush.bf16.msra.mxu0 %v224
    %651 = vmatpush.bf16.msra.mxu0 %v222
    %652 = vmatpush.bf16.msra.mxu0 %v220
    %653 = vmatmul.bf16.gmra.mxu0 %v643
    %v654 = vpop.f32.mrf.mxu0
    %v655 = vadd.f32 0.0, %v654
    %v656 = vpop.f32.mrf.mxu0
    %657 = vdwg.mxu0
    %658 = vmatpush.bf16.msra.mxu0 0
    %659 = vmatpush.bf16.msra.mxu0 0
    %660 = vmatpush.bf16.msra.mxu0 0
    %661 = vmatpush.bf16.msra.mxu0 0
    %662 = vmatpush.bf16.msra.mxu0 %v227
    %663 = vmatpush.bf16.msra.mxu0 %v225
    %664 = vmatpush.bf16.msra.mxu0 %v223
    %665 = vmatpush.bf16.msra.mxu0 %v221
    %666 = vmatmul.bf16.gmra.mxu0 %v643
    %v667 = vpop.f32.mrf.mxu0
    %v668 = vadd.f32 0.0, %v667
    %v669 = vpop.f32.mrf.mxu0
    %670 = vdwg.mxu0
    %v673 = vrot.slane %v668, 6
    %v674 = vsel %vm162, %v655, %v673
    %v676 = vadd.f32 %v175, %v674
    %v677 = vxor.u32 %v676, 2147483648
    %v678 = vmul.f32 %v677, 1.442695
    %v679 = vpow.pop %v678
    %v680 = vadd.f32 %v679, 1.0
    %v681 = vrcp.pop %v680
    %v682 = vmul.f32 %v680, %v681
    %v683 = vsub.f32 1.0, %v682
    %v684 = vmul.f32 %v681, %v683
    %v685 = vadd.f32 %v681, %v684
    %vm686 = vweird.f32 %v680
    %vm687 = vweird.f32 %v681
    %vm688 = vmor %vm686, %vm687
    %v689 = vsel %vm688, %v681, %v685
    %v690 = vand.u32 2147483647, %v680
    %vm691 = vcmp.eq.f32.partialorder %v690, 8.507059e+37
    %v692 = vand.u32 %v680, 2147483648
    %v693 = vor.u32 1.1754944e-38, %v692
    %v694 = vsel %vm691, %v693, %v689
    %v695 = vmul.f32 1.0, %v694
    %v697 = vrot.slane %v695, 2
    %v699 = vmul.f32 %v697, 2.0
    %v700 = vsub.f32 %v699, 1.0
    %v701 = vmul.f32 %v695, %v626
    %v702 = vmul.f32 %v695, %v700
    %704 = vrot.lane.b32.xlu0 %v702, 64
    %v705 = vpop.permute.xlu0 %704
    %v707 = vadd.f32 %v701, %v705
    %v708 = vtanh.pop %v707
    %709 = vrot.lane.b32.xlu0 %v695, 64
    %v710 = vpop.permute.xlu0 %709
    %v711 = vrot.slane %v710, 2
    %714 = vrot.lane.b32.xlu0 %v708, 64
    %v715 = vpop.permute.xlu0 %714
    %v717 = vmul.f32 %v711, %v715
    %s718 = scalar_lea.vmem [#allocation2], 10
    %719 = vst.msk [vmem:[%s718] sm:$0x3] %vm313, %v717
    %s720 = scalar_lea.vmem [#allocation3], 4
    %721 = vst.msk [vmem:[%s720] sm:$0x3] %vm313, %v717
    %v722 = vpack.c.bf16 %v717, %v717
    %v724 = vsel %vm236, %v722, 0
    %726 = vmatpush.bf16.msra.mxu0 0
    %727 = vmatpush.bf16.msra.mxu0 0
    %728 = vmatpush.bf16.msra.mxu0 0
    %729 = vmatpush.bf16.msra.mxu0 0
    %730 = vmatpush.bf16.msra.mxu0 %v226
    %731 = vmatpush.bf16.msra.mxu0 %v224
    %732 = vmatpush.bf16.msra.mxu0 %v222
    %733 = vmatpush.bf16.msra.mxu0 %v220
    %734 = vmatmul.bf16.gmra.mxu0 %v724
    %v735 = vpop.f32.mrf.mxu0
    %v736 = vadd.f32 0.0, %v735
    %v737 = vpop.f32.mrf.mxu0
    %738 = vdwg.mxu0
    %739 = vmatpush.bf16.msra.mxu0 0
    %740 = vmatpush.bf16.msra.mxu0 0
    %741 = vmatpush.bf16.msra.mxu0 0
    %742 = vmatpush.bf16.msra.mxu0 0
    %743 = vmatpush.bf16.msra.mxu0 %v227
    %744 = vmatpush.bf16.msra.mxu0 %v225
    %745 = vmatpush.bf16.msra.mxu0 %v223
    %746 = vmatpush.bf16.msra.mxu0 %v221
    %747 = vmatmul.bf16.gmra.mxu0 %v724
    %v748 = vpop.f32.mrf.mxu0
    %v749 = vadd.f32 0.0, %v748
    %v750 = vpop.f32.mrf.mxu0
    %751 = vdwg.mxu0
    %v754 = vrot.slane %v749, 6
    %v755 = vsel %vm162, %v736, %v754
    %v757 = vadd.f32 %v177, %v755
    %v758 = vxor.u32 %v757, 2147483648
    %v759 = vmul.f32 %v758, 1.442695
    %v760 = vpow.pop %v759
    %v761 = vadd.f32 %v760, 1.0
    %v762 = vrcp.pop %v761
    %v763 = vmul.f32 %v761, %v762
    %v764 = vsub.f32 1.0, %v763
    %v765 = vmul.f32 %v762, %v764
    %v766 = vadd.f32 %v762, %v765
    %vm767 = vweird.f32 %v761
    %vm768 = vweird.f32 %v762
    %vm769 = vmor %vm767, %vm768
    %v770 = vsel %vm769, %v762, %v766
    %v771 = vand.u32 2147483647, %v761
    %vm772 = vcmp.eq.f32.partialorder %v771, 8.507059e+37
    %v773 = vand.u32 %v761, 2147483648
    %v774 = vor.u32 1.1754944e-38, %v773
    %v775 = vsel %vm772, %v774, %v770
    %v776 = vmul.f32 1.0, %v775
    %v778 = vrot.slane %v776, 2
    %v780 = vmul.f32 %v778, 2.0
    %v781 = vsub.f32 %v780, 1.0
    %v782 = vmul.f32 %v776, %v707
    %v783 = vmul.f32 %v776, %v781
    %785 = vrot.lane.b32.xlu0 %v783, 64
    %v786 = vpop.permute.xlu0 %785
    %v788 = vadd.f32 %v782, %v786
    %v789 = vtanh.pop %v788
    %790 = vrot.lane.b32.xlu0 %v776, 64
    %v791 = vpop.permute.xlu0 %790
    %v792 = vrot.slane %v791, 2
    %795 = vrot.lane.b32.xlu0 %v789, 64
    %v796 = vpop.permute.xlu0 %795
    %v798 = vmul.f32 %v792, %v796
    %s799 = scalar_lea.vmem [#allocation2], 12
    %800 = vst.msk [vmem:[%s799] sm:$0x3] %vm313, %v798
    %s801 = scalar_lea.vmem [#allocation3], 2
    %802 = vst.msk [vmem:[%s801] sm:$0x3] %vm313, %v798
    %v803 = vpack.c.bf16 %v798, %v798
    %v805 = vsel %vm236, %v803, 0
    %807 = vmatpush.bf16.msra.mxu0 0
    %808 = vmatpush.bf16.msra.mxu0 0
    %809 = vmatpush.bf16.msra.mxu0 0
    %810 = vmatpush.bf16.msra.mxu0 0
    %811 = vmatpush.bf16.msra.mxu0 %v226
    %812 = vmatpush.bf16.msra.mxu0 %v224
    %813 = vmatpush.bf16.msra.mxu0 %v222
    %814 = vmatpush.bf16.msra.mxu0 %v220
    %815 = vmatmul.bf16.gmra.mxu0 %v805
    %v816 = vpop.f32.mrf.mxu0
    %v817 = vadd.f32 0.0, %v816
    %v818 = vpop.f32.mrf.mxu0
    %819 = vdwg.mxu0
    %820 = vmatpush.bf16.msra.mxu0 0
    %821 = vmatpush.bf16.msra.mxu0 0
    %822 = vmatpush.bf16.msra.mxu0 0
    %823 = vmatpush.bf16.msra.mxu0 0
    %824 = vmatpush.bf16.msra.mxu0 %v227
    %825 = vmatpush.bf16.msra.mxu0 %v225
    %826 = vmatpush.bf16.msra.mxu0 %v223
    %827 = vmatpush.bf16.msra.mxu0 %v221
    %828 = vmatmul.bf16.gmra.mxu0 %v805
    %v829 = vpop.f32.mrf.mxu0
    %v830 = vadd.f32 0.0, %v829
    %v831 = vpop.f32.mrf.mxu0
    %832 = vdwg.mxu0
    %v835 = vrot.slane %v830, 6
    %v836 = vsel %vm162, %v817, %v835
    %v838 = vadd.f32 %v179, %v836
    %v839 = vxor.u32 %v838, 2147483648
    %v840 = vmul.f32 %v839, 1.442695
    %v841 = vpow.pop %v840
    %v842 = vadd.f32 %v841, 1.0
    %v843 = vrcp.pop %v842
    %v844 = vmul.f32 %v842, %v843
    %v845 = vsub.f32 1.0, %v844
    %v846 = vmul.f32 %v843, %v845
    %v847 = vadd.f32 %v843, %v846
    %vm848 = vweird.f32 %v842
    %vm849 = vweird.f32 %v843
    %vm850 = vmor %vm848, %vm849
    %v851 = vsel %vm850, %v843, %v847
    %v852 = vand.u32 2147483647, %v842
    %vm853 = vcmp.eq.f32.partialorder %v852, 8.507059e+37
    %v854 = vand.u32 %v842, 2147483648
    %v855 = vor.u32 1.1754944e-38, %v854
    %v856 = vsel %vm853, %v855, %v851
    %v857 = vmul.f32 1.0, %v856
    %v859 = vrot.slane %v857, 2
    %v861 = vmul.f32 %v859, 2.0
    %v862 = vsub.f32 %v861, 1.0
    %v863 = vmul.f32 %v857, %v788
    %v864 = vmul.f32 %v857, %v862
    %866 = vrot.lane.b32.xlu0 %v864, 64
    %v867 = vpop.permute.xlu0 %866
    %v869 = vadd.f32 %v863, %v867
    %v870 = vtanh.pop %v869
    %871 = vrot.lane.b32.xlu0 %v857, 64
    %v872 = vpop.permute.xlu0 %871
    %v873 = vrot.slane %v872, 2
    %876 = vrot.lane.b32.xlu0 %v870, 64
    %v877 = vpop.permute.xlu0 %876
    %v879 = vmul.f32 %v873, %v877
    %s880 = scalar_lea.vmem [#allocation2], 14
    %881 = vst.msk [vmem:[%s880] sm:$0x3] %vm313, %v879
    %882 = vst.msk [vmem:[#allocation3] sm:$0x3] %vm313, %v879
    %v883 = vlaneseq
    %v884 = vand.u32 %v883, 127
    %vm885 = vcmp.lt.s32.totalorder %v884, 32
    %v886 = vld [vmem:[#allocation2] sm:$0x3]
    %v887 = vld [vmem:[#allocation2 + $0x2] sm:$0x3]
    %v888 = vld [vmem:[#allocation2 + $0x4] sm:$0x3]
    %v889 = vld [vmem:[#allocation2 + $0x6] sm:$0x3]
    %v890 = vld [vmem:[#allocation2 + $0x8] sm:$0x3]
    %v891 = vld [vmem:[#allocation2 + $0xa] sm:$0x3]
    %v892 = vld [vmem:[#allocation2 + $0xc] sm:$0x3]
    %v893 = vld [vmem:[#allocation2 + $0xe] sm:$0x3]
    %v894 = vld [vmem:[#allocation3] sm:$0x3]
    %v895 = vld [vmem:[#allocation3 + $0x2] sm:$0x3]
    %v896 = vld [vmem:[#allocation3 + $0x4] sm:$0x3]
    %v897 = vld [vmem:[#allocation3 + $0x6] sm:$0x3]
    %v898 = vld [vmem:[#allocation3 + $0x8] sm:$0x3]
    %v899 = vld [vmem:[#allocation3 + $0xa] sm:$0x3]
    %v900 = vld [vmem:[#allocation3 + $0xc] sm:$0x3]
    %v901 = vld [vmem:[#allocation3 + $0xe] sm:$0x3]
    %v902 = vsel %vm885, 1, 0
    %vm903 = vcmp.eq.s32.totalorder %v902, 1
    %v904 = vsel %vm903, %v886, %v894
    %v905 = vsel %vm903, %v887, %v895
    %v906 = vsel %vm903, %v888, %v896
    %v907 = vsel %vm903, %v889, %v897
    %v908 = vsel %vm903, %v890, %v898
    %v909 = vsel %vm903, %v891, %v899
    %v910 = vsel %vm903, %v892, %v900
    %v911 = vsel %vm903, %v893, %v901
    %v912 = vld [vmem:[%s5] sm:$0x1]
    %v913 = vld [vmem:[%s6] sm:$0x1]
    %v914 = vsel %vm313, %v904, 0.0
    %915 = vadd.xlane.f32.xlu0 %v914
    %v916 = vpop.xlane.xlu0 %915
    %v917 = vsel %vm313, %v905, 0.0
    %918 = vadd.xlane.f32.xlu0 %v917
    %v919 = vpop.xlane.xlu0 %918
    %v920 = vsel %vm313, %v906, 0.0
    %921 = vadd.xlane.f32.xlu0 %v920
    %v922 = vpop.xlane.xlu0 %921
    %v923 = vsel %vm313, %v907, 0.0
    %924 = vadd.xlane.f32.xlu0 %v923
    %v925 = vpop.xlane.xlu0 %924
    %v926 = vsel %vm313, %v908, 0.0
    %927 = vadd.xlane.f32.xlu0 %v926
    %v928 = vpop.xlane.xlu0 %927
    %v929 = vsel %vm313, %v909, 0.0
    %930 = vadd.xlane.f32.xlu0 %v929
    %v931 = vpop.xlane.xlu0 %930
    %v932 = vsel %vm313, %v910, 0.0
    %933 = vadd.xlane.f32.xlu0 %v932
    %v934 = vpop.xlane.xlu0 %933
    %v935 = vsel %vm313, %v911, 0.0
    %936 = vadd.xlane.f32.xlu0 %v935
    %v937 = vpop.xlane.xlu0 %936
    %v938 = vrcp.pop 64.0
    %v939 = vmul.f32 64.0, %v938
    %v940 = vsub.f32 1.0, %v939
    %v941 = vmul.f32 %v938, %v940
    %v942 = vadd.f32 %v938, %v941
    %vm943 = vweird.f32 %v938
    %v944 = vsel %vm943, %v938, %v942
    %v945 = vmul.f32 %v916, %v944
    %v946 = vmul.f32 %v919, %v944
    %v947 = vmul.f32 %v922, %v944
    %v948 = vmul.f32 %v925, %v944
    %v949 = vmul.f32 %v928, %v944
    %v950 = vmul.f32 %v931, %v944
    %v951 = vmul.f32 %v934, %v944
    %v952 = vmul.f32 %v937, %v944
    %v953 = vsub.f32 %v904, %v945
    %v954 = vsub.f32 %v905, %v946
    %v955 = vsub.f32 %v906, %v947
    %v956 = vsub.f32 %v907, %v948
    %v957 = vsub.f32 %v908, %v949
    %v958 = vsub.f32 %v909, %v950
    %v959 = vsub.f32 %v910, %v951
    %v960 = vsub.f32 %v911, %v952
    %v961 = vmul.f32 %v953, %v953
    %v962 = vmul.f32 %v954, %v954
    %v963 = vmul.f32 %v955, %v955
    %v964 = vmul.f32 %v956, %v956
    %v965 = vmul.f32 %v957, %v957
    %v966 = vmul.f32 %v958, %v958
    %v967 = vmul.f32 %v959, %v959
    %v968 = vmul.f32 %v960, %v960
    %v969 = vsel %vm313, %v961, 0.0
    %970 = vadd.xlane.f32.xlu0 %v969
    %v971 = vpop.xlane.xlu0 %970
    %v972 = vsel %vm313, %v962, 0.0
    %973 = vadd.xlane.f32.xlu0 %v972
    %v974 = vpop.xlane.xlu0 %973
    %v975 = vsel %vm313, %v963, 0.0
    %976 = vadd.xlane.f32.xlu0 %v975
    %v977 = vpop.xlane.xlu0 %976
    %v978 = vsel %vm313, %v964, 0.0
    %979 = vadd.xlane.f32.xlu0 %v978
    %v980 = vpop.xlane.xlu0 %979
    %v981 = vsel %vm313, %v965, 0.0
    %982 = vadd.xlane.f32.xlu0 %v981
    %v983 = vpop.xlane.xlu0 %982
    %v984 = vsel %vm313, %v966, 0.0
    %985 = vadd.xlane.f32.xlu0 %v984
    %v986 = vpop.xlane.xlu0 %985
    %v987 = vsel %vm313, %v967, 0.0
    %988 = vadd.xlane.f32.xlu0 %v987
    %v989 = vpop.xlane.xlu0 %988
    %v990 = vsel %vm313, %v968, 0.0
    %991 = vadd.xlane.f32.xlu0 %v990
    %v992 = vpop.xlane.xlu0 %991
    %v993 = vmul.f32 %v971, %v944
    %v994 = vmul.f32 %v974, %v944
    %v995 = vmul.f32 %v977, %v944
    %v996 = vmul.f32 %v980, %v944
    %v997 = vmul.f32 %v983, %v944
    %v998 = vmul.f32 %v986, %v944
    %v999 = vmul.f32 %v989, %v944
    %v1000 = vmul.f32 %v992, %v944
    %v1001 = vadd.f32 %v993, 1e-05
    %v1002 = vadd.f32 %v994, 1e-05
    %v1003 = vadd.f32 %v995, 1e-05
    %v1004 = vadd.f32 %v996, 1e-05
    %v1005 = vadd.f32 %v997, 1e-05
    %v1006 = vadd.f32 %v998, 1e-05
    %v1007 = vadd.f32 %v999, 1e-05
    %v1008 = vadd.f32 %v1000, 1e-05
    %v1009 = vrsqrt.pop %v1001
    %v1010 = vmul.f32 %v1009, %v1001
    %v1011 = vmul.f32 %v1010, %v1009
    %v1012 = vmul.f32 0.5, %v1011
    %v1013 = vsub.f32 1.5, %v1012
    %v1014 = vmul.f32 %v1009, %v1013
    %vm1015 = vweird.f32 %v1001
    %vm1016 = vweird.f32 %v1009
    %vm1017 = vmor %vm1015, %vm1016
    %v1018 = vsel %vm1017, %v1009, %v1014
    %v1019 = vrsqrt.pop %v1002
    %v1020 = vmul.f32 %v1019, %v1002
    %v1021 = vmul.f32 %v1020, %v1019
    %v1022 = vmul.f32 0.5, %v1021
    %v1023 = vsub.f32 1.5, %v1022
    %v1024 = vmul.f32 %v1019, %v1023
    %vm1025 = vweird.f32 %v1002
    %vm1026 = vweird.f32 %v1019
    %vm1027 = vmor %vm1025, %vm1026
    %v1028 = vsel %vm1027, %v1019, %v1024
    %v1029 = vrsqrt.pop %v1003
    %v1030 = vmul.f32 %v1029, %v1003
    %v1031 = vmul.f32 %v1030, %v1029
    %v1032 = vmul.f32 0.5, %v1031
    %v1033 = vsub.f32 1.5, %v1032
    %v1034 = vmul.f32 %v1029, %v1033
    %vm1035 = vweird.f32 %v1003
    %vm1036 = vweird.f32 %v1029
    %vm1037 = vmor %vm1035, %vm1036
    %v1038 = vsel %vm1037, %v1029, %v1034
    %v1039 = vrsqrt.pop %v1004
    %v1040 = vmul.f32 %v1039, %v1004
    %v1041 = vmul.f32 %v1040, %v1039
    %v1042 = vmul.f32 0.5, %v1041
    %v1043 = vsub.f32 1.5, %v1042
    %v1044 = vmul.f32 %v1039, %v1043
    %vm1045 = vweird.f32 %v1004
    %vm1046 = vweird.f32 %v1039
    %vm1047 = vmor %vm1045, %vm1046
    %v1048 = vsel %vm1047, %v1039, %v1044
    %v1049 = vrsqrt.pop %v1005
    %v1050 = vmul.f32 %v1049, %v1005
    %v1051 = vmul.f32 %v1050, %v1049
    %v1052 = vmul.f32 0.5, %v1051
    %v1053 = vsub.f32 1.5, %v1052
    %v1054 = vmul.f32 %v1049, %v1053
    %vm1055 = vweird.f32 %v1005
    %vm1056 = vweird.f32 %v1049
    %vm1057 = vmor %vm1055, %vm1056
    %v1058 = vsel %vm1057, %v1049, %v1054
    %v1059 = vrsqrt.pop %v1006
    %v1060 = vmul.f32 %v1059, %v1006
    %v1061 = vmul.f32 %v1060, %v1059
    %v1062 = vmul.f32 0.5, %v1061
    %v1063 = vsub.f32 1.5, %v1062
    %v1064 = vmul.f32 %v1059, %v1063
    %vm1065 = vweird.f32 %v1006
    %vm1066 = vweird.f32 %v1059
    %vm1067 = vmor %vm1065, %vm1066
    %v1068 = vsel %vm1067, %v1059, %v1064
    %v1069 = vrsqrt.pop %v1007
    %v1070 = vmul.f32 %v1069, %v1007
    %v1071 = vmul.f32 %v1070, %v1069
    %v1072 = vmul.f32 0.5, %v1071
    %v1073 = vsub.f32 1.5, %v1072
    %v1074 = vmul.f32 %v1069, %v1073
    %vm1075 = vweird.f32 %v1007
    %vm1076 = vweird.f32 %v1069
    %vm1077 = vmor %vm1075, %vm1076
    %v1078 = vsel %vm1077, %v1069, %v1074
    %v1079 = vrsqrt.pop %v1008
    %v1080 = vmul.f32 %v1079, %v1008
    %v1081 = vmul.f32 %v1080, %v1079
    %v1082 = vmul.f32 0.5, %v1081
    %v1083 = vsub.f32 1.5, %v1082
    %v1084 = vmul.f32 %v1079, %v1083
    %vm1085 = vweird.f32 %v1008
    %vm1086 = vweird.f32 %v1079
    %vm1087 = vmor %vm1085, %vm1086
    %v1088 = vsel %vm1087, %v1079, %v1084
    %v1089 = vmul.f32 %v953, %v1018
    %v1090 = vmul.f32 %v954, %v1028
    %v1091 = vmul.f32 %v955, %v1038
    %v1092 = vmul.f32 %v956, %v1048
    %v1093 = vmul.f32 %v957, %v1058
    %v1094 = vmul.f32 %v958, %v1068
    %v1095 = vmul.f32 %v959, %v1078
    %v1096 = vmul.f32 %v960, %v1088
    %v1098 = vperm.slane %v912, 0
    %v1100 = vmul.f32 %v1089, %v1098
    %v1101 = vmul.f32 %v1090, %v1098
    %v1102 = vmul.f32 %v1091, %v1098
    %v1103 = vmul.f32 %v1092, %v1098
    %v1104 = vmul.f32 %v1093, %v1098
    %v1105 = vmul.f32 %v1094, %v1098
    %v1106 = vmul.f32 %v1095, %v1098
    %v1107 = vmul.f32 %v1096, %v1098
    %v1109 = vperm.slane %v913, 0
    %v1111 = vadd.f32 %v1100, %v1109
    %v1112 = vadd.f32 %v1101, %v1109
    %v1113 = vadd.f32 %v1102, %v1109
    %v1114 = vadd.f32 %v1103, %v1109
    %v1115 = vadd.f32 %v1104, %v1109
    %v1116 = vadd.f32 %v1105, %v1109
    %v1117 = vadd.f32 %v1106, %v1109
    %v1118 = vadd.f32 %v1107, %v1109
    %1127 = vst [vmem:[#allocation1] ss:$4 sm:$0xff] %v1111
    %s1128 = scalar_lea.vmem [#allocation1], 1
    %1129 = vst [vmem:[%s1128] ss:$4 sm:$0xff] %v1112
    %s1130 = scalar_lea.vmem [#allocation1], 2
    %1131 = vst [vmem:[%s1130] ss:$4 sm:$0xff] %v1113
    %s1132 = scalar_lea.vmem [#allocation1], 3
    %1133 = vst [vmem:[%s1132] ss:$4 sm:$0xff] %v1114
    %s1134 = scalar_lea.vmem [#allocation1], 32
    %1135 = vst [vmem:[%s1134] ss:$4 sm:$0xff] %v1115
    %s1136 = scalar_lea.vmem [#allocation1], 33
    %1137 = vst [vmem:[%s1136] ss:$4 sm:$0xff] %v1116
    %s1138 = scalar_lea.vmem [#allocation1], 34
    %1139 = vst [vmem:[%s1138] ss:$4 sm:$0xff] %v1117
    %s1140 = scalar_lea.vmem [#allocation1], 35
    %1141 = vst [vmem:[%s1140] ss:$4 sm:$0xff] %v1118
    %v1142 = vld.sshfl [vmem:[#allocation1] sm:$0xff pattern:$0x73625140]
    %v1143 = vld.sshfl [vmem:[#allocation1 + $0x20] sm:$0xff pattern:$0x73625140]
    %v1146 = vpack.c.bf16 %v1143, %v1142
    %v1147 = vld [vmem:[%s7] sm:$0xff]
    %v1148 = vld [vmem:[%s7 + $0x8] sm:$0xff]
    %v1149 = vld [vmem:[%s7 + $0x10] sm:$0xff]
    %v1150 = vld [vmem:[%s7 + $0x18] sm:$0xff]
    %v1151 = vld [vmem:[%s7 + $0x20] sm:$0xff]
    %v1152 = vld [vmem:[%s7 + $0x28] sm:$0xff]
    %v1153 = vld [vmem:[%s7 + $0x30] sm:$0xff]
    %v1154 = vld [vmem:[%s7 + $0x38] sm:$0xff]
    %v1155 = vld [vmem:[%s9] sm:$0x3]
    %v1157 = vperm.slane %v1155, 0
    %v1158 = vperm.slane %v1155, 1
    %v1169 = vunpack.c.l.b16 %v1147
    %v1170 = vunpack.c.h.b16 %v1147
    %v1171 = vunpack.c.l.b16 %v1148
    %v1172 = vunpack.c.h.b16 %v1148
    %v1173 = vunpack.c.l.b16 %v1149
    %v1174 = vunpack.c.h.b16 %v1149
    %v1175 = vunpack.c.l.b16 %v1150
    %v1176 = vunpack.c.h.b16 %v1150
    %v1177 = vunpack.c.l.b16 %v1151
    %v1178 = vunpack.c.h.b16 %v1151
    %v1179 = vunpack.c.l.b16 %v1152
    %v1180 = vunpack.c.h.b16 %v1152
    %v1181 = vunpack.c.l.b16 %v1153
    %v1182 = vunpack.c.h.b16 %v1153
    %v1183 = vunpack.c.l.b16 %v1154
    %v1184 = vunpack.c.h.b16 %v1154
    %v1185 = vpack.c.b16 %v1171, %v1169
    %v1186 = vpack.c.b16 %v1172, %v1170
    %v1187 = vpack.c.b16 %v1175, %v1173
    %v1188 = vpack.c.b16 %v1176, %v1174
    %v1189 = vpack.c.b16 %v1179, %v1177
    %v1190 = vpack.c.b16 %v1180, %v1178
    %v1191 = vpack.c.b16 %v1183, %v1181
    %v1192 = vpack.c.b16 %v1184, %v1182
    %v1202 = vsel %vm236, %v1146, 0
    %1204 = vmatpush.bf16.msra.mxu0 0
    %1205 = vmatpush.bf16.msra.mxu0 0
    %1206 = vmatpush.bf16.msra.mxu0 0
    %1207 = vmatpush.bf16.msra.mxu0 0
    %1208 = vmatpush.bf16.msra.mxu0 %v1191
    %1209 = vmatpush.bf16.msra.mxu0 %v1189
    %1210 = vmatpush.bf16.msra.mxu0 %v1187
    %1211 = vmatpush.bf16.msra.mxu0 %v1185
    %1212 = vmatmul.bf16.gmra.mxu0 %v1202
    %v1213 = vpop.f32.mrf.mxu0
    %v1214 = vadd.f32 %v1157, %v1213
    %v1215 = vpop.f32.mrf.mxu0
    %v1216 = vadd.f32 %v1157, %v1215
    %1217 = vdwg.mxu0
    %1218 = vmatpush.bf16.msra.mxu0 0
    %1219 = vmatpush.bf16.msra.mxu0 0
    %1220 = vmatpush.bf16.msra.mxu0 0
    %1221 = vmatpush.bf16.msra.mxu0 0
    %1222 = vmatpush.bf16.msra.mxu0 %v1192
    %1223 = vmatpush.bf16.msra.mxu0 %v1190
    %1224 = vmatpush.bf16.msra.mxu0 %v1188
    %1225 = vmatpush.bf16.msra.mxu0 %v1186
    %1226 = vmatmul.bf16.gmra.mxu0 %v1202
    %v1227 = vpop.f32.mrf.mxu0
    %v1228 = vadd.f32 %v1158, %v1227
    %v1229 = vpop.f32.mrf.mxu0
    %v1230 = vadd.f32 %v1158, %v1229
    %1231 = vdwg.mxu0
    %v1236 = vrot.slane %v1228, 6
    %v1237 = vrot.slane %v1230, 6
    %v1238 = vsel %vm162, %v1214, %v1236
    %v1239 = vsel %vm164, %v1214, %v1236
    %v1240 = vrot.slane %v1239, 2
    %v1241 = vsel %vm167, %v1214, %v1236
    %v1242 = vrot.slane %v1241, 4
    %v1243 = vsel %vm170, %v1236, %v1214
    %v1244 = vrot.slane %v1243, 6
    %v1245 = vsel %vm162, %v1216, %v1237
    %v1246 = vsel %vm164, %v1216, %v1237
    %v1247 = vrot.slane %v1246, 2
    %v1248 = vsel %vm167, %v1216, %v1237
    %v1249 = vrot.slane %v1248, 4
    %v1250 = vsel %vm170, %v1237, %v1216
    %v1251 = vrot.slane %v1250, 6
    %v1260 = vld [vmem:[%s8] sm:$0xff]
    %v1261 = vld [vmem:[%s8 + $0x8] sm:$0xff]
    %v1262 = vld [vmem:[%s8 + $0x10] sm:$0xff]
    %v1263 = vld [vmem:[%s8 + $0x18] sm:$0xff]
    %v1264 = vld [vmem:[%s8 + $0x20] sm:$0xff]
    %v1265 = vld [vmem:[%s8 + $0x28] sm:$0xff]
    %v1266 = vld [vmem:[%s8 + $0x30] sm:$0xff]
    %v1267 = vld [vmem:[%s8 + $0x38] sm:$0xff]
    %v1268 = vld [vmem:[%s12] sm:$0xff]
    %v1269 = vld [vmem:[%s12 + $0x8] sm:$0xff]
    %v1270 = vld [vmem:[%s12 + $0x10] sm:$0xff]
    %v1271 = vld [vmem:[%s12 + $0x18] sm:$0xff]
    %v1272 = vld [vmem:[%s12 + $0x20] sm:$0xff]
    %v1273 = vld [vmem:[%s12 + $0x28] sm:$0xff]
    %v1274 = vld [vmem:[%s12 + $0x30] sm:$0xff]
    %v1275 = vld [vmem:[%s12 + $0x38] sm:$0xff]
    %v1276 = vld [vmem:[%s13] sm:$0xff]
    %v1277 = vld [vmem:[%s13 + $0x8] sm:$0xff]
    %v1278 = vld [vmem:[%s13 + $0x10] sm:$0xff]
    %v1279 = vld [vmem:[%s13 + $0x18] sm:$0xff]
    %v1280 = vld [vmem:[%s13 + $0x20] sm:$0xff]
    %v1281 = vld [vmem:[%s13 + $0x28] sm:$0xff]
    %v1282 = vld [vmem:[%s13 + $0x30] sm:$0xff]
    %v1283 = vld [vmem:[%s13 + $0x38] sm:$0xff]
    %v1284 = vld [vmem:[%s14] sm:$0x3]
    %v1285 = vld [vmem:[%s10] sm:$0x1]
    %v1286 = vld [vmem:[%s11] sm:$0x1]
    %v1287 = vld [vmem:[%s1] sm:$0x3]
    %v1296 = vunpack.c.l.b16 %v1260
    %v1297 = vunpack.c.h.b16 %v1260
    %v1298 = vunpack.c.l.b16 %v1261
    %v1299 = vunpack.c.h.b16 %v1261
    %v1300 = vunpack.c.l.b16 %v1262
    %v1301 = vunpack.c.h.b16 %v1262
    %v1302 = vunpack.c.l.b16 %v1263
    %v1303 = vunpack.c.h.b16 %v1263
    %v1304 = vunpack.c.l.b16 %v1264
    %v1305 = vunpack.c.h.b16 %v1264
    %v1306 = vunpack.c.l.b16 %v1265
    %v1307 = vunpack.c.h.b16 %v1265
    %v1308 = vunpack.c.l.b16 %v1266
    %v1309 = vunpack.c.h.b16 %v1266
    %v1310 = vunpack.c.l.b16 %v1267
    %v1311 = vunpack.c.h.b16 %v1267
    %v1312 = vpack.c.b16 %v1298, %v1296
    %v1313 = vpack.c.b16 %v1299, %v1297
    %v1314 = vpack.c.b16 %v1302, %v1300
    %v1315 = vpack.c.b16 %v1303, %v1301
    %v1316 = vpack.c.b16 %v1306, %v1304
    %v1317 = vpack.c.b16 %v1307, %v1305
    %v1318 = vpack.c.b16 %v1310, %v1308
    %v1319 = vpack.c.b16 %v1311, %v1309
    %1328 = vmatpush.bf16.msra.mxu0 0
    %1329 = vmatpush.bf16.msra.mxu0 0
    %1330 = vmatpush.bf16.msra.mxu0 0
    %1331 = vmatpush.bf16.msra.mxu0 0
    %1332 = vmatpush.bf16.msra.mxu0 %v1318
    %1333 = vmatpush.bf16.msra.mxu0 %v1316
    %1334 = vmatpush.bf16.msra.mxu0 %v1314
    %1335 = vmatpush.bf16.msra.mxu0 %v1312
    %1336 = vmatmul.bf16.gmra.mxu0 %v238
    %v1337 = vpop.f32.mrf.mxu0
    %v1338 = vadd.f32 0.0, %v1337
    %v1339 = vpop.f32.mrf.mxu0
    %1340 = vdwg.mxu0
    %1341 = vmatpush.bf16.msra.mxu0 0
    %1342 = vmatpush.bf16.msra.mxu0 0
    %1343 = vmatpush.bf16.msra.mxu0 0
    %1344 = vmatpush.bf16.msra.mxu0 0
    %1345 = vmatpush.bf16.msra.mxu0 %v1319
    %1346 = vmatpush.bf16.msra.mxu0 %v1317
    %1347 = vmatpush.bf16.msra.mxu0 %v1315
    %1348 = vmatpush.bf16.msra.mxu0 %v1313
    %1349 = vmatmul.bf16.gmra.mxu0 %v238
    %v1350 = vpop.f32.mrf.mxu0
    %v1351 = vadd.f32 0.0, %v1350
    %v1352 = vpop.f32.mrf.mxu0
    %1353 = vdwg.mxu0
    %v1356 = vrot.slane %v1351, 6
    %v1357 = vsel %vm162, %v1338, %v1356
    %v1359 = vadd.f32 %v1238, %v1357
    %v1360 = vxor.u32 %v1359, 2147483648
    %v1361 = vmul.f32 %v1360, 1.442695
    %v1362 = vpow.pop %v1361
    %v1363 = vadd.f32 %v1362, 1.0
    %v1364 = vrcp.pop %v1363
    %v1365 = vmul.f32 %v1363, %v1364
    %v1366 = vsub.f32 1.0, %v1365
    %v1367 = vmul.f32 %v1364, %v1366
    %v1368 = vadd.f32 %v1364, %v1367
    %vm1369 = vweird.f32 %v1363
    %vm1370 = vweird.f32 %v1364
    %vm1371 = vmor %vm1369, %vm1370
    %v1372 = vsel %vm1371, %v1364, %v1368
    %v1373 = vand.u32 2147483647, %v1363
    %vm1374 = vcmp.eq.f32.partialorder %v1373, 8.507059e+37
    %v1375 = vand.u32 %v1363, 2147483648
    %v1376 = vor.u32 1.1754944e-38, %v1375
    %v1377 = vsel %vm1374, %v1376, %v1372
    %v1378 = vmul.f32 1.0, %v1377
    %v1380 = vrot.slane %v1378, 2
    %v1382 = vmul.f32 %v1380, 2.0
    %v1383 = vsub.f32 %v1382, 1.0
    %v1384 = vmul.f32 %v1378, 0.0
    %v1385 = vmul.f32 %v1378, %v1383
    %1387 = vrot.lane.b32.xlu0 %v1385, 64
    %v1388 = vpop.permute.xlu0 %1387
    %v1390 = vadd.f32 %v1384, %v1388
    %v1391 = vtanh.pop %v1390
    %1392 = vrot.lane.b32.xlu0 %v1378, 64
    %v1393 = vpop.permute.xlu0 %1392
    %v1394 = vrot.slane %v1393, 2
    %1397 = vrot.lane.b32.xlu0 %v1391, 64
    %v1398 = vpop.permute.xlu0 %1397
    %v1400 = vmul.f32 %v1394, %v1398
    %v1401 = vadd.f32 %v1400, %v1111
    %v1402 = vsel %vm313, %v1401, 0.0
    %1403 = vadd.xlane.f32.xlu0 %v1402
    %v1404 = vpop.xlane.xlu0 %1403
    %v1405 = vmul.f32 %v1404, %v944
    %v1406 = vsub.f32 %v1401, %v1405
    %v1407 = vmul.f32 %v1406, %v1406
    %v1408 = vsel %vm313, %v1407, 0.0
    %1409 = vadd.xlane.f32.xlu0 %v1408
    %v1410 = vpop.xlane.xlu0 %1409
    %v1411 = vmul.f32 %v1410, %v944
    %v1412 = vadd.f32 %v1411, 1e-05
    %v1413 = vrsqrt.pop %v1412
    %v1414 = vmul.f32 %v1413, %v1412
    %v1415 = vmul.f32 %v1414, %v1413
    %v1416 = vmul.f32 0.5, %v1415
    %v1417 = vsub.f32 1.5, %v1416
    %v1418 = vmul.f32 %v1413, %v1417
    %vm1419 = vweird.f32 %v1412
    %vm1420 = vweird.f32 %v1413
    %vm1421 = vmor %vm1419, %vm1420
    %v1422 = vsel %vm1421, %v1413, %v1418
    %v1423 = vmul.f32 %v1406, %v1422
    %v1425 = vperm.slane %v1285, 0
    %v1427 = vmul.f32 %v1423, %v1425
    %v1429 = vperm.slane %v1286, 0
    %v1431 = vadd.f32 %v1427, %v1429
    %v1432 = vpack.c.bf16 %v1431, %v1431
    %v1434 = vperm.slane %v1284, 0
    %v1435 = vperm.slane %v1284, 1
    %v1446 = vunpack.c.l.b16 %v1268
    %v1447 = vunpack.c.h.b16 %v1268
    %v1448 = vunpack.c.l.b16 %v1269
    %v1449 = vunpack.c.h.b16 %v1269
    %v1450 = vunpack.c.l.b16 %v1270
    %v1451 = vunpack.c.h.b16 %v1270
    %v1452 = vunpack.c.l.b16 %v1271
    %v1453 = vunpack.c.h.b16 %v1271
    %v1454 = vunpack.c.l.b16 %v1272
    %v1455 = vunpack.c.h.b16 %v1272
    %v1456 = vunpack.c.l.b16 %v1273
    %v1457 = vunpack.c.h.b16 %v1273
    %v1458 = vunpack.c.l.b16 %v1274
    %v1459 = vunpack.c.h.b16 %v1274
    %v1460 = vunpack.c.l.b16 %v1275
    %v1461 = vunpack.c.h.b16 %v1275
    %v1462 = vpack.c.b16 %v1448, %v1446
    %v1463 = vpack.c.b16 %v1449, %v1447
    %v1464 = vpack.c.b16 %v1452, %v1450
    %v1465 = vpack.c.b16 %v1453, %v1451
    %v1466 = vpack.c.b16 %v1456, %v1454
    %v1467 = vpack.c.b16 %v1457, %v1455
    %v1468 = vpack.c.b16 %v1460, %v1458
    %v1469 = vpack.c.b16 %v1461, %v1459
    %v1479 = vsel %vm236, %v1432, 0
    %1481 = vmatpush.bf16.msra.mxu0 0
    %1482 = vmatpush.bf16.msra.mxu0 0
    %1483 = vmatpush.bf16.msra.mxu0 0
    %1484 = vmatpush.bf16.msra.mxu0 0
    %1485 = vmatpush.bf16.msra.mxu0 %v1468
    %1486 = vmatpush.bf16.msra.mxu0 %v1466
    %1487 = vmatpush.bf16.msra.mxu0 %v1464
    %1488 = vmatpush.bf16.msra.mxu0 %v1462
    %1489 = vmatmul.bf16.gmra.mxu0 %v1479
    %v1490 = vpop.f32.mrf.mxu0
    %v1491 = vadd.f32 %v1434, %v1490
    %v1492 = vpop.f32.mrf.mxu0
    %1493 = vdwg.mxu0
    %1494 = vmatpush.bf16.msra.mxu0 0
    %1495 = vmatpush.bf16.msra.mxu0 0
    %1496 = vmatpush.bf16.msra.mxu0 0
    %1497 = vmatpush.bf16.msra.mxu0 0
    %1498 = vmatpush.bf16.msra.mxu0 %v1469
    %1499 = vmatpush.bf16.msra.mxu0 %v1467
    %1500 = vmatpush.bf16.msra.mxu0 %v1465
    %1501 = vmatpush.bf16.msra.mxu0 %v1463
    %1502 = vmatmul.bf16.gmra.mxu0 %v1479
    %v1503 = vpop.f32.mrf.mxu0
    %v1504 = vadd.f32 %v1435, %v1503
    %v1505 = vpop.f32.mrf.mxu0
    %1506 = vdwg.mxu0
    %v1515 = vunpack.c.l.b16 %v1276
    %v1516 = vunpack.c.h.b16 %v1276
    %v1517 = vunpack.c.l.b16 %v1277
    %v1518 = vunpack.c.h.b16 %v1277
    %v1519 = vunpack.c.l.b16 %v1278
    %v1520 = vunpack.c.h.b16 %v1278
    %v1521 = vunpack.c.l.b16 %v1279
    %v1522 = vunpack.c.h.b16 %v1279
    %v1523 = vunpack.c.l.b16 %v1280
    %v1524 = vunpack.c.h.b16 %v1280
    %v1525 = vunpack.c.l.b16 %v1281
    %v1526 = vunpack.c.h.b16 %v1281
    %v1527 = vunpack.c.l.b16 %v1282
    %v1528 = vunpack.c.h.b16 %v1282
    %v1529 = vunpack.c.l.b16 %v1283
    %v1530 = vunpack.c.h.b16 %v1283
    %v1531 = vpack.c.b16 %v1517, %v1515
    %v1532 = vpack.c.b16 %v1518, %v1516
    %v1533 = vpack.c.b16 %v1521, %v1519
    %v1534 = vpack.c.b16 %v1522, %v1520
    %v1535 = vpack.c.b16 %v1525, %v1523
    %v1536 = vpack.c.b16 %v1526, %v1524
    %v1537 = vpack.c.b16 %v1529, %v1527
    %v1538 = vpack.c.b16 %v1530, %v1528
    %1547 = vmatpush.bf16.msra.mxu0 0
    %1548 = vmatpush.bf16.msra.mxu0 0
    %1549 = vmatpush.bf16.msra.mxu0 0
    %1550 = vmatpush.bf16.msra.mxu0 0
    %1551 = vmatpush.bf16.msra.mxu0 %v1537
    %1552 = vmatpush.bf16.msra.mxu0 %v1535
    %1553 = vmatpush.bf16.msra.mxu0 %v1533
    %1554 = vmatpush.bf16.msra.mxu0 %v1531
    %1555 = vmatmul.bf16.gmra.mxu0 %v238
    %v1556 = vpop.f32.mrf.mxu0
    %v1557 = vadd.f32 0.0, %v1556
    %v1558 = vpop.f32.mrf.mxu0
    %1559 = vdwg.mxu0
    %1560 = vmatpush.bf16.msra.mxu0 0
    %1561 = vmatpush.bf16.msra.mxu0 0
    %1562 = vmatpush.bf16.msra.mxu0 0
    %1563 = vmatpush.bf16.msra.mxu0 0
    %1564 = vmatpush.bf16.msra.mxu0 %v1538
    %1565 = vmatpush.bf16.msra.mxu0 %v1536
    %1566 = vmatpush.bf16.msra.mxu0 %v1534
    %1567 = vmatpush.bf16.msra.mxu0 %v1532
    %1568 = vmatmul.bf16.gmra.mxu0 %v238
    %v1569 = vpop.f32.mrf.mxu0
    %v1570 = vadd.f32 0.0, %v1569
    %v1571 = vpop.f32.mrf.mxu0
    %1572 = vdwg.mxu0
    %v1573 = vadd.f32 %v1491, %v1557
    %v1574 = vadd.f32 %v1504, %v1570
    %v1575 = vxor.u32 %v1573, 2147483648
    %v1576 = vxor.u32 %v1574, 2147483648
    %v1577 = vmul.f32 %v1575, 1.442695
    %v1578 = vpow.pop %v1577
    %v1579 = vmul.f32 %v1576, 1.442695
    %v1580 = vpow.pop %v1579
    %v1581 = vadd.f32 %v1578, 1.0
    %v1582 = vadd.f32 %v1580, 1.0
    %v1583 = vrcp.pop %v1581
    %v1584 = vmul.f32 %v1581, %v1583
    %v1585 = vsub.f32 1.0, %v1584
    %v1586 = vmul.f32 %v1583, %v1585
    %v1587 = vadd.f32 %v1583, %v1586
    %vm1588 = vweird.f32 %v1581
    %vm1589 = vweird.f32 %v1583
    %vm1590 = vmor %vm1588, %vm1589
    %v1591 = vsel %vm1590, %v1583, %v1587
    %v1592 = vand.u32 2147483647, %v1581
    %vm1593 = vcmp.eq.f32.partialorder %v1592, 8.507059e+37
    %v1594 = vand.u32 %v1581, 2147483648
    %v1595 = vor.u32 1.1754944e-38, %v1594
    %v1596 = vsel %vm1593, %v1595, %v1591
    %v1597 = vmul.f32 1.0, %v1596
    %v1598 = vrcp.pop %v1582
    %v1599 = vmul.f32 %v1582, %v1598
    %v1600 = vsub.f32 1.0, %v1599
    %v1601 = vmul.f32 %v1598, %v1600
    %v1602 = vadd.f32 %v1598, %v1601
    %vm1603 = vweird.f32 %v1582
    %vm1604 = vweird.f32 %v1598
    %vm1605 = vmor %vm1603, %vm1604
    %v1606 = vsel %vm1605, %v1598, %v1602
    %v1607 = vand.u32 2147483647, %v1582
    %vm1608 = vcmp.eq.f32.partialorder %v1607, 8.507059e+37
    %v1609 = vand.u32 %v1582, 2147483648
    %v1610 = vor.u32 1.1754944e-38, %v1609
    %v1611 = vsel %vm1608, %v1610, %v1606
    %v1612 = vmul.f32 1.0, %v1611
    %v1613 = vmul.f32 %v1612, 2.0
    %v1614 = vsub.f32 %v1613, 1.0
    %v1615 = vmul.f32 %v1597, 0.0
    %v1616 = vmul.f32 %v1597, %v1614
    %1618 = vrot.lane.b32.xlu0 %v1616, 64
    %v1619 = vpop.permute.xlu0 %1618
    %v1621 = vadd.f32 %v1615, %v1619
    %v1622 = vtanh.pop %v1621
    %v1623 = vmul.f32 %v1612, %v1622
    %vm1624 = vcmp.eq.s32.totalorder %v1287, 0
    %v1625 = vsel %vm1624, 1, 0
    %1626 = vset.pattern.permute.xlu0 0
    %1627 = vperm.xlu0 %1626, %v1625
    %v1628 = vpop.permute.xlu0 %1627
    %vm1629 = vcmp.eq.s32.totalorder %v1628, 1
    %v1630 = vsel %vm1629, %v1623, 0.0
    %v1631 = vpack.c.bf16 %v1400, %v1400
    %v1633 = vsel %vm236, %v1631, 0
    %1635 = vmatpush.bf16.msra.mxu0 0
    %1636 = vmatpush.bf16.msra.mxu0 0
    %1637 = vmatpush.bf16.msra.mxu0 0
    %1638 = vmatpush.bf16.msra.mxu0 0
    %1639 = vmatpush.bf16.msra.mxu0 %v1318
    %1640 = vmatpush.bf16.msra.mxu0 %v1316
    %1641 = vmatpush.bf16.msra.mxu0 %v1314
    %1642 = vmatpush.bf16.msra.mxu0 %v1312
    %1643 = vmatmul.bf16.gmra.mxu0 %v1633
    %v1644 = vpop.f32.mrf.mxu0
    %v1645 = vadd.f32 0.0, %v1644
    %v1646 = vpop.f32.mrf.mxu0
    %1647 = vdwg.mxu0
    %1648 = vmatpush.bf16.msra.mxu0 0
    %1649 = vmatpush.bf16.msra.mxu0 0
    %1650 = vmatpush.bf16.msra.mxu0 0
    %1651 = vmatpush.bf16.msra.mxu0 0
    %1652 = vmatpush.bf16.msra.mxu0 %v1319
    %1653 = vmatpush.bf16.msra.mxu0 %v1317
    %1654 = vmatpush.bf16.msra.mxu0 %v1315
    %1655 = vmatpush.bf16.msra.mxu0 %v1313
    %1656 = vmatmul.bf16.gmra.mxu0 %v1633
    %v1657 = vpop.f32.mrf.mxu0
    %v1658 = vadd.f32 0.0, %v1657
    %v1659 = vpop.f32.mrf.mxu0
    %1660 = vdwg.mxu0
    %v1663 = vrot.slane %v1658, 6
    %v1664 = vsel %vm162, %v1645, %v1663
    %v1666 = vadd.f32 %v1240, %v1664
    %v1667 = vxor.u32 %v1666, 2147483648
    %v1668 = vmul.f32 %v1667, 1.442695
    %v1669 = vpow.pop %v1668
    %v1670 = vadd.f32 %v1669, 1.0
    %v1671 = vrcp.pop %v1670
    %v1672 = vmul.f32 %v1670, %v1671
    %v1673 = vsub.f32 1.0, %v1672
    %v1674 = vmul.f32 %v1671, %v1673
    %v1675 = vadd.f32 %v1671, %v1674
    %vm1676 = vweird.f32 %v1670
    %vm1677 = vweird.f32 %v1671
    %vm1678 = vmor %vm1676, %vm1677
    %v1679 = vsel %vm1678, %v1671, %v1675
    %v1680 = vand.u32 2147483647, %v1670
    %vm1681 = vcmp.eq.f32.partialorder %v1680, 8.507059e+37
    %v1682 = vand.u32 %v1670, 2147483648
    %v1683 = vor.u32 1.1754944e-38, %v1682
    %v1684 = vsel %vm1681, %v1683, %v1679
    %v1685 = vmul.f32 1.0, %v1684
    %v1687 = vrot.slane %v1685, 2
    %v1689 = vmul.f32 %v1687, 2.0
    %v1690 = vsub.f32 %v1689, 1.0
    %v1691 = vmul.f32 %v1685, %v1390
    %v1692 = vmul.f32 %v1685, %v1690
    %1694 = vrot.lane.b32.xlu0 %v1692, 64
    %v1695 = vpop.permute.xlu0 %1694
    %v1697 = vadd.f32 %v1691, %v1695
    %v1698 = vtanh.pop %v1697
    %1699 = vrot.lane.b32.xlu0 %v1685, 64
    %v1700 = vpop.permute.xlu0 %1699
    %v1701 = vrot.slane %v1700, 2
    %1704 = vrot.lane.b32.xlu0 %v1698, 64
    %v1705 = vpop.permute.xlu0 %1704
    %v1707 = vmul.f32 %v1701, %v1705
    %v1708 = vadd.f32 %v1707, %v1112
    %v1709 = vsel %vm313, %v1708, 0.0
    %1710 = vadd.xlane.f32.xlu0 %v1709
    %v1711 = vpop.xlane.xlu0 %1710
    %v1712 = vmul.f32 %v1711, %v944
    %v1713 = vsub.f32 %v1708, %v1712
    %v1714 = vmul.f32 %v1713, %v1713
    %v1715 = vsel %vm313, %v1714, 0.0
    %1716 = vadd.xlane.f32.xlu0 %v1715
    %v1717 = vpop.xlane.xlu0 %1716
    %v1718 = vmul.f32 %v1717, %v944
    %v1719 = vadd.f32 %v1718, 1e-05
    %v1720 = vrsqrt.pop %v1719
    %v1721 = vmul.f32 %v1720, %v1719
    %v1722 = vmul.f32 %v1721, %v1720
    %v1723 = vmul.f32 0.5, %v1722
    %v1724 = vsub.f32 1.5, %v1723
    %v1725 = vmul.f32 %v1720, %v1724
    %vm1726 = vweird.f32 %v1719
    %vm1727 = vweird.f32 %v1720
    %vm1728 = vmor %vm1726, %vm1727
    %v1729 = vsel %vm1728, %v1720, %v1725
    %v1730 = vmul.f32 %v1713, %v1729
    %v1731 = vmul.f32 %v1730, %v1425
    %v1732 = vadd.f32 %v1731, %v1429
    %v1733 = vpack.c.bf16 %v1732, %v1732
    %v1735 = vsel %vm236, %v1733, 0
    %1737 = vmatpush.bf16.msra.mxu0 0
    %1738 = vmatpush.bf16.msra.mxu0 0
    %1739 = vmatpush.bf16.msra.mxu0 0
    %1740 = vmatpush.bf16.msra.mxu0 0
    %1741 = vmatpush.bf16.msra.mxu0 %v1468
    %1742 = vmatpush.bf16.msra.mxu0 %v1466
    %1743 = vmatpush.bf16.msra.mxu0 %v1464
    %1744 = vmatpush.bf16.msra.mxu0 %v1462
    %1745 = vmatmul.bf16.gmra.mxu0 %v1735
    %v1746 = vpop.f32.mrf.mxu0
    %v1747 = vadd.f32 %v1434, %v1746
    %v1748 = vpop.f32.mrf.mxu0
    %1749 = vdwg.mxu0
    %1750 = vmatpush.bf16.msra.mxu0 0
    %1751 = vmatpush.bf16.msra.mxu0 0
    %1752 = vmatpush.bf16.msra.mxu0 0
    %1753 = vmatpush.bf16.msra.mxu0 0
    %1754 = vmatpush.bf16.msra.mxu0 %v1469
    %1755 = vmatpush.bf16.msra.mxu0 %v1467
    %1756 = vmatpush.bf16.msra.mxu0 %v1465
    %1757 = vmatpush.bf16.msra.mxu0 %v1463
    %1758 = vmatmul.bf16.gmra.mxu0 %v1735
    %v1759 = vpop.f32.mrf.mxu0
    %v1760 = vadd.f32 %v1435, %v1759
    %v1761 = vpop.f32.mrf.mxu0
    %1762 = vdwg.mxu0
    %v1763 = vpack.c.bf16 %v1623, %v1623
    %1765 = vrot.lane.b32.xlu0 %v1763, 64
    %v1766 = vpop.permute.xlu0 %1765
    %v1768 = vsel %vm236, %v1766, 0
    %1770 = vmatpush.bf16.msra.mxu0 0
    %1771 = vmatpush.bf16.msra.mxu0 0
    %1772 = vmatpush.bf16.msra.mxu0 0
    %1773 = vmatpush.bf16.msra.mxu0 0
    %1774 = vmatpush.bf16.msra.mxu0 %v1537
    %1775 = vmatpush.bf16.msra.mxu0 %v1535
    %1776 = vmatpush.bf16.msra.mxu0 %v1533
    %1777 = vmatpush.bf16.msra.mxu0 %v1531
    %1778 = vmatmul.bf16.gmra.mxu0 %v1768
    %v1779 = vpop.f32.mrf.mxu0
    %v1780 = vadd.f32 0.0, %v1779
    %v1781 = vpop.f32.mrf.mxu0
    %1782 = vdwg.mxu0
    %1783 = vmatpush.bf16.msra.mxu0 0
    %1784 = vmatpush.bf16.msra.mxu0 0
    %1785 = vmatpush.bf16.msra.mxu0 0
    %1786 = vmatpush.bf16.msra.mxu0 0
    %1787 = vmatpush.bf16.msra.mxu0 %v1538
    %1788 = vmatpush.bf16.msra.mxu0 %v1536
    %1789 = vmatpush.bf16.msra.mxu0 %v1534
    %1790 = vmatpush.bf16.msra.mxu0 %v1532
    %1791 = vmatmul.bf16.gmra.mxu0 %v1768
    %v1792 = vpop.f32.mrf.mxu0
    %v1793 = vadd.f32 0.0, %v1792
    %v1794 = vpop.f32.mrf.mxu0
    %1795 = vdwg.mxu0
    %v1796 = vadd.f32 %v1747, %v1780
    %v1797 = vadd.f32 %v1760, %v1793
    %v1798 = vxor.u32 %v1796, 2147483648
    %v1799 = vxor.u32 %v1797, 2147483648
    %v1800 = vmul.f32 %v1798, 1.442695
    %v1801 = vpow.pop %v1800
    %v1802 = vmul.f32 %v1799, 1.442695
    %v1803 = vpow.pop %v1802
    %v1804 = vadd.f32 %v1801, 1.0
    %v1805 = vadd.f32 %v1803, 1.0
    %v1806 = vrcp.pop %v1804
    %v1807 = vmul.f32 %v1804, %v1806
    %v1808 = vsub.f32 1.0, %v1807
    %v1809 = vmul.f32 %v1806, %v1808
    %v1810 = vadd.f32 %v1806, %v1809
    %vm1811 = vweird.f32 %v1804
    %vm1812 = vweird.f32 %v1806
    %vm1813 = vmor %vm1811, %vm1812
    %v1814 = vsel %vm1813, %v1806, %v1810
    %v1815 = vand.u32 2147483647, %v1804
    %vm1816 = vcmp.eq.f32.partialorder %v1815, 8.507059e+37
    %v1817 = vand.u32 %v1804, 2147483648
    %v1818 = vor.u32 1.1754944e-38, %v1817
    %v1819 = vsel %vm1816, %v1818, %v1814
    %v1820 = vmul.f32 1.0, %v1819
    %v1821 = vrcp.pop %v1805
    %v1822 = vmul.f32 %v1805, %v1821
    %v1823 = vsub.f32 1.0, %v1822
    %v1824 = vmul.f32 %v1821, %v1823
    %v1825 = vadd.f32 %v1821, %v1824
    %vm1826 = vweird.f32 %v1805
    %vm1827 = vweird.f32 %v1821
    %vm1828 = vmor %vm1826, %vm1827
    %v1829 = vsel %vm1828, %v1821, %v1825
    %v1830 = vand.u32 2147483647, %v1805
    %vm1831 = vcmp.eq.f32.partialorder %v1830, 8.507059e+37
    %v1832 = vand.u32 %v1805, 2147483648
    %v1833 = vor.u32 1.1754944e-38, %v1832
    %v1834 = vsel %vm1831, %v1833, %v1829
    %v1835 = vmul.f32 1.0, %v1834
    %v1836 = vmul.f32 %v1835, 2.0
    %v1837 = vsub.f32 %v1836, 1.0
    %v1838 = vmul.f32 %v1820, %v1621
    %v1839 = vmul.f32 %v1820, %v1837
    %1841 = vrot.lane.b32.xlu0 %v1839, 64
    %v1842 = vpop.permute.xlu0 %1841
    %v1844 = vadd.f32 %v1838, %v1842
    %v1845 = vtanh.pop %v1844
    %v1846 = vmul.f32 %v1835, %v1845
    %vm1847 = vcmp.eq.s32.totalorder %v1287, 1
    %v1848 = vsel %vm1847, 1, 0
    %1849 = vset.pattern.permute.xlu0 0
    %1850 = vperm.xlu0 %1849, %v1848
    %v1851 = vpop.permute.xlu0 %1850
    %vm1852 = vcmp.eq.s32.totalorder %v1851, 1
    %v1853 = vsel %vm1852, %v1846, %v1630
    %v1854 = vpack.c.bf16 %v1707, %v1707
    %v1856 = vsel %vm236, %v1854, 0
    %1858 = vmatpush.bf16.msra.mxu0 0
    %1859 = vmatpush.bf16.msra.mxu0 0
    %1860 = vmatpush.bf16.msra.mxu0 0
    %1861 = vmatpush.bf16.msra.mxu0 0
    %1862 = vmatpush.bf16.msra.mxu0 %v1318
    %1863 = vmatpush.bf16.msra.mxu0 %v1316
    %1864 = vmatpush.bf16.msra.mxu0 %v1314
    %1865 = vmatpush.bf16.msra.mxu0 %v1312
    %1866 = vmatmul.bf16.gmra.mxu0 %v1856
    %v1867 = vpop.f32.mrf.mxu0
    %v1868 = vadd.f32 0.0, %v1867
    %v1869 = vpop.f32.mrf.mxu0
    %1870 = vdwg.mxu0
    %1871 = vmatpush.bf16.msra.mxu0 0
    %1872 = vmatpush.bf16.msra.mxu0 0
    %1873 = vmatpush.bf16.msra.mxu0 0
    %1874 = vmatpush.bf16.msra.mxu0 0
    %1875 = vmatpush.bf16.msra.mxu0 %v1319
    %1876 = vmatpush.bf16.msra.mxu0 %v1317
    %1877 = vmatpush.bf16.msra.mxu0 %v1315
    %1878 = vmatpush.bf16.msra.mxu0 %v1313
    %1879 = vmatmul.bf16.gmra.mxu0 %v1856
    %v1880 = vpop.f32.mrf.mxu0
    %v1881 = vadd.f32 0.0, %v1880
    %v1882 = vpop.f32.mrf.mxu0
    %1883 = vdwg.mxu0
    %v1886 = vrot.slane %v1881, 6
    %v1887 = vsel %vm162, %v1868, %v1886
    %v1889 = vadd.f32 %v1242, %v1887
    %v1890 = vxor.u32 %v1889, 2147483648
    %v1891 = vmul.f32 %v1890, 1.442695
    %v1892 = vpow.pop %v1891
    %v1893 = vadd.f32 %v1892, 1.0
    %v1894 = vrcp.pop %v1893
    %v1895 = vmul.f32 %v1893, %v1894
    %v1896 = vsub.f32 1.0, %v1895
    %v1897 = vmul.f32 %v1894, %v1896
    %v1898 = vadd.f32 %v1894, %v1897
    %vm1899 = vweird.f32 %v1893
    %vm1900 = vweird.f32 %v1894
    %vm1901 = vmor %vm1899, %vm1900
    %v1902 = vsel %vm1901, %v1894, %v1898
    %v1903 = vand.u32 2147483647, %v1893
    %vm1904 = vcmp.eq.f32.partialorder %v1903, 8.507059e+37
    %v1905 = vand.u32 %v1893, 2147483648
    %v1906 = vor.u32 1.1754944e-38, %v1905
    %v1907 = vsel %vm1904, %v1906, %v1902
    %v1908 = vmul.f32 1.0, %v1907
    %v1910 = vrot.slane %v1908, 2
    %v1912 = vmul.f32 %v1910, 2.0
    %v1913 = vsub.f32 %v1912, 1.0
    %v1914 = vmul.f32 %v1908, %v1697
    %v1915 = vmul.f32 %v1908, %v1913
    %1917 = vrot.lane.b32.xlu0 %v1915, 64
    %v1918 = vpop.permute.xlu0 %1917
    %v1920 = vadd.f32 %v1914, %v1918
    %v1921 = vtanh.pop %v1920
    %1922 = vrot.lane.b32.xlu0 %v1908, 64
    %v1923 = vpop.permute.xlu0 %1922
    %v1924 = vrot.slane %v1923, 2
    %1927 = vrot.lane.b32.xlu0 %v1921, 64
    %v1928 = vpop.permute.xlu0 %1927
    %v1930 = vmul.f32 %v1924, %v1928
    %v1931 = vadd.f32 %v1930, %v1113
    %v1932 = vsel %vm313, %v1931, 0.0
    %1933 = vadd.xlane.f32.xlu0 %v1932
    %v1934 = vpop.xlane.xlu0 %1933
    %v1935 = vmul.f32 %v1934, %v944
    %v1936 = vsub.f32 %v1931, %v1935
    %v1937 = vmul.f32 %v1936, %v1936
    %v1938 = vsel %vm313, %v1937, 0.0
    %1939 = vadd.xlane.f32.xlu0 %v1938
    %v1940 = vpop.xlane.xlu0 %1939
    %v1941 = vmul.f32 %v1940, %v944
    %v1942 = vadd.f32 %v1941, 1e-05
    %v1943 = vrsqrt.pop %v1942
    %v1944 = vmul.f32 %v1943, %v1942
    %v1945 = vmul.f32 %v1944, %v1943
    %v1946 = vmul.f32 0.5, %v1945
    %v1947 = vsub.f32 1.5, %v1946
    %v1948 = vmul.f32 %v1943, %v1947
    %vm1949 = vweird.f32 %v1942
    %vm1950 = vweird.f32 %v1943
    %vm1951 = vmor %vm1949, %vm1950
    %v1952 = vsel %vm1951, %v1943, %v1948
    %v1953 = vmul.f32 %v1936, %v1952
    %v1954 = vmul.f32 %v1953, %v1425
    %v1955 = vadd.f32 %v1954, %v1429
    %v1956 = vpack.c.bf16 %v1955, %v1955
    %v1958 = vsel %vm236, %v1956, 0
    %1960 = vmatpush.bf16.msra.mxu0 0
    %1961 = vmatpush.bf16.msra.mxu0 0
    %1962 = vmatpush.bf16.msra.mxu0 0
    %1963 = vmatpush.bf16.msra.mxu0 0
    %1964 = vmatpush.bf16.msra.mxu0 %v1468
    %1965 = vmatpush.bf16.msra.mxu0 %v1466
    %1966 = vmatpush.bf16.msra.mxu0 %v1464
    %1967 = vmatpush.bf16.msra.mxu0 %v1462
    %1968 = vmatmul.bf16.gmra.mxu0 %v1958
    %v1969 = vpop.f32.mrf.mxu0
    %v1970 = vadd.f32 %v1434, %v1969
    %v1971 = vpop.f32.mrf.mxu0
    %1972 = vdwg.mxu0
    %1973 = vmatpush.bf16.msra.mxu0 0
    %1974 = vmatpush.bf16.msra.mxu0 0
    %1975 = vmatpush.bf16.msra.mxu0 0
    %1976 = vmatpush.bf16.msra.mxu0 0
    %1977 = vmatpush.bf16.msra.mxu0 %v1469
    %1978 = vmatpush.bf16.msra.mxu0 %v1467
    %1979 = vmatpush.bf16.msra.mxu0 %v1465
    %1980 = vmatpush.bf16.msra.mxu0 %v1463
    %1981 = vmatmul.bf16.gmra.mxu0 %v1958
    %v1982 = vpop.f32.mrf.mxu0
    %v1983 = vadd.f32 %v1435, %v1982
    %v1984 = vpop.f32.mrf.mxu0
    %1985 = vdwg.mxu0
    %v1986 = vpack.c.bf16 %v1846, %v1846
    %1988 = vrot.lane.b32.xlu0 %v1986, 64
    %v1989 = vpop.permute.xlu0 %1988
    %v1991 = vsel %vm236, %v1989, 0
    %1993 = vmatpush.bf16.msra.mxu0 0
    %1994 = vmatpush.bf16.msra.mxu0 0
    %1995 = vmatpush.bf16.msra.mxu0 0
    %1996 = vmatpush.bf16.msra.mxu0 0
    %1997 = vmatpush.bf16.msra.mxu0 %v1537
    %1998 = vmatpush.bf16.msra.mxu0 %v1535
    %1999 = vmatpush.bf16.msra.mxu0 %v1533
    %2000 = vmatpush.bf16.msra.mxu0 %v1531
    %2001 = vmatmul.bf16.gmra.mxu0 %v1991
    %v2002 = vpop.f32.mrf.mxu0
    %v2003 = vadd.f32 0.0, %v2002
    %v2004 = vpop.f32.mrf.mxu0
    %2005 = vdwg.mxu0
    %2006 = vmatpush.bf16.msra.mxu0 0
    %2007 = vmatpush.bf16.msra.mxu0 0
    %2008 = vmatpush.bf16.msra.mxu0 0
    %2009 = vmatpush.bf16.msra.mxu0 0
    %2010 = vmatpush.bf16.msra.mxu0 %v1538
    %2011 = vmatpush.bf16.msra.mxu0 %v1536
    %2012 = vmatpush.bf16.msra.mxu0 %v1534
    %2013 = vmatpush.bf16.msra.mxu0 %v1532
    %2014 = vmatmul.bf16.gmra.mxu0 %v1991
    %v2015 = vpop.f32.mrf.mxu0
    %v2016 = vadd.f32 0.0, %v2015
    %v2017 = vpop.f32.mrf.mxu0
    %2018 = vdwg.mxu0
    %v2019 = vadd.f32 %v1970, %v2003
    %v2020 = vadd.f32 %v1983, %v2016
    %v2021 = vxor.u32 %v2019, 2147483648
    %v2022 = vxor.u32 %v2020, 2147483648
    %v2023 = vmul.f32 %v2021, 1.442695
    %v2024 = vpow.pop %v2023
    %v2025 = vmul.f32 %v2022, 1.442695
    %v2026 = vpow.pop %v2025
    %v2027 = vadd.f32 %v2024, 1.0
    %v2028 = vadd.f32 %v2026, 1.0
    %v2029 = vrcp.pop %v2027
    %v2030 = vmul.f32 %v2027, %v2029
    %v2031 = vsub.f32 1.0, %v2030
    %v2032 = vmul.f32 %v2029, %v2031
    %v2033 = vadd.f32 %v2029, %v2032
    %vm2034 = vweird.f32 %v2027
    %vm2035 = vweird.f32 %v2029
    %vm2036 = vmor %vm2034, %vm2035
    %v2037 = vsel %vm2036, %v2029, %v2033
    %v2038 = vand.u32 2147483647, %v2027
    %vm2039 = vcmp.eq.f32.partialorder %v2038, 8.507059e+37
    %v2040 = vand.u32 %v2027, 2147483648
    %v2041 = vor.u32 1.1754944e-38, %v2040
    %v2042 = vsel %vm2039, %v2041, %v2037
    %v2043 = vmul.f32 1.0, %v2042
    %v2044 = vrcp.pop %v2028
    %v2045 = vmul.f32 %v2028, %v2044
    %v2046 = vsub.f32 1.0, %v2045
    %v2047 = vmul.f32 %v2044, %v2046
    %v2048 = vadd.f32 %v2044, %v2047
    %vm2049 = vweird.f32 %v2028
    %vm2050 = vweird.f32 %v2044
    %vm2051 = vmor %vm2049, %vm2050
    %v2052 = vsel %vm2051, %v2044, %v2048
    %v2053 = vand.u32 2147483647, %v2028
    %vm2054 = vcmp.eq.f32.partialorder %v2053, 8.507059e+37
    %v2055 = vand.u32 %v2028, 2147483648
    %v2056 = vor.u32 1.1754944e-38, %v2055
    %v2057 = vsel %vm2054, %v2056, %v2052
    %v2058 = vmul.f32 1.0, %v2057
    %v2059 = vmul.f32 %v2058, 2.0
    %v2060 = vsub.f32 %v2059, 1.0
    %v2061 = vmul.f32 %v2043, %v1844
    %v2062 = vmul.f32 %v2043, %v2060
    %2064 = vrot.lane.b32.xlu0 %v2062, 64
    %v2065 = vpop.permute.xlu0 %2064
    %v2067 = vadd.f32 %v2061, %v2065
    %v2068 = vtanh.pop %v2067
    %v2069 = vmul.f32 %v2058, %v2068
    %vm2070 = vcmp.eq.s32.totalorder %v1287, 2
    %v2071 = vsel %vm2070, 1, 0
    %2072 = vset.pattern.permute.xlu0 0
    %2073 = vperm.xlu0 %2072, %v2071
    %v2074 = vpop.permute.xlu0 %2073
    %vm2075 = vcmp.eq.s32.totalorder %v2074, 1
    %v2076 = vsel %vm2075, %v2069, %v1853
    %v2077 = vpack.c.bf16 %v1930, %v1930
    %v2079 = vsel %vm236, %v2077, 0
    %2081 = vmatpush.bf16.msra.mxu0 0
    %2082 = vmatpush.bf16.msra.mxu0 0
    %2083 = vmatpush.bf16.msra.mxu0 0
    %2084 = vmatpush.bf16.msra.mxu0 0
    %2085 = vmatpush.bf16.msra.mxu0 %v1318
    %2086 = vmatpush.bf16.msra.mxu0 %v1316
    %2087 = vmatpush.bf16.msra.mxu0 %v1314
    %2088 = vmatpush.bf16.msra.mxu0 %v1312
    %2089 = vmatmul.bf16.gmra.mxu0 %v2079
    %v2090 = vpop.f32.mrf.mxu0
    %v2091 = vadd.f32 0.0, %v2090
    %v2092 = vpop.f32.mrf.mxu0
    %2093 = vdwg.mxu0
    %2094 = vmatpush.bf16.msra.mxu0 0
    %2095 = vmatpush.bf16.msra.mxu0 0
    %2096 = vmatpush.bf16.msra.mxu0 0
    %2097 = vmatpush.bf16.msra.mxu0 0
    %2098 = vmatpush.bf16.msra.mxu0 %v1319
    %2099 = vmatpush.bf16.msra.mxu0 %v1317
    %2100 = vmatpush.bf16.msra.mxu0 %v1315
    %2101 = vmatpush.bf16.msra.mxu0 %v1313
    %2102 = vmatmul.bf16.gmra.mxu0 %v2079
    %v2103 = vpop.f32.mrf.mxu0
    %v2104 = vadd.f32 0.0, %v2103
    %v2105 = vpop.f32.mrf.mxu0
    %2106 = vdwg.mxu0
    %v2109 = vrot.slane %v2104, 6
    %v2110 = vsel %vm162, %v2091, %v2109
    %v2112 = vadd.f32 %v1244, %v2110
    %v2113 = vxor.u32 %v2112, 2147483648
    %v2114 = vmul.f32 %v2113, 1.442695
    %v2115 = vpow.pop %v2114
    %v2116 = vadd.f32 %v2115, 1.0
    %v2117 = vrcp.pop %v2116
    %v2118 = vmul.f32 %v2116, %v2117
    %v2119 = vsub.f32 1.0, %v2118
    %v2120 = vmul.f32 %v2117, %v2119
    %v2121 = vadd.f32 %v2117, %v2120
    %vm2122 = vweird.f32 %v2116
    %vm2123 = vweird.f32 %v2117
    %vm2124 = vmor %vm2122, %vm2123
    %v2125 = vsel %vm2124, %v2117, %v2121
    %v2126 = vand.u32 2147483647, %v2116
    %vm2127 = vcmp.eq.f32.partialorder %v2126, 8.507059e+37
    %v2128 = vand.u32 %v2116, 2147483648
    %v2129 = vor.u32 1.1754944e-38, %v2128
    %v2130 = vsel %vm2127, %v2129, %v2125
    %v2131 = vmul.f32 1.0, %v2130
    %v2133 = vrot.slane %v2131, 2
    %v2135 = vmul.f32 %v2133, 2.0
    %v2136 = vsub.f32 %v2135, 1.0
    %v2137 = vmul.f32 %v2131, %v1920
    %v2138 = vmul.f32 %v2131, %v2136
    %2140 = vrot.lane.b32.xlu0 %v2138, 64
    %v2141 = vpop.permute.xlu0 %2140
    %v2143 = vadd.f32 %v2137, %v2141
    %v2144 = vtanh.pop %v2143
    %2145 = vrot.lane.b32.xlu0 %v2131, 64
    %v2146 = vpop.permute.xlu0 %2145
    %v2147 = vrot.slane %v2146, 2
    %2150 = vrot.lane.b32.xlu0 %v2144, 64
    %v2151 = vpop.permute.xlu0 %2150
    %v2153 = vmul.f32 %v2147, %v2151
    %v2154 = vadd.f32 %v2153, %v1114
    %v2155 = vsel %vm313, %v2154, 0.0
    %2156 = vadd.xlane.f32.xlu0 %v2155
    %v2157 = vpop.xlane.xlu0 %2156
    %v2158 = vmul.f32 %v2157, %v944
    %v2159 = vsub.f32 %v2154, %v2158
    %v2160 = vmul.f32 %v2159, %v2159
    %v2161 = vsel %vm313, %v2160, 0.0
    %2162 = vadd.xlane.f32.xlu0 %v2161
    %v2163 = vpop.xlane.xlu0 %2162
    %v2164 = vmul.f32 %v2163, %v944
    %v2165 = vadd.f32 %v2164, 1e-05
    %v2166 = vrsqrt.pop %v2165
    %v2167 = vmul.f32 %v2166, %v2165
    %v2168 = vmul.f32 %v2167, %v2166
    %v2169 = vmul.f32 0.5, %v2168
    %v2170 = vsub.f32 1.5, %v2169
    %v2171 = vmul.f32 %v2166, %v2170
    %vm2172 = vweird.f32 %v2165
    %vm2173 = vweird.f32 %v2166
    %vm2174 = vmor %vm2172, %vm2173
    %v2175 = vsel %vm2174, %v2166, %v2171
    %v2176 = vmul.f32 %v2159, %v2175
    %v2177 = vmul.f32 %v2176, %v1425
    %v2178 = vadd.f32 %v2177, %v1429
    %v2179 = vpack.c.bf16 %v2178, %v2178
    %v2181 = vsel %vm236, %v2179, 0
    %2183 = vmatpush.bf16.msra.mxu0 0
    %2184 = vmatpush.bf16.msra.mxu0 0
    %2185 = vmatpush.bf16.msra.mxu0 0
    %2186 = vmatpush.bf16.msra.mxu0 0
    %2187 = vmatpush.bf16.msra.mxu0 %v1468
    %2188 = vmatpush.bf16.msra.mxu0 %v1466
    %2189 = vmatpush.bf16.msra.mxu0 %v1464
    %2190 = vmatpush.bf16.msra.mxu0 %v1462
    %2191 = vmatmul.bf16.gmra.mxu0 %v2181
    %v2192 = vpop.f32.mrf.mxu0
    %v2193 = vadd.f32 %v1434, %v2192
    %v2194 = vpop.f32.mrf.mxu0
    %2195 = vdwg.mxu0
    %2196 = vmatpush.bf16.msra.mxu0 0
    %2197 = vmatpush.bf16.msra.mxu0 0
    %2198 = vmatpush.bf16.msra.mxu0 0
    %2199 = vmatpush.bf16.msra.mxu0 0
    %2200 = vmatpush.bf16.msra.mxu0 %v1469
    %2201 = vmatpush.bf16.msra.mxu0 %v1467
    %2202 = vmatpush.bf16.msra.mxu0 %v1465
    %2203 = vmatpush.bf16.msra.mxu0 %v1463
    %2204 = vmatmul.bf16.gmra.mxu0 %v2181
    %v2205 = vpop.f32.mrf.mxu0
    %v2206 = vadd.f32 %v1435, %v2205
    %v2207 = vpop.f32.mrf.mxu0
    %2208 = vdwg.mxu0
    %v2209 = vpack.c.bf16 %v2069, %v2069
    %2211 = vrot.lane.b32.xlu0 %v2209, 64
    %v2212 = vpop.permute.xlu0 %2211
    %v2214 = vsel %vm236, %v2212, 0
    %2216 = vmatpush.bf16.msra.mxu0 0
    %2217 = vmatpush.bf16.msra.mxu0 0
    %2218 = vmatpush.bf16.msra.mxu0 0
    %2219 = vmatpush.bf16.msra.mxu0 0
    %2220 = vmatpush.bf16.msra.mxu0 %v1537
    %2221 = vmatpush.bf16.msra.mxu0 %v1535
    %2222 = vmatpush.bf16.msra.mxu0 %v1533
    %2223 = vmatpush.bf16.msra.mxu0 %v1531
    %2224 = vmatmul.bf16.gmra.mxu0 %v2214
    %v2225 = vpop.f32.mrf.mxu0
    %v2226 = vadd.f32 0.0, %v2225
    %v2227 = vpop.f32.mrf.mxu0
    %2228 = vdwg.mxu0
    %2229 = vmatpush.bf16.msra.mxu0 0
    %2230 = vmatpush.bf16.msra.mxu0 0
    %2231 = vmatpush.bf16.msra.mxu0 0
    %2232 = vmatpush.bf16.msra.mxu0 0
    %2233 = vmatpush.bf16.msra.mxu0 %v1538
    %2234 = vmatpush.bf16.msra.mxu0 %v1536
    %2235 = vmatpush.bf16.msra.mxu0 %v1534
    %2236 = vmatpush.bf16.msra.mxu0 %v1532
    %2237 = vmatmul.bf16.gmra.mxu0 %v2214
    %v2238 = vpop.f32.mrf.mxu0
    %v2239 = vadd.f32 0.0, %v2238
    %v2240 = vpop.f32.mrf.mxu0
    %2241 = vdwg.mxu0
    %v2242 = vadd.f32 %v2193, %v2226
    %v2243 = vadd.f32 %v2206, %v2239
    %v2244 = vxor.u32 %v2242, 2147483648
    %v2245 = vxor.u32 %v2243, 2147483648
    %v2246 = vmul.f32 %v2244, 1.442695
    %v2247 = vpow.pop %v2246
    %v2248 = vmul.f32 %v2245, 1.442695
    %v2249 = vpow.pop %v2248
    %v2250 = vadd.f32 %v2247, 1.0
    %v2251 = vadd.f32 %v2249, 1.0
    %v2252 = vrcp.pop %v2250
    %v2253 = vmul.f32 %v2250, %v2252
    %v2254 = vsub.f32 1.0, %v2253
    %v2255 = vmul.f32 %v2252, %v2254
    %v2256 = vadd.f32 %v2252, %v2255
    %vm2257 = vweird.f32 %v2250
    %vm2258 = vweird.f32 %v2252
    %vm2259 = vmor %vm2257, %vm2258
    %v2260 = vsel %vm2259, %v2252, %v2256
    %v2261 = vand.u32 2147483647, %v2250
    %vm2262 = vcmp.eq.f32.partialorder %v2261, 8.507059e+37
    %v2263 = vand.u32 %v2250, 2147483648
    %v2264 = vor.u32 1.1754944e-38, %v2263
    %v2265 = vsel %vm2262, %v2264, %v2260
    %v2266 = vmul.f32 1.0, %v2265
    %v2267 = vrcp.pop %v2251
    %v2268 = vmul.f32 %v2251, %v2267
    %v2269 = vsub.f32 1.0, %v2268
    %v2270 = vmul.f32 %v2267, %v2269
    %v2271 = vadd.f32 %v2267, %v2270
    %vm2272 = vweird.f32 %v2251
    %vm2273 = vweird.f32 %v2267
    %vm2274 = vmor %vm2272, %vm2273
    %v2275 = vsel %vm2274, %v2267, %v2271
    %v2276 = vand.u32 2147483647, %v2251
    %vm2277 = vcmp.eq.f32.partialorder %v2276, 8.507059e+37
    %v2278 = vand.u32 %v2251, 2147483648
    %v2279 = vor.u32 1.1754944e-38, %v2278
    %v2280 = vsel %vm2277, %v2279, %v2275
    %v2281 = vmul.f32 1.0, %v2280
    %v2282 = vmul.f32 %v2281, 2.0
    %v2283 = vsub.f32 %v2282, 1.0
    %v2284 = vmul.f32 %v2266, %v2067
    %v2285 = vmul.f32 %v2266, %v2283
    %2287 = vrot.lane.b32.xlu0 %v2285, 64
    %v2288 = vpop.permute.xlu0 %2287
    %v2290 = vadd.f32 %v2284, %v2288
    %v2291 = vtanh.pop %v2290
    %v2292 = vmul.f32 %v2281, %v2291
    %vm2293 = vcmp.eq.s32.totalorder %v1287, 3
    %v2294 = vsel %vm2293, 1, 0
    %2295 = vset.pattern.permute.xlu0 0
    %2296 = vperm.xlu0 %2295, %v2294
    %v2297 = vpop.permute.xlu0 %2296
    %vm2298 = vcmp.eq.s32.totalorder %v2297, 1
    %v2299 = vsel %vm2298, %v2292, %v2076
    %v2300 = vpack.c.bf16 %v2153, %v2153
    %v2302 = vsel %vm236, %v2300, 0
    %2304 = vmatpush.bf16.msra.mxu0 0
    %2305 = vmatpush.bf16.msra.mxu0 0
    %2306 = vmatpush.bf16.msra.mxu0 0
    %2307 = vmatpush.bf16.msra.mxu0 0
    %2308 = vmatpush.bf16.msra.mxu0 %v1318
    %2309 = vmatpush.bf16.msra.mxu0 %v1316
    %2310 = vmatpush.bf16.msra.mxu0 %v1314
    %2311 = vmatpush.bf16.msra.mxu0 %v1312
    %2312 = vmatmul.bf16.gmra.mxu0 %v2302
    %v2313 = vpop.f32.mrf.mxu0
    %v2314 = vadd.f32 0.0, %v2313
    %v2315 = vpop.f32.mrf.mxu0
    %2316 = vdwg.mxu0
    %2317 = vmatpush.bf16.msra.mxu0 0
    %2318 = vmatpush.bf16.msra.mxu0 0
    %2319 = vmatpush.bf16.msra.mxu0 0
    %2320 = vmatpush.bf16.msra.mxu0 0
    %2321 = vmatpush.bf16.msra.mxu0 %v1319
    %2322 = vmatpush.bf16.msra.mxu0 %v1317
    %2323 = vmatpush.bf16.msra.mxu0 %v1315
    %2324 = vmatpush.bf16.msra.mxu0 %v1313
    %2325 = vmatmul.bf16.gmra.mxu0 %v2302
    %v2326 = vpop.f32.mrf.mxu0
    %v2327 = vadd.f32 0.0, %v2326
    %v2328 = vpop.f32.mrf.mxu0
    %2329 = vdwg.mxu0
    %v2332 = vrot.slane %v2327, 6
    %v2333 = vsel %vm162, %v2314, %v2332
    %v2335 = vadd.f32 %v1245, %v2333
    %v2336 = vxor.u32 %v2335, 2147483648
    %v2337 = vmul.f32 %v2336, 1.442695
    %v2338 = vpow.pop %v2337
    %v2339 = vadd.f32 %v2338, 1.0
    %v2340 = vrcp.pop %v2339
    %v2341 = vmul.f32 %v2339, %v2340
    %v2342 = vsub.f32 1.0, %v2341
    %v2343 = vmul.f32 %v2340, %v2342
    %v2344 = vadd.f32 %v2340, %v2343
    %vm2345 = vweird.f32 %v2339
    %vm2346 = vweird.f32 %v2340
    %vm2347 = vmor %vm2345, %vm2346
    %v2348 = vsel %vm2347, %v2340, %v2344
    %v2349 = vand.u32 2147483647, %v2339
    %vm2350 = vcmp.eq.f32.partialorder %v2349, 8.507059e+37
    %v2351 = vand.u32 %v2339, 2147483648
    %v2352 = vor.u32 1.1754944e-38, %v2351
    %v2353 = vsel %vm2350, %v2352, %v2348
    %v2354 = vmul.f32 1.0, %v2353
    %v2356 = vrot.slane %v2354, 2
    %v2358 = vmul.f32 %v2356, 2.0
    %v2359 = vsub.f32 %v2358, 1.0
    %v2360 = vmul.f32 %v2354, %v2143
    %v2361 = vmul.f32 %v2354, %v2359
    %2363 = vrot.lane.b32.xlu0 %v2361, 64
    %v2364 = vpop.permute.xlu0 %2363
    %v2366 = vadd.f32 %v2360, %v2364
    %v2367 = vtanh.pop %v2366
    %2368 = vrot.lane.b32.xlu0 %v2354, 64
    %v2369 = vpop.permute.xlu0 %2368
    %v2370 = vrot.slane %v2369, 2
    %2373 = vrot.lane.b32.xlu0 %v2367, 64
    %v2374 = vpop.permute.xlu0 %2373
    %v2376 = vmul.f32 %v2370, %v2374
    %v2377 = vadd.f32 %v2376, %v1115
    %v2378 = vsel %vm313, %v2377, 0.0
    %2379 = vadd.xlane.f32.xlu0 %v2378
    %v2380 = vpop.xlane.xlu0 %2379
    %v2381 = vmul.f32 %v2380, %v944
    %v2382 = vsub.f32 %v2377, %v2381
    %v2383 = vmul.f32 %v2382, %v2382
    %v2384 = vsel %vm313, %v2383, 0.0
    %2385 = vadd.xlane.f32.xlu0 %v2384
    %v2386 = vpop.xlane.xlu0 %2385
    %v2387 = vmul.f32 %v2386, %v944
    %v2388 = vadd.f32 %v2387, 1e-05
    %v2389 = vrsqrt.pop %v2388
    %v2390 = vmul.f32 %v2389, %v2388
    %v2391 = vmul.f32 %v2390, %v2389
    %v2392 = vmul.f32 0.5, %v2391
    %v2393 = vsub.f32 1.5, %v2392
    %v2394 = vmul.f32 %v2389, %v2393
    %vm2395 = vweird.f32 %v2388
    %vm2396 = vweird.f32 %v2389
    %vm2397 = vmor %vm2395, %vm2396
    %v2398 = vsel %vm2397, %v2389, %v2394
    %v2399 = vmul.f32 %v2382, %v2398
    %v2400 = vmul.f32 %v2399, %v1425
    %v2401 = vadd.f32 %v2400, %v1429
    %v2402 = vpack.c.bf16 %v2401, %v2401
    %v2404 = vsel %vm236, %v2402, 0
    %2406 = vmatpush.bf16.msra.mxu0 0
    %2407 = vmatpush.bf16.msra.mxu0 0
    %2408 = vmatpush.bf16.msra.mxu0 0
    %2409 = vmatpush.bf16.msra.mxu0 0
    %2410 = vmatpush.bf16.msra.mxu0 %v1468
    %2411 = vmatpush.bf16.msra.mxu0 %v1466
    %2412 = vmatpush.bf16.msra.mxu0 %v1464
    %2413 = vmatpush.bf16.msra.mxu0 %v1462
    %2414 = vmatmul.bf16.gmra.mxu0 %v2404
    %v2415 = vpop.f32.mrf.mxu0
    %v2416 = vadd.f32 %v1434, %v2415
    %v2417 = vpop.f32.mrf.mxu0
    %2418 = vdwg.mxu0
    %2419 = vmatpush.bf16.msra.mxu0 0
    %2420 = vmatpush.bf16.msra.mxu0 0
    %2421 = vmatpush.bf16.msra.mxu0 0
    %2422 = vmatpush.bf16.msra.mxu0 0
    %2423 = vmatpush.bf16.msra.mxu0 %v1469
    %2424 = vmatpush.bf16.msra.mxu0 %v1467
    %2425 = vmatpush.bf16.msra.mxu0 %v1465
    %2426 = vmatpush.bf16.msra.mxu0 %v1463
    %2427 = vmatmul.bf16.gmra.mxu0 %v2404
    %v2428 = vpop.f32.mrf.mxu0
    %v2429 = vadd.f32 %v1435, %v2428
    %v2430 = vpop.f32.mrf.mxu0
    %2431 = vdwg.mxu0
    %v2432 = vpack.c.bf16 %v2292, %v2292
    %2434 = vrot.lane.b32.xlu0 %v2432, 64
    %v2435 = vpop.permute.xlu0 %2434
    %v2437 = vsel %vm236, %v2435, 0
    %2439 = vmatpush.bf16.msra.mxu0 0
    %2440 = vmatpush.bf16.msra.mxu0 0
    %2441 = vmatpush.bf16.msra.mxu0 0
    %2442 = vmatpush.bf16.msra.mxu0 0
    %2443 = vmatpush.bf16.msra.mxu0 %v1537
    %2444 = vmatpush.bf16.msra.mxu0 %v1535
    %2445 = vmatpush.bf16.msra.mxu0 %v1533
    %2446 = vmatpush.bf16.msra.mxu0 %v1531
    %2447 = vmatmul.bf16.gmra.mxu0 %v2437
    %v2448 = vpop.f32.mrf.mxu0
    %v2449 = vadd.f32 0.0, %v2448
    %v2450 = vpop.f32.mrf.mxu0
    %2451 = vdwg.mxu0
    %2452 = vmatpush.bf16.msra.mxu0 0
    %2453 = vmatpush.bf16.msra.mxu0 0
    %2454 = vmatpush.bf16.msra.mxu0 0
    %2455 = vmatpush.bf16.msra.mxu0 0
    %2456 = vmatpush.bf16.msra.mxu0 %v1538
    %2457 = vmatpush.bf16.msra.mxu0 %v1536
    %2458 = vmatpush.bf16.msra.mxu0 %v1534
    %2459 = vmatpush.bf16.msra.mxu0 %v1532
    %2460 = vmatmul.bf16.gmra.mxu0 %v2437
    %v2461 = vpop.f32.mrf.mxu0
    %v2462 = vadd.f32 0.0, %v2461
    %v2463 = vpop.f32.mrf.mxu0
    %2464 = vdwg.mxu0
    %v2465 = vadd.f32 %v2416, %v2449
    %v2466 = vadd.f32 %v2429, %v2462
    %v2467 = vxor.u32 %v2465, 2147483648
    %v2468 = vxor.u32 %v2466, 2147483648
    %v2469 = vmul.f32 %v2467, 1.442695
    %v2470 = vpow.pop %v2469
    %v2471 = vmul.f32 %v2468, 1.442695
    %v2472 = vpow.pop %v2471
    %v2473 = vadd.f32 %v2470, 1.0
    %v2474 = vadd.f32 %v2472, 1.0
    %v2475 = vrcp.pop %v2473
    %v2476 = vmul.f32 %v2473, %v2475
    %v2477 = vsub.f32 1.0, %v2476
    %v2478 = vmul.f32 %v2475, %v2477
    %v2479 = vadd.f32 %v2475, %v2478
    %vm2480 = vweird.f32 %v2473
    %vm2481 = vweird.f32 %v2475
    %vm2482 = vmor %vm2480, %vm2481
    %v2483 = vsel %vm2482, %v2475, %v2479
    %v2484 = vand.u32 2147483647, %v2473
    %vm2485 = vcmp.eq.f32.partialorder %v2484, 8.507059e+37
    %v2486 = vand.u32 %v2473, 2147483648
    %v2487 = vor.u32 1.1754944e-38, %v2486
    %v2488 = vsel %vm2485, %v2487, %v2483
    %v2489 = vmul.f32 1.0, %v2488
    %v2490 = vrcp.pop %v2474
    %v2491 = vmul.f32 %v2474, %v2490
    %v2492 = vsub.f32 1.0, %v2491
    %v2493 = vmul.f32 %v2490, %v2492
    %v2494 = vadd.f32 %v2490, %v2493
    %vm2495 = vweird.f32 %v2474
    %vm2496 = vweird.f32 %v2490
    %vm2497 = vmor %vm2495, %vm2496
    %v2498 = vsel %vm2497, %v2490, %v2494
    %v2499 = vand.u32 2147483647, %v2474
    %vm2500 = vcmp.eq.f32.partialorder %v2499, 8.507059e+37
    %v2501 = vand.u32 %v2474, 2147483648
    %v2502 = vor.u32 1.1754944e-38, %v2501
    %v2503 = vsel %vm2500, %v2502, %v2498
    %v2504 = vmul.f32 1.0, %v2503
    %v2505 = vmul.f32 %v2504, 2.0
    %v2506 = vsub.f32 %v2505, 1.0
    %v2507 = vmul.f32 %v2489, %v2290
    %v2508 = vmul.f32 %v2489, %v2506
    %2510 = vrot.lane.b32.xlu0 %v2508, 64
    %v2511 = vpop.permute.xlu0 %2510
    %v2513 = vadd.f32 %v2507, %v2511
    %v2514 = vtanh.pop %v2513
    %v2515 = vmul.f32 %v2504, %v2514
    %vm2516 = vcmp.eq.s32.totalorder %v1287, 4
    %v2517 = vsel %vm2516, 1, 0
    %2518 = vset.pattern.permute.xlu0 0
    %2519 = vperm.xlu0 %2518, %v2517
    %v2520 = vpop.permute.xlu0 %2519
    %vm2521 = vcmp.eq.s32.totalorder %v2520, 1
    %v2522 = vsel %vm2521, %v2515, %v2299
    %v2523 = vpack.c.bf16 %v2376, %v2376
    %v2525 = vsel %vm236, %v2523, 0
    %2527 = vmatpush.bf16.msra.mxu0 0
    %2528 = vmatpush.bf16.msra.mxu0 0
    %2529 = vmatpush.bf16.msra.mxu0 0
    %2530 = vmatpush.bf16.msra.mxu0 0
    %2531 = vmatpush.bf16.msra.mxu0 %v1318
    %2532 = vmatpush.bf16.msra.mxu0 %v1316
    %2533 = vmatpush.bf16.msra.mxu0 %v1314
    %2534 = vmatpush.bf16.msra.mxu0 %v1312
    %2535 = vmatmul.bf16.gmra.mxu0 %v2525
    %v2536 = vpop.f32.mrf.mxu0
    %v2537 = vadd.f32 0.0, %v2536
    %v2538 = vpop.f32.mrf.mxu0
    %2539 = vdwg.mxu0
    %2540 = vmatpush.bf16.msra.mxu0 0
    %2541 = vmatpush.bf16.msra.mxu0 0
    %2542 = vmatpush.bf16.msra.mxu0 0
    %2543 = vmatpush.bf16.msra.mxu0 0
    %2544 = vmatpush.bf16.msra.mxu0 %v1319
    %2545 = vmatpush.bf16.msra.mxu0 %v1317
    %2546 = vmatpush.bf16.msra.mxu0 %v1315
    %2547 = vmatpush.bf16.msra.mxu0 %v1313
    %2548 = vmatmul.bf16.gmra.mxu0 %v2525
    %v2549 = vpop.f32.mrf.mxu0
    %v2550 = vadd.f32 0.0, %v2549
    %v2551 = vpop.f32.mrf.mxu0
    %2552 = vdwg.mxu0
    %v2555 = vrot.slane %v2550, 6
    %v2556 = vsel %vm162, %v2537, %v2555
    %v2558 = vadd.f32 %v1247, %v2556
    %v2559 = vxor.u32 %v2558, 2147483648
    %v2560 = vmul.f32 %v2559, 1.442695
    %v2561 = vpow.pop %v2560
    %v2562 = vadd.f32 %v2561, 1.0
    %v2563 = vrcp.pop %v2562
    %v2564 = vmul.f32 %v2562, %v2563
    %v2565 = vsub.f32 1.0, %v2564
    %v2566 = vmul.f32 %v2563, %v2565
    %v2567 = vadd.f32 %v2563, %v2566
    %vm2568 = vweird.f32 %v2562
    %vm2569 = vweird.f32 %v2563
    %vm2570 = vmor %vm2568, %vm2569
    %v2571 = vsel %vm2570, %v2563, %v2567
    %v2572 = vand.u32 2147483647, %v2562
    %vm2573 = vcmp.eq.f32.partialorder %v2572, 8.507059e+37
    %v2574 = vand.u32 %v2562, 2147483648
    %v2575 = vor.u32 1.1754944e-38, %v2574
    %v2576 = vsel %vm2573, %v2575, %v2571
    %v2577 = vmul.f32 1.0, %v2576
    %v2579 = vrot.slane %v2577, 2
    %v2581 = vmul.f32 %v2579, 2.0
    %v2582 = vsub.f32 %v2581, 1.0
    %v2583 = vmul.f32 %v2577, %v2366
    %v2584 = vmul.f32 %v2577, %v2582
    %2586 = vrot.lane.b32.xlu0 %v2584, 64
    %v2587 = vpop.permute.xlu0 %2586
    %v2589 = vadd.f32 %v2583, %v2587
    %v2590 = vtanh.pop %v2589
    %2591 = vrot.lane.b32.xlu0 %v2577, 64
    %v2592 = vpop.permute.xlu0 %2591
    %v2593 = vrot.slane %v2592, 2
    %2596 = vrot.lane.b32.xlu0 %v2590, 64
    %v2597 = vpop.permute.xlu0 %2596
    %v2599 = vmul.f32 %v2593, %v2597
    %v2600 = vadd.f32 %v2599, %v1116
    %v2601 = vsel %vm313, %v2600, 0.0
    %2602 = vadd.xlane.f32.xlu0 %v2601
    %v2603 = vpop.xlane.xlu0 %2602
    %v2604 = vmul.f32 %v2603, %v944
    %v2605 = vsub.f32 %v2600, %v2604
    %v2606 = vmul.f32 %v2605, %v2605
    %v2607 = vsel %vm313, %v2606, 0.0
    %2608 = vadd.xlane.f32.xlu0 %v2607
    %v2609 = vpop.xlane.xlu0 %2608
    %v2610 = vmul.f32 %v2609, %v944
    %v2611 = vadd.f32 %v2610, 1e-05
    %v2612 = vrsqrt.pop %v2611
    %v2613 = vmul.f32 %v2612, %v2611
    %v2614 = vmul.f32 %v2613, %v2612
    %v2615 = vmul.f32 0.5, %v2614
    %v2616 = vsub.f32 1.5, %v2615
    %v2617 = vmul.f32 %v2612, %v2616
    %vm2618 = vweird.f32 %v2611
    %vm2619 = vweird.f32 %v2612
    %vm2620 = vmor %vm2618, %vm2619
    %v2621 = vsel %vm2620, %v2612, %v2617
    %v2622 = vmul.f32 %v2605, %v2621
    %v2623 = vmul.f32 %v2622, %v1425
    %v2624 = vadd.f32 %v2623, %v1429
    %v2625 = vpack.c.bf16 %v2624, %v2624
    %v2627 = vsel %vm236, %v2625, 0
    %2629 = vmatpush.bf16.msra.mxu0 0
    %2630 = vmatpush.bf16.msra.mxu0 0
    %2631 = vmatpush.bf16.msra.mxu0 0
    %2632 = vmatpush.bf16.msra.mxu0 0
    %2633 = vmatpush.bf16.msra.mxu0 %v1468
    %2634 = vmatpush.bf16.msra.mxu0 %v1466
    %2635 = vmatpush.bf16.msra.mxu0 %v1464
    %2636 = vmatpush.bf16.msra.mxu0 %v1462
    %2637 = vmatmul.bf16.gmra.mxu0 %v2627
    %v2638 = vpop.f32.mrf.mxu0
    %v2639 = vadd.f32 %v1434, %v2638
    %v2640 = vpop.f32.mrf.mxu0
    %2641 = vdwg.mxu0
    %2642 = vmatpush.bf16.msra.mxu0 0
    %2643 = vmatpush.bf16.msra.mxu0 0
    %2644 = vmatpush.bf16.msra.mxu0 0
    %2645 = vmatpush.bf16.msra.mxu0 0
    %2646 = vmatpush.bf16.msra.mxu0 %v1469
    %2647 = vmatpush.bf16.msra.mxu0 %v1467
    %2648 = vmatpush.bf16.msra.mxu0 %v1465
    %2649 = vmatpush.bf16.msra.mxu0 %v1463
    %2650 = vmatmul.bf16.gmra.mxu0 %v2627
    %v2651 = vpop.f32.mrf.mxu0
    %v2652 = vadd.f32 %v1435, %v2651
    %v2653 = vpop.f32.mrf.mxu0
    %2654 = vdwg.mxu0
    %v2655 = vpack.c.bf16 %v2515, %v2515
    %2657 = vrot.lane.b32.xlu0 %v2655, 64
    %v2658 = vpop.permute.xlu0 %2657
    %v2660 = vsel %vm236, %v2658, 0
    %2662 = vmatpush.bf16.msra.mxu0 0
    %2663 = vmatpush.bf16.msra.mxu0 0
    %2664 = vmatpush.bf16.msra.mxu0 0
    %2665 = vmatpush.bf16.msra.mxu0 0
    %2666 = vmatpush.bf16.msra.mxu0 %v1537
    %2667 = vmatpush.bf16.msra.mxu0 %v1535
    %2668 = vmatpush.bf16.msra.mxu0 %v1533
    %2669 = vmatpush.bf16.msra.mxu0 %v1531
    %2670 = vmatmul.bf16.gmra.mxu0 %v2660
    %v2671 = vpop.f32.mrf.mxu0
    %v2672 = vadd.f32 0.0, %v2671
    %v2673 = vpop.f32.mrf.mxu0
    %2674 = vdwg.mxu0
    %2675 = vmatpush.bf16.msra.mxu0 0
    %2676 = vmatpush.bf16.msra.mxu0 0
    %2677 = vmatpush.bf16.msra.mxu0 0
    %2678 = vmatpush.bf16.msra.mxu0 0
    %2679 = vmatpush.bf16.msra.mxu0 %v1538
    %2680 = vmatpush.bf16.msra.mxu0 %v1536
    %2681 = vmatpush.bf16.msra.mxu0 %v1534
    %2682 = vmatpush.bf16.msra.mxu0 %v1532
    %2683 = vmatmul.bf16.gmra.mxu0 %v2660
    %v2684 = vpop.f32.mrf.mxu0
    %v2685 = vadd.f32 0.0, %v2684
    %v2686 = vpop.f32.mrf.mxu0
    %2687 = vdwg.mxu0
    %v2688 = vadd.f32 %v2639, %v2672
    %v2689 = vadd.f32 %v2652, %v2685
    %v2690 = vxor.u32 %v2688, 2147483648
    %v2691 = vxor.u32 %v2689, 2147483648
    %v2692 = vmul.f32 %v2690, 1.442695
    %v2693 = vpow.pop %v2692
    %v2694 = vmul.f32 %v2691, 1.442695
    %v2695 = vpow.pop %v2694
    %v2696 = vadd.f32 %v2693, 1.0
    %v2697 = vadd.f32 %v2695, 1.0
    %v2698 = vrcp.pop %v2696
    %v2699 = vmul.f32 %v2696, %v2698
    %v2700 = vsub.f32 1.0, %v2699
    %v2701 = vmul.f32 %v2698, %v2700
    %v2702 = vadd.f32 %v2698, %v2701
    %vm2703 = vweird.f32 %v2696
    %vm2704 = vweird.f32 %v2698
    %vm2705 = vmor %vm2703, %vm2704
    %v2706 = vsel %vm2705, %v2698, %v2702
    %v2707 = vand.u32 2147483647, %v2696
    %vm2708 = vcmp.eq.f32.partialorder %v2707, 8.507059e+37
    %v2709 = vand.u32 %v2696, 2147483648
    %v2710 = vor.u32 1.1754944e-38, %v2709
    %v2711 = vsel %vm2708, %v2710, %v2706
    %v2712 = vmul.f32 1.0, %v2711
    %v2713 = vrcp.pop %v2697
    %v2714 = vmul.f32 %v2697, %v2713
    %v2715 = vsub.f32 1.0, %v2714
    %v2716 = vmul.f32 %v2713, %v2715
    %v2717 = vadd.f32 %v2713, %v2716
    %vm2718 = vweird.f32 %v2697
    %vm2719 = vweird.f32 %v2713
    %vm2720 = vmor %vm2718, %vm2719
    %v2721 = vsel %vm2720, %v2713, %v2717
    %v2722 = vand.u32 2147483647, %v2697
    %vm2723 = vcmp.eq.f32.partialorder %v2722, 8.507059e+37
    %v2724 = vand.u32 %v2697, 2147483648
    %v2725 = vor.u32 1.1754944e-38, %v2724
    %v2726 = vsel %vm2723, %v2725, %v2721
    %v2727 = vmul.f32 1.0, %v2726
    %v2728 = vmul.f32 %v2727, 2.0
    %v2729 = vsub.f32 %v2728, 1.0
    %v2730 = vmul.f32 %v2712, %v2513
    %v2731 = vmul.f32 %v2712, %v2729
    %2733 = vrot.lane.b32.xlu0 %v2731, 64
    %v2734 = vpop.permute.xlu0 %2733
    %v2736 = vadd.f32 %v2730, %v2734
    %v2737 = vtanh.pop %v2736
    %v2738 = vmul.f32 %v2727, %v2737
    %vm2739 = vcmp.eq.s32.totalorder %v1287, 5
    %v2740 = vsel %vm2739, 1, 0
    %2741 = vset.pattern.permute.xlu0 0
    %2742 = vperm.xlu0 %2741, %v2740
    %v2743 = vpop.permute.xlu0 %2742
    %vm2744 = vcmp.eq.s32.totalorder %v2743, 1
    %v2745 = vsel %vm2744, %v2738, %v2522
    %v2746 = vpack.c.bf16 %v2599, %v2599
    %v2748 = vsel %vm236, %v2746, 0
    %2750 = vmatpush.bf16.msra.mxu0 0
    %2751 = vmatpush.bf16.msra.mxu0 0
    %2752 = vmatpush.bf16.msra.mxu0 0
    %2753 = vmatpush.bf16.msra.mxu0 0
    %2754 = vmatpush.bf16.msra.mxu0 %v1318
    %2755 = vmatpush.bf16.msra.mxu0 %v1316
    %2756 = vmatpush.bf16.msra.mxu0 %v1314
    %2757 = vmatpush.bf16.msra.mxu0 %v1312
    %2758 = vmatmul.bf16.gmra.mxu0 %v2748
    %v2759 = vpop.f32.mrf.mxu0
    %v2760 = vadd.f32 0.0, %v2759
    %v2761 = vpop.f32.mrf.mxu0
    %2762 = vdwg.mxu0
    %2763 = vmatpush.bf16.msra.mxu0 0
    %2764 = vmatpush.bf16.msra.mxu0 0
    %2765 = vmatpush.bf16.msra.mxu0 0
    %2766 = vmatpush.bf16.msra.mxu0 0
    %2767 = vmatpush.bf16.msra.mxu0 %v1319
    %2768 = vmatpush.bf16.msra.mxu0 %v1317
    %2769 = vmatpush.bf16.msra.mxu0 %v1315
    %2770 = vmatpush.bf16.msra.mxu0 %v1313
    %2771 = vmatmul.bf16.gmra.mxu0 %v2748
    %v2772 = vpop.f32.mrf.mxu0
    %v2773 = vadd.f32 0.0, %v2772
    %v2774 = vpop.f32.mrf.mxu0
    %2775 = vdwg.mxu0
    %v2778 = vrot.slane %v2773, 6
    %v2779 = vsel %vm162, %v2760, %v2778
    %v2781 = vadd.f32 %v1249, %v2779
    %v2782 = vxor.u32 %v2781, 2147483648
    %v2783 = vmul.f32 %v2782, 1.442695
    %v2784 = vpow.pop %v2783
    %v2785 = vadd.f32 %v2784, 1.0
    %v2786 = vrcp.pop %v2785
    %v2787 = vmul.f32 %v2785, %v2786
    %v2788 = vsub.f32 1.0, %v2787
    %v2789 = vmul.f32 %v2786, %v2788
    %v2790 = vadd.f32 %v2786, %v2789
    %vm2791 = vweird.f32 %v2785
    %vm2792 = vweird.f32 %v2786
    %vm2793 = vmor %vm2791, %vm2792
    %v2794 = vsel %vm2793, %v2786, %v2790
    %v2795 = vand.u32 2147483647, %v2785
    %vm2796 = vcmp.eq.f32.partialorder %v2795, 8.507059e+37
    %v2797 = vand.u32 %v2785, 2147483648
    %v2798 = vor.u32 1.1754944e-38, %v2797
    %v2799 = vsel %vm2796, %v2798, %v2794
    %v2800 = vmul.f32 1.0, %v2799
    %v2802 = vrot.slane %v2800, 2
    %v2804 = vmul.f32 %v2802, 2.0
    %v2805 = vsub.f32 %v2804, 1.0
    %v2806 = vmul.f32 %v2800, %v2589
    %v2807 = vmul.f32 %v2800, %v2805
    %2809 = vrot.lane.b32.xlu0 %v2807, 64
    %v2810 = vpop.permute.xlu0 %2809
    %v2812 = vadd.f32 %v2806, %v2810
    %v2813 = vtanh.pop %v2812
    %2814 = vrot.lane.b32.xlu0 %v2800, 64
    %v2815 = vpop.permute.xlu0 %2814
    %v2816 = vrot.slane %v2815, 2
    %2819 = vrot.lane.b32.xlu0 %v2813, 64
    %v2820 = vpop.permute.xlu0 %2819
    %v2822 = vmul.f32 %v2816, %v2820
    %v2823 = vadd.f32 %v2822, %v1117
    %v2824 = vsel %vm313, %v2823, 0.0
    %2825 = vadd.xlane.f32.xlu0 %v2824
    %v2826 = vpop.xlane.xlu0 %2825
    %v2827 = vmul.f32 %v2826, %v944
    %v2828 = vsub.f32 %v2823, %v2827
    %v2829 = vmul.f32 %v2828, %v2828
    %v2830 = vsel %vm313, %v2829, 0.0
    %2831 = vadd.xlane.f32.xlu0 %v2830
    %v2832 = vpop.xlane.xlu0 %2831
    %v2833 = vmul.f32 %v2832, %v944
    %v2834 = vadd.f32 %v2833, 1e-05
    %v2835 = vrsqrt.pop %v2834
    %v2836 = vmul.f32 %v2835, %v2834
    %v2837 = vmul.f32 %v2836, %v2835
    %v2838 = vmul.f32 0.5, %v2837
    %v2839 = vsub.f32 1.5, %v2838
    %v2840 = vmul.f32 %v2835, %v2839
    %vm2841 = vweird.f32 %v2834
    %vm2842 = vweird.f32 %v2835
    %vm2843 = vmor %vm2841, %vm2842
    %v2844 = vsel %vm2843, %v2835, %v2840
    %v2845 = vmul.f32 %v2828, %v2844
    %v2846 = vmul.f32 %v2845, %v1425
    %v2847 = vadd.f32 %v2846, %v1429
    %v2848 = vpack.c.bf16 %v2847, %v2847
    %v2850 = vsel %vm236, %v2848, 0
    %2852 = vmatpush.bf16.msra.mxu0 0
    %2853 = vmatpush.bf16.msra.mxu0 0
    %2854 = vmatpush.bf16.msra.mxu0 0
    %2855 = vmatpush.bf16.msra.mxu0 0
    %2856 = vmatpush.bf16.msra.mxu0 %v1468
    %2857 = vmatpush.bf16.msra.mxu0 %v1466
    %2858 = vmatpush.bf16.msra.mxu0 %v1464
    %2859 = vmatpush.bf16.msra.mxu0 %v1462
    %2860 = vmatmul.bf16.gmra.mxu0 %v2850
    %v2861 = vpop.f32.mrf.mxu0
    %v2862 = vadd.f32 %v1434, %v2861
    %v2863 = vpop.f32.mrf.mxu0
    %2864 = vdwg.mxu0
    %2865 = vmatpush.bf16.msra.mxu0 0
    %2866 = vmatpush.bf16.msra.mxu0 0
    %2867 = vmatpush.bf16.msra.mxu0 0
    %2868 = vmatpush.bf16.msra.mxu0 0
    %2869 = vmatpush.bf16.msra.mxu0 %v1469
    %2870 = vmatpush.bf16.msra.mxu0 %v1467
    %2871 = vmatpush.bf16.msra.mxu0 %v1465
    %2872 = vmatpush.bf16.msra.mxu0 %v1463
    %2873 = vmatmul.bf16.gmra.mxu0 %v2850
    %v2874 = vpop.f32.mrf.mxu0
    %v2875 = vadd.f32 %v1435, %v2874
    %v2876 = vpop.f32.mrf.mxu0
    %2877 = vdwg.mxu0
    %v2878 = vpack.c.bf16 %v2738, %v2738
    %2880 = vrot.lane.b32.xlu0 %v2878, 64
    %v2881 = vpop.permute.xlu0 %2880
    %v2883 = vsel %vm236, %v2881, 0
    %2885 = vmatpush.bf16.msra.mxu0 0
    %2886 = vmatpush.bf16.msra.mxu0 0
    %2887 = vmatpush.bf16.msra.mxu0 0
    %2888 = vmatpush.bf16.msra.mxu0 0
    %2889 = vmatpush.bf16.msra.mxu0 %v1537
    %2890 = vmatpush.bf16.msra.mxu0 %v1535
    %2891 = vmatpush.bf16.msra.mxu0 %v1533
    %2892 = vmatpush.bf16.msra.mxu0 %v1531
    %2893 = vmatmul.bf16.gmra.mxu0 %v2883
    %v2894 = vpop.f32.mrf.mxu0
    %v2895 = vadd.f32 0.0, %v2894
    %v2896 = vpop.f32.mrf.mxu0
    %2897 = vdwg.mxu0
    %2898 = vmatpush.bf16.msra.mxu0 0
    %2899 = vmatpush.bf16.msra.mxu0 0
    %2900 = vmatpush.bf16.msra.mxu0 0
    %2901 = vmatpush.bf16.msra.mxu0 0
    %2902 = vmatpush.bf16.msra.mxu0 %v1538
    %2903 = vmatpush.bf16.msra.mxu0 %v1536
    %2904 = vmatpush.bf16.msra.mxu0 %v1534
    %2905 = vmatpush.bf16.msra.mxu0 %v1532
    %2906 = vmatmul.bf16.gmra.mxu0 %v2883
    %v2907 = vpop.f32.mrf.mxu0
    %v2908 = vadd.f32 0.0, %v2907
    %v2909 = vpop.f32.mrf.mxu0
    %2910 = vdwg.mxu0
    %v2911 = vadd.f32 %v2862, %v2895
    %v2912 = vadd.f32 %v2875, %v2908
    %v2913 = vxor.u32 %v2911, 2147483648
    %v2914 = vxor.u32 %v2912, 2147483648
    %v2915 = vmul.f32 %v2913, 1.442695
    %v2916 = vpow.pop %v2915
    %v2917 = vmul.f32 %v2914, 1.442695
    %v2918 = vpow.pop %v2917
    %v2919 = vadd.f32 %v2916, 1.0
    %v2920 = vadd.f32 %v2918, 1.0
    %v2921 = vrcp.pop %v2919
    %v2922 = vmul.f32 %v2919, %v2921
    %v2923 = vsub.f32 1.0, %v2922
    %v2924 = vmul.f32 %v2921, %v2923
    %v2925 = vadd.f32 %v2921, %v2924
    %vm2926 = vweird.f32 %v2919
    %vm2927 = vweird.f32 %v2921
    %vm2928 = vmor %vm2926, %vm2927
    %v2929 = vsel %vm2928, %v2921, %v2925
    %v2930 = vand.u32 2147483647, %v2919
    %vm2931 = vcmp.eq.f32.partialorder %v2930, 8.507059e+37
    %v2932 = vand.u32 %v2919, 2147483648
    %v2933 = vor.u32 1.1754944e-38, %v2932
    %v2934 = vsel %vm2931, %v2933, %v2929
    %v2935 = vmul.f32 1.0, %v2934
    %v2936 = vrcp.pop %v2920
    %v2937 = vmul.f32 %v2920, %v2936
    %v2938 = vsub.f32 1.0, %v2937
    %v2939 = vmul.f32 %v2936, %v2938
    %v2940 = vadd.f32 %v2936, %v2939
    %vm2941 = vweird.f32 %v2920
    %vm2942 = vweird.f32 %v2936
    %vm2943 = vmor %vm2941, %vm2942
    %v2944 = vsel %vm2943, %v2936, %v2940
    %v2945 = vand.u32 2147483647, %v2920
    %vm2946 = vcmp.eq.f32.partialorder %v2945, 8.507059e+37
    %v2947 = vand.u32 %v2920, 2147483648
    %v2948 = vor.u32 1.1754944e-38, %v2947
    %v2949 = vsel %vm2946, %v2948, %v2944
    %v2950 = vmul.f32 1.0, %v2949
    %v2951 = vmul.f32 %v2950, 2.0
    %v2952 = vsub.f32 %v2951, 1.0
    %v2953 = vmul.f32 %v2935, %v2736
    %v2954 = vmul.f32 %v2935, %v2952
    %2956 = vrot.lane.b32.xlu0 %v2954, 64
    %v2957 = vpop.permute.xlu0 %2956
    %v2959 = vadd.f32 %v2953, %v2957
    %v2960 = vtanh.pop %v2959
    %v2961 = vmul.f32 %v2950, %v2960
    %vm2962 = vcmp.eq.s32.totalorder %v1287, 6
    %v2963 = vsel %vm2962, 1, 0
    %2964 = vset.pattern.permute.xlu0 0
    %2965 = vperm.xlu0 %2964, %v2963
    %v2966 = vpop.permute.xlu0 %2965
    %vm2967 = vcmp.eq.s32.totalorder %v2966, 1
    %v2968 = vsel %vm2967, %v2961, %v2745
    %v2969 = vpack.c.bf16 %v2822, %v2822
    %v2971 = vsel %vm236, %v2969, 0
    %2973 = vmatpush.bf16.msra.mxu0 0
    %2974 = vmatpush.bf16.msra.mxu0 0
    %2975 = vmatpush.bf16.msra.mxu0 0
    %2976 = vmatpush.bf16.msra.mxu0 0
    %2977 = vmatpush.bf16.msra.mxu0 %v1318
    %2978 = vmatpush.bf16.msra.mxu0 %v1316
    %2979 = vmatpush.bf16.msra.mxu0 %v1314
    %2980 = vmatpush.bf16.msra.mxu0 %v1312
    %2981 = vmatmul.bf16.gmra.mxu0 %v2971
    %v2982 = vpop.f32.mrf.mxu0
    %v2983 = vadd.f32 0.0, %v2982
    %v2984 = vpop.f32.mrf.mxu0
    %2985 = vdwg.mxu0
    %2986 = vmatpush.bf16.msra.mxu0 0
    %2987 = vmatpush.bf16.msra.mxu0 0
    %2988 = vmatpush.bf16.msra.mxu0 0
    %2989 = vmatpush.bf16.msra.mxu0 0
    %2990 = vmatpush.bf16.msra.mxu0 %v1319
    %2991 = vmatpush.bf16.msra.mxu0 %v1317
    %2992 = vmatpush.bf16.msra.mxu0 %v1315
    %2993 = vmatpush.bf16.msra.mxu0 %v1313
    %2994 = vmatmul.bf16.gmra.mxu0 %v2971
    %v2995 = vpop.f32.mrf.mxu0
    %v2996 = vadd.f32 0.0, %v2995
    %v2997 = vpop.f32.mrf.mxu0
    %2998 = vdwg.mxu0
    %v3001 = vrot.slane %v2996, 6
    %v3002 = vsel %vm162, %v2983, %v3001
    %v3004 = vadd.f32 %v1251, %v3002
    %v3005 = vxor.u32 %v3004, 2147483648
    %v3006 = vmul.f32 %v3005, 1.442695
    %v3007 = vpow.pop %v3006
    %v3008 = vadd.f32 %v3007, 1.0
    %v3009 = vrcp.pop %v3008
    %v3010 = vmul.f32 %v3008, %v3009
    %v3011 = vsub.f32 1.0, %v3010
    %v3012 = vmul.f32 %v3009, %v3011
    %v3013 = vadd.f32 %v3009, %v3012
    %vm3014 = vweird.f32 %v3008
    %vm3015 = vweird.f32 %v3009
    %vm3016 = vmor %vm3014, %vm3015
    %v3017 = vsel %vm3016, %v3009, %v3013
    %v3018 = vand.u32 2147483647, %v3008
    %vm3019 = vcmp.eq.f32.partialorder %v3018, 8.507059e+37
    %v3020 = vand.u32 %v3008, 2147483648
    %v3021 = vor.u32 1.1754944e-38, %v3020
    %v3022 = vsel %vm3019, %v3021, %v3017
    %v3023 = vmul.f32 1.0, %v3022
    %v3025 = vrot.slane %v3023, 2
    %v3027 = vmul.f32 %v3025, 2.0
    %v3028 = vsub.f32 %v3027, 1.0
    %v3029 = vmul.f32 %v3023, %v2812
    %v3030 = vmul.f32 %v3023, %v3028
    %3032 = vrot.lane.b32.xlu0 %v3030, 64
    %v3033 = vpop.permute.xlu0 %3032
    %v3035 = vadd.f32 %v3029, %v3033
    %v3036 = vtanh.pop %v3035
    %3037 = vrot.lane.b32.xlu0 %v3023, 64
    %v3038 = vpop.permute.xlu0 %3037
    %v3039 = vrot.slane %v3038, 2
    %3042 = vrot.lane.b32.xlu0 %v3036, 64
    %v3043 = vpop.permute.xlu0 %3042
    %v3045 = vmul.f32 %v3039, %v3043
    %v3046 = vadd.f32 %v3045, %v1118
    %v3047 = vsel %vm313, %v3046, 0.0
    %3048 = vadd.xlane.f32.xlu0 %v3047
    %v3049 = vpop.xlane.xlu0 %3048
    %v3050 = vmul.f32 %v3049, %v944
    %v3051 = vsub.f32 %v3046, %v3050
    %v3052 = vmul.f32 %v3051, %v3051
    %v3053 = vsel %vm313, %v3052, 0.0
    %3054 = vadd.xlane.f32.xlu0 %v3053
    %v3055 = vpop.xlane.xlu0 %3054
    %v3056 = vmul.f32 %v3055, %v944
    %v3057 = vadd.f32 %v3056, 1e-05
    %v3058 = vrsqrt.pop %v3057
    %v3059 = vmul.f32 %v3058, %v3057
    %v3060 = vmul.f32 %v3059, %v3058
    %v3061 = vmul.f32 0.5, %v3060
    %v3062 = vsub.f32 1.5, %v3061
    %v3063 = vmul.f32 %v3058, %v3062
    %vm3064 = vweird.f32 %v3057
    %vm3065 = vweird.f32 %v3058
    %vm3066 = vmor %vm3064, %vm3065
    %v3067 = vsel %vm3066, %v3058, %v3063
    %v3068 = vmul.f32 %v3051, %v3067
    %v3069 = vmul.f32 %v3068, %v1425
    %v3070 = vadd.f32 %v3069, %v1429
    %v3071 = vpack.c.bf16 %v3070, %v3070
    %v3073 = vsel %vm236, %v3071, 0
    %3075 = vmatpush.bf16.msra.mxu0 0
    %3076 = vmatpush.bf16.msra.mxu0 0
    %3077 = vmatpush.bf16.msra.mxu0 0
    %3078 = vmatpush.bf16.msra.mxu0 0
    %3079 = vmatpush.bf16.msra.mxu0 %v1468
    %3080 = vmatpush.bf16.msra.mxu0 %v1466
    %3081 = vmatpush.bf16.msra.mxu0 %v1464
    %3082 = vmatpush.bf16.msra.mxu0 %v1462
    %3083 = vmatmul.bf16.gmra.mxu0 %v3073
    %v3084 = vpop.f32.mrf.mxu0
    %v3085 = vadd.f32 %v1434, %v3084
    %v3086 = vpop.f32.mrf.mxu0
    %3087 = vdwg.mxu0
    %3088 = vmatpush.bf16.msra.mxu0 0
    %3089 = vmatpush.bf16.msra.mxu0 0
    %3090 = vmatpush.bf16.msra.mxu0 0
    %3091 = vmatpush.bf16.msra.mxu0 0
    %3092 = vmatpush.bf16.msra.mxu0 %v1469
    %3093 = vmatpush.bf16.msra.mxu0 %v1467
    %3094 = vmatpush.bf16.msra.mxu0 %v1465
    %3095 = vmatpush.bf16.msra.mxu0 %v1463
    %3096 = vmatmul.bf16.gmra.mxu0 %v3073
    %v3097 = vpop.f32.mrf.mxu0
    %v3098 = vadd.f32 %v1435, %v3097
    %v3099 = vpop.f32.mrf.mxu0
    %3100 = vdwg.mxu0
    %v3101 = vpack.c.bf16 %v2961, %v2961
    %3103 = vrot.lane.b32.xlu0 %v3101, 64
    %v3104 = vpop.permute.xlu0 %3103
    %v3106 = vsel %vm236, %v3104, 0
    %3108 = vmatpush.bf16.msra.mxu0 0
    %3109 = vmatpush.bf16.msra.mxu0 0
    %3110 = vmatpush.bf16.msra.mxu0 0
    %3111 = vmatpush.bf16.msra.mxu0 0
    %3112 = vmatpush.bf16.msra.mxu0 %v1537
    %3113 = vmatpush.bf16.msra.mxu0 %v1535
    %3114 = vmatpush.bf16.msra.mxu0 %v1533
    %3115 = vmatpush.bf16.msra.mxu0 %v1531
    %3116 = vmatmul.bf16.gmra.mxu0 %v3106
    %v3117 = vpop.f32.mrf.mxu0
    %v3118 = vadd.f32 0.0, %v3117
    %v3119 = vpop.f32.mrf.mxu0
    %3120 = vdwg.mxu0
    %3121 = vmatpush.bf16.msra.mxu0 0
    %3122 = vmatpush.bf16.msra.mxu0 0
    %3123 = vmatpush.bf16.msra.mxu0 0
    %3124 = vmatpush.bf16.msra.mxu0 0
    %3125 = vmatpush.bf16.msra.mxu0 %v1538
    %3126 = vmatpush.bf16.msra.mxu0 %v1536
    %3127 = vmatpush.bf16.msra.mxu0 %v1534
    %3128 = vmatpush.bf16.msra.mxu0 %v1532
    %3129 = vmatmul.bf16.gmra.mxu0 %v3106
    %v3130 = vpop.f32.mrf.mxu0
    %v3131 = vadd.f32 0.0, %v3130
    %v3132 = vpop.f32.mrf.mxu0
    %3133 = vdwg.mxu0
    %v3134 = vadd.f32 %v3085, %v3118
    %v3135 = vadd.f32 %v3098, %v3131
    %v3136 = vxor.u32 %v3134, 2147483648
    %v3137 = vxor.u32 %v3135, 2147483648
    %v3138 = vmul.f32 %v3136, 1.442695
    %v3139 = vpow.pop %v3138
    %v3140 = vmul.f32 %v3137, 1.442695
    %v3141 = vpow.pop %v3140
    %v3142 = vadd.f32 %v3139, 1.0
    %v3143 = vadd.f32 %v3141, 1.0
    %v3144 = vrcp.pop %v3142
    %v3145 = vmul.f32 %v3142, %v3144
    %v3146 = vsub.f32 1.0, %v3145
    %v3147 = vmul.f32 %v3144, %v3146
    %v3148 = vadd.f32 %v3144, %v3147
    %vm3149 = vweird.f32 %v3142
    %vm3150 = vweird.f32 %v3144
    %vm3151 = vmor %vm3149, %vm3150
    %v3152 = vsel %vm3151, %v3144, %v3148
    %v3153 = vand.u32 2147483647, %v3142
    %vm3154 = vcmp.eq.f32.partialorder %v3153, 8.507059e+37
    %v3155 = vand.u32 %v3142, 2147483648
    %v3156 = vor.u32 1.1754944e-38, %v3155
    %v3157 = vsel %vm3154, %v3156, %v3152
    %v3158 = vmul.f32 1.0, %v3157
    %v3159 = vrcp.pop %v3143
    %v3160 = vmul.f32 %v3143, %v3159
    %v3161 = vsub.f32 1.0, %v3160
    %v3162 = vmul.f32 %v3159, %v3161
    %v3163 = vadd.f32 %v3159, %v3162
    %vm3164 = vweird.f32 %v3143
    %vm3165 = vweird.f32 %v3159
    %vm3166 = vmor %vm3164, %vm3165
    %v3167 = vsel %vm3166, %v3159, %v3163
    %v3168 = vand.u32 2147483647, %v3143
    %vm3169 = vcmp.eq.f32.partialorder %v3168, 8.507059e+37
    %v3170 = vand.u32 %v3143, 2147483648
    %v3171 = vor.u32 1.1754944e-38, %v3170
    %v3172 = vsel %vm3169, %v3171, %v3167
    %v3173 = vmul.f32 1.0, %v3172
    %v3174 = vmul.f32 %v3173, 2.0
    %v3175 = vsub.f32 %v3174, 1.0
    %v3176 = vmul.f32 %v3158, %v2959
    %v3177 = vmul.f32 %v3158, %v3175
    %3179 = vrot.lane.b32.xlu0 %v3177, 64
    %v3180 = vpop.permute.xlu0 %3179
    %v3182 = vadd.f32 %v3176, %v3180
    %v3183 = vtanh.pop %v3182
    %v3184 = vmul.f32 %v3173, %v3183
    %vm3185 = vcmp.eq.s32.totalorder %v1287, 7
    %v3186 = vsel %vm3185, 1, 0
    %3187 = vset.pattern.permute.xlu0 0
    %3188 = vperm.xlu0 %3187, %v3186
    %v3189 = vpop.permute.xlu0 %3188
    %vm3190 = vcmp.eq.s32.totalorder %v3189, 1
    %v3191 = vsel %vm3190, %v3184, %v2968
    %v3192 = vld [vmem:[%s15] sm:$0x1]
    %v3194 = vperm.slane %v3192, 0
    %3195 = vrot.lane.b32.xlu0 %v3194, 64
    %v3196 = vpop.permute.xlu0 %3195
    %v3198 = vmul.f32 %v3191, %v3196
    %v3199 = vld [vmem:[%s16] sm:$0x1]
    %v3201 = vperm.slane %v3199, 0
    %3202 = vrot.lane.b32.xlu0 %v3201, 64
    %v3203 = vpop.permute.xlu0 %3202
    %v3205 = vadd.f32 %v3198, %v3203
    %v3206 = vmax.f32 %v3205, 0.0
    %3208 = vrot.lane.b32.xlu0 %v3206, 64
    %v3209 = vpop.permute.xlu0 %3208
    %3211 = vst.msk [vmem:[#allocation4] sm:$0x3] %vm313, %v3209
    // Predicated region
    $region70: #{lstm_extraction_layer.1} parent=1 // pred_check
      _
    $region71: #{lstm_extraction_layer.1} parent=1 // pred_check_branch
      %3213 = sbr.rel (0) target = $region73
    $region72: #{lstm_extraction_layer.1} parent=1 // pred_region
      %3215 = vsyncadd [#allocation5], 0
      %s3217 = sshll.u32 [#allocation4], 4
      %s3218 = int_to_ptr.vmem [resolvable:$true] %s3217
      %s3219 = sshll.u32 %s17, 4
      %s3220 = int_to_ptr.hbm [resolvable:$true] %s3219
      %3222 = dma.vmem_to_hbm [thread:$0]  %s3218, 32, %s3220, [#allocation5]
    $region73: #{lstm_extraction_layer.1} parent=1 // pred_fallthru
      _
    // Predicated region
    $region74: #{lstm_extraction_layer.1} parent=1 // pred_check
      _
    $region75: #{lstm_extraction_layer.1} parent=1 // pred_check_branch
      %3224 = sbr.rel (0) target = $region77
    $region76: #{lstm_extraction_layer.1} parent=1 // pred_region
      %3226 = dma.done [#allocation5], 32
    $region77: #{lstm_extraction_layer.1} parent=1 // pred_fallthru
      _
    %3227 = vsyncpa [#allocation5], 1

</llo_original>
